<compile_context>
chip_gen: v7x
topology: tpu7x:2x2x1
jax: 0.10.0
libtpu: 0.0.40
codegen_flags: <defaults>
</compile_context>

<pallas_src>
import jax
import jax.numpy as jnp
from jax.experimental import pallas as pl
from jax.experimental.pallas import tpu as pltpu

# Shapes forced by the module (fc1 = Linear(64*49, 50) => input length 100)
L = 100
C_OUT = 64
K = 3
CONV_LEN = L - K + 1            # 98
POOL_LEN = CONV_LEN // 2        # 49
POOL_PAD = 56                   # 49 -> multiple of 8 (sublane aligned)
FC1_IN = C_OUT * POOL_LEN       # 3136
FC1_IN_PAD = C_OUT * POOL_PAD   # 3584
FC1_OUT = 50
FC2_OUT = 100                   # fixed_len
LANE = 128                      # lane-dense FC width
BATCH_BLK = 8                   # batch rows per grid step


def cnn1d_kernel(taps_ref, cw_ref, cb_ref, w1_ref, b1_ref, w2_ref, b2_ref, out_ref):
    # taps_ref: (4, 8, 56, 1)   taps[k, b, p, 0] = x[b, 2p + k] (zero padded)
    # cw_ref:   (3, 1, 1, 64)   conv weight per tap, channels on lanes
    # cb_ref:   (1, 1, 64)
    # w1_ref:   (3584, 128)     b1_ref: (1, 128)
    # w2_ref:   (128, 128)      b2_ref: (1, 128)
    # out_ref:  (8, 128)
    t0 = taps_ref[0]
    t1 = taps_ref[1]
    t2 = taps_ref[2]
    t3 = taps_ref[3]
    w0 = cw_ref[0]
    w1 = cw_ref[1]
    w2 = cw_ref[2]
    cb = cb_ref[...]

    # Conv1d(1,64,3) at even / odd output positions, channels-last.  Pure VPU:
    # taps are pre-shifted, so no in-kernel lane shifts and no pooling reshape.
    conv_e = t0 * w0 + t1 * w1 + t2 * w2 + cb          # (8, 56, 64)
    conv_o = t1 * w0 + t2 * w1 + t3 * w2 + cb          # (8, 56, 64)
    # MaxPool1d(2) of ReLU  ==  relu(max(even, odd))
    pooled = jnp.maximum(jnp.maximum(conv_e, conv_o), 0.0)

    # Position-major flatten; fc1 weight rows were permuted/zero-padded outside to match.
    # TODO(synk): this is the one remaining sublane->lane relayout; a relayout-free form
    # needs multi-dim-contraction dot_general (lowering risk) or pre-tiled (B,3584) taps
    # (extra HBM traffic), so the small in-VMEM reshape is kept.
    flat = pooled.reshape(BATCH_BLK, FC1_IN_PAD)        # (8, 3584)

    # fc1 + ReLU and fc2 on the MXU, lane-dense (N = 128)
    h = jnp.dot(flat, w1_ref[...], preferred_element_type=jnp.float32) + b1_ref[...]
    h = jnp.maximum(h, 0.0)                             # (8, 128)
    out = jnp.dot(h, w2_ref[...], preferred_element_type=jnp.float32) + b2_ref[...]
    out_ref[...] = out.astype(out_ref.dtype)            # (8, 128)


@jax.jit
def cnn1d_forward(x, conv_w, conv_b, fc1_w, fc1_b, fc2_w, fc2_b):
    """x: (B, 100) float32 (PyTorch NCL with C=1 squeezed).  Parameters in PyTorch
    layouts: conv_w (64,1,3), conv_b (64,), fc1_w (50,3136), fc1_b (50,),
    fc2_w (100,50), fc2_b (100,).  Returns (B, 100)."""
    B = x.shape[0]
    BB = ((B + BATCH_BLK - 1) // BATCH_BLK) * BATCH_BLK

    # ---- wrapper-side re-layout (cheap XLA work) ----
    # pre-shifted conv taps: taps[k, b, p] = x[b, 2p + k], zero padded to p < 56
    xp = jnp.pad(x.astype(jnp.float32), ((0, BB - B), (0, 14)))           # (BB, 114)
    taps = jnp.stack([xp[:, k:k + 2 * POOL_PAD - 1:2] for k in range(4)], axis=0)
    taps = taps[..., None]                                                # (4, BB, 56, 1)

    cw = jnp.transpose(conv_w[:, 0, :], (1, 0)).reshape(K, 1, 1, C_OUT)   # (3, 1, 1, 64)
    cb = conv_b.reshape(1, 1, C_OUT)                                      # (1, 1, 64)

    # fc1 weight: PyTorch flat index is c*49 + p; kernel flat index is p*64 + c.
    # Permute, zero-pad positions 49->56 and outputs 50->128 (numerically exact).
    w1r = jnp.transpose(fc1_w.reshape(FC1_OUT, C_OUT, POOL_LEN), (2, 1, 0))  # (49, 64, 50)
    w1r = jnp.pad(w1r, ((0, POOL_PAD - POOL_LEN), (0, 0), (0, LANE - FC1_OUT)))
    w1r = w1r.reshape(FC1_IN_PAD, LANE)                                      # (3584, 128)
    b1 = jnp.pad(fc1_b, (0, LANE - FC1_OUT)).reshape(1, LANE)                # (1, 128)

    w2t = jnp.pad(jnp.transpose(fc2_w, (1, 0)),
                  ((0, LANE - FC1_OUT), (0, LANE - FC2_OUT)))                # (128, 128)
    b2 = jnp.pad(fc2_b, (0, LANE - FC2_OUT)).reshape(1, LANE)                # (1, 128)

    grid = (BB // BATCH_BLK,)
    out = pl.pallas_call(
        cnn1d_kernel,
        out_shape=jax.ShapeDtypeStruct((BB, LANE), jnp.float32),
        grid_spec=pltpu.PrefetchScalarGridSpec(
            num_scalar_prefetch=0,
            grid=grid,
            in_specs=[
                pl.BlockSpec((4, BATCH_BLK, POOL_PAD, 1), lambda i: (0, i, 0, 0)),
                # weights: constant block index -> DMA'd once, reused across batch blocks
                pl.BlockSpec((K, 1, 1, C_OUT), lambda i: (0, 0, 0, 0)),
                pl.BlockSpec((1, 1, C_OUT), lambda i: (0, 0, 0)),
                pl.BlockSpec((FC1_IN_PAD, LANE), lambda i: (0, 0)),
                pl.BlockSpec((1, LANE), lambda i: (0, 0)),
                pl.BlockSpec((LANE, LANE), lambda i: (0, 0)),
                pl.BlockSpec((1, LANE), lambda i: (0, 0)),
            ],
            out_specs=pl.BlockSpec((BATCH_BLK, LANE), lambda i: (i, 0)),
        ),
        compiler_params=pltpu.CompilerParams(
            dimension_semantics=("parallel",)),   # batch axis shards across TCs on v7x
    )(taps, cw, cb, w1r, b1, w2t, b2)

    return out[:B, :FC2_OUT]


def ref_forward(x, conv_w, conv_b, fc1_w, fc1_b, fc2_w, fc2_b):
    """Pure-JAX reference mirroring the PyTorch forward (NCL layout)."""
    conv = (x[:, None, 0:CONV_LEN] * conv_w[None, :, 0, 0:1]
            + x[:, None, 1:CONV_LEN + 1] * conv_w[None, :, 0, 1:2]
            + x[:, None, 2:CONV_LEN + 2] * conv_w[None, :, 0, 2:3]
            + conv_b[None, :, None])                                       # (B, 64, 98)
    conv = jnp.maximum(conv, 0.0)
    pooled = jnp.max(conv.reshape(x.shape[0], C_OUT, POOL_LEN, 2), axis=-1)  # (B, 64, 49)
    flat = pooled.reshape(x.shape[0], FC1_IN)          # channel-major, like torch .view
    h = jnp.maximum(flat @ fc1_w.T + fc1_b, 0.0)
    return h @ fc2_w.T + fc2_b


if __name__ == "__main__":
    B = 4
    key = jax.random.PRNGKey(0)
    ks = jax.random.split(key, 8)

    x = jax.random.normal(ks[0], (B, L), dtype=jnp.float32)

    # PyTorch-style uniform(-1/sqrt(fan_in), 1/sqrt(fan_in)) init
    def uinit(k, shape, fan_in):
        bound = 1.0 / jnp.sqrt(float(fan_in))
        return jax.random.uniform(k, shape, jnp.float32, -bound, bound)

    conv_w = uinit(ks[1], (C_OUT, 1, K), 1 * K)
    conv_b = uinit(ks[2], (C_OUT,), 1 * K)
    fc1_w = uinit(ks[3], (FC1_OUT, FC1_IN), FC1_IN)
    fc1_b = uinit(ks[4], (FC1_OUT,), FC1_IN)
    fc2_w = uinit(ks[5], (FC2_OUT, FC1_OUT), FC1_OUT)
    fc2_b = uinit(ks[6], (FC2_OUT,), FC1_OUT)

    out = jax.block_until_ready(
        cnn1d_forward(x, conv_w, conv_b, fc1_w, fc1_b, fc2_w, fc2_b))
    ref = jax.block_until_ready(
        ref_forward(x, conv_w, conv_b, fc1_w, fc1_b, fc2_w, fc2_b))

    assert out.shape == (B, FC2_OUT)
    assert jnp.allclose(out, ref, atol=2e-4, rtol=2e-4), "mismatch vs reference"
    print("KERNEL_OK")
</pallas_src>

<mosaic_0001>
module attributes {stable_mosaic.version = 11 : i64} {
  func.func @cnn1d_kernel(%arg0: i32, %arg1: memref<4x8x56x1xf32, #tpu.memory_space<vmem>>, %arg2: memref<3x1x1x64xf32, #tpu.memory_space<vmem>>, %arg3: memref<1x1x64xf32, #tpu.memory_space<vmem>>, %arg4: memref<3584x128xf32, #tpu.memory_space<vmem>>, %arg5: memref<1x128xf32, #tpu.memory_space<vmem>>, %arg6: memref<128x128xf32, #tpu.memory_space<vmem>>, %arg7: memref<1x128xf32, #tpu.memory_space<vmem>>, %arg8: memref<8x128xf32, #tpu.memory_space<vmem>>) attributes {dimension_semantics = [#tpu.dimension_semantics<parallel>], iteration_bounds = array<i64: 1>, scalar_prefetch = 0 : i64, scratch_operands = 0 : i64, tpu.core_type = #tpu.core_type<tc>, window_params = [{transform_indices = @transform_0, window_bounds = array<i64: 4, 8, 56, 1>}, {pipeline_mode = #tpu.pipeline_mode<synchronous>, transform_indices = @transform_1, window_bounds = array<i64: 3, 1, 1, 64>}, {pipeline_mode = #tpu.pipeline_mode<synchronous>, transform_indices = @transform_2, window_bounds = array<i64: 1, 1, 64>}, {pipeline_mode = #tpu.pipeline_mode<synchronous>, transform_indices = @transform_3, window_bounds = array<i64: 3584, 128>}, {pipeline_mode = #tpu.pipeline_mode<synchronous>, transform_indices = @transform_4, window_bounds = array<i64: 1, 128>}, {pipeline_mode = #tpu.pipeline_mode<synchronous>, transform_indices = @transform_5, window_bounds = array<i64: 128, 128>}, {pipeline_mode = #tpu.pipeline_mode<synchronous>, transform_indices = @transform_6, window_bounds = array<i64: 1, 128>}, {transform_indices = @transform_7, window_bounds = array<i64: 8, 128>}]} {
    %c0 = arith.constant 0 : index
    %c0_0 = arith.constant 0 : index
    %c0_1 = arith.constant 0 : index
    %c0_2 = arith.constant 0 : index
    %0 = vector.load %arg1[%c0, %c0_0, %c0_1, %c0_2] : memref<4x8x56x1xf32, #tpu.memory_space<vmem>>, vector<1x8x56x1xf32>
    %1 = vector.shape_cast %0 : vector<1x8x56x1xf32> to vector<8x56x1xf32>
    %c1 = arith.constant 1 : index
    %c0_3 = arith.constant 0 : index
    %c0_4 = arith.constant 0 : index
    %c0_5 = arith.constant 0 : index
    %2 = vector.load %arg1[%c1, %c0_3, %c0_4, %c0_5] : memref<4x8x56x1xf32, #tpu.memory_space<vmem>>, vector<1x8x56x1xf32>
    %3 = vector.shape_cast %2 : vector<1x8x56x1xf32> to vector<8x56x1xf32>
    %c2 = arith.constant 2 : index
    %c0_6 = arith.constant 0 : index
    %c0_7 = arith.constant 0 : index
    %c0_8 = arith.constant 0 : index
    %4 = vector.load %arg1[%c2, %c0_6, %c0_7, %c0_8] : memref<4x8x56x1xf32, #tpu.memory_space<vmem>>, vector<1x8x56x1xf32>
    %5 = vector.shape_cast %4 : vector<1x8x56x1xf32> to vector<8x56x1xf32>
    %c3 = arith.constant 3 : index
    %c0_9 = arith.constant 0 : index
    %c0_10 = arith.constant 0 : index
    %c0_11 = arith.constant 0 : index
    %6 = vector.load %arg1[%c3, %c0_9, %c0_10, %c0_11] : memref<4x8x56x1xf32, #tpu.memory_space<vmem>>, vector<1x8x56x1xf32>
    %7 = vector.shape_cast %6 : vector<1x8x56x1xf32> to vector<8x56x1xf32>
    %c0_12 = arith.constant 0 : index
    %c0_13 = arith.constant 0 : index
    %c0_14 = arith.constant 0 : index
    %c0_15 = arith.constant 0 : index
    %8 = vector.load %arg2[%c0_12, %c0_13, %c0_14, %c0_15] : memref<3x1x1x64xf32, #tpu.memory_space<vmem>>, vector<1x1x1x64xf32>
    %9 = vector.shape_cast %8 : vector<1x1x1x64xf32> to vector<1x1x64xf32>
    %c1_16 = arith.constant 1 : index
    %c0_17 = arith.constant 0 : index
    %c0_18 = arith.constant 0 : index
    %c0_19 = arith.constant 0 : index
    %10 = vector.load %arg2[%c1_16, %c0_17, %c0_18, %c0_19] : memref<3x1x1x64xf32, #tpu.memory_space<vmem>>, vector<1x1x1x64xf32>
    %11 = vector.shape_cast %10 : vector<1x1x1x64xf32> to vector<1x1x64xf32>
    %c2_20 = arith.constant 2 : index
    %c0_21 = arith.constant 0 : index
    %c0_22 = arith.constant 0 : index
    %c0_23 = arith.constant 0 : index
    %12 = vector.load %arg2[%c2_20, %c0_21, %c0_22, %c0_23] : memref<3x1x1x64xf32, #tpu.memory_space<vmem>>, vector<1x1x1x64xf32>
    %13 = vector.shape_cast %12 : vector<1x1x1x64xf32> to vector<1x1x64xf32>
    %c0_24 = arith.constant 0 : index
    %c0_25 = arith.constant 0 : index
    %c0_26 = arith.constant 0 : index
    %14 = vector.load %arg3[%c0_24, %c0_25, %c0_26] : memref<1x1x64xf32, #tpu.memory_space<vmem>>, vector<1x1x64xf32>
    %15 = vector.broadcast %1 : vector<8x56x1xf32> to vector<8x56x64xf32>
    %16 = vector.broadcast %9 : vector<1x1x64xf32> to vector<8x56x64xf32>
    %17 = arith.mulf %15, %16 : vector<8x56x64xf32>
    %18 = vector.broadcast %3 : vector<8x56x1xf32> to vector<8x56x64xf32>
    %19 = vector.broadcast %11 : vector<1x1x64xf32> to vector<8x56x64xf32>
    %20 = arith.mulf %18, %19 : vector<8x56x64xf32>
    %21 = arith.addf %17, %20 : vector<8x56x64xf32>
    %22 = vector.broadcast %5 : vector<8x56x1xf32> to vector<8x56x64xf32>
    %23 = vector.broadcast %13 : vector<1x1x64xf32> to vector<8x56x64xf32>
    %24 = arith.mulf %22, %23 : vector<8x56x64xf32>
    %25 = arith.addf %21, %24 : vector<8x56x64xf32>
    %26 = vector.broadcast %14 : vector<1x1x64xf32> to vector<8x56x64xf32>
    %27 = arith.addf %25, %26 : vector<8x56x64xf32>
    %28 = vector.broadcast %3 : vector<8x56x1xf32> to vector<8x56x64xf32>
    %29 = vector.broadcast %9 : vector<1x1x64xf32> to vector<8x56x64xf32>
    %30 = arith.mulf %28, %29 : vector<8x56x64xf32>
    %31 = vector.broadcast %5 : vector<8x56x1xf32> to vector<8x56x64xf32>
    %32 = vector.broadcast %11 : vector<1x1x64xf32> to vector<8x56x64xf32>
    %33 = arith.mulf %31, %32 : vector<8x56x64xf32>
    %34 = arith.addf %30, %33 : vector<8x56x64xf32>
    %35 = vector.broadcast %7 : vector<8x56x1xf32> to vector<8x56x64xf32>
    %36 = vector.broadcast %13 : vector<1x1x64xf32> to vector<8x56x64xf32>
    %37 = arith.mulf %35, %36 : vector<8x56x64xf32>
    %38 = arith.addf %34, %37 : vector<8x56x64xf32>
    %39 = vector.broadcast %14 : vector<1x1x64xf32> to vector<8x56x64xf32>
    %40 = arith.addf %38, %39 : vector<8x56x64xf32>
    %41 = arith.maximumf %27, %40 : vector<8x56x64xf32>
    %cst = arith.constant 0.000000e+00 : f32
    %42 = vector.broadcast %cst : f32 to vector<8x56x64xf32>
    %43 = arith.maximumf %41, %42 : vector<8x56x64xf32>
    %44 = vector.shape_cast %43 : vector<8x56x64xf32> to vector<8x3584xf32>
    %c0_27 = arith.constant 0 : index
    %c0_28 = arith.constant 0 : index
    %45 = vector.load %arg4[%c0_27, %c0_28] : memref<3584x128xf32, #tpu.memory_space<vmem>>, vector<3584x128xf32>
    %cst_29 = arith.constant dense<0.000000e+00> : vector<8x128xf32>
    %46 = tpu.matmul %44, %45, %cst_29 {dimension_numbers = #tpu.dot_dimension_numbers<[1], [0], [0], [1], [0, 0, 1, 1], [], []>} : vector<8x3584xf32>, vector<3584x128xf32>, vector<8x128xf32> -> vector<8x128xf32>
    %c0_30 = arith.constant 0 : index
    %c0_31 = arith.constant 0 : index
    %47 = vector.load %arg5[%c0_30, %c0_31] : memref<1x128xf32, #tpu.memory_space<vmem>>, vector<1x128xf32>
    %48 = vector.broadcast %47 : vector<1x128xf32> to vector<8x128xf32>
    %49 = arith.addf %46, %48 : vector<8x128xf32>
    %cst_32 = arith.constant 0.000000e+00 : f32
    %50 = vector.broadcast %cst_32 : f32 to vector<8x128xf32>
    %51 = arith.maximumf %49, %50 : vector<8x128xf32>
    %c0_33 = arith.constant 0 : index
    %c0_34 = arith.constant 0 : index
    %52 = vector.load %arg6[%c0_33, %c0_34] : memref<128x128xf32, #tpu.memory_space<vmem>>, vector<128x128xf32>
    %cst_35 = arith.constant dense<0.000000e+00> : vector<8x128xf32>
    %53 = tpu.matmul %51, %52, %cst_35 {dimension_numbers = #tpu.dot_dimension_numbers<[1], [0], [0], [1], [0, 0, 1, 1], [], []>} : vector<8x128xf32>, vector<128x128xf32>, vector<8x128xf32> -> vector<8x128xf32>
    %c0_36 = arith.constant 0 : index
    %c0_37 = arith.constant 0 : index
    %54 = vector.load %arg7[%c0_36, %c0_37] : memref<1x128xf32, #tpu.memory_space<vmem>>, vector<1x128xf32>
    %55 = vector.broadcast %54 : vector<1x128xf32> to vector<8x128xf32>
    %56 = arith.addf %53, %55 : vector<8x128xf32>
    %c0_38 = arith.constant 0 : index
    %c0_39 = arith.constant 0 : index
    %57 = vector.load %arg8[%c0_38, %c0_39] : memref<8x128xf32, #tpu.memory_space<vmem>>, vector<8x128xf32>
    tpu.vector_store %arg8[%c0_38, %c0_39], %56 {strides = array<i32>} : memref<8x128xf32, #tpu.memory_space<vmem>>, vector<8x128xf32>,
    return
  }
  func.func @transform_0(%arg0: i32) -> (i32, i32, i32, i32) {
    %c0_i32 = arith.constant 0 : i32
    %c0_i32_0 = arith.constant 0 : i32
    %c0_i32_1 = arith.constant 0 : i32
    %c0_i32_2 = arith.constant 0 : i32
    return %c0_i32, %arg0, %c0_i32_0, %c0_i32_1 : i32, i32, i32, i32
  }
  func.func @transform_1(%arg0: i32) -> (i32, i32, i32, i32) {
    %c0_i32 = arith.constant 0 : i32
    %c0_i32_0 = arith.constant 0 : i32
    %c0_i32_1 = arith.constant 0 : i32
    %c0_i32_2 = arith.constant 0 : i32
    %c0_i32_3 = arith.constant 0 : i32
    return %c0_i32, %c0_i32_0, %c0_i32_1, %c0_i32_2 : i32, i32, i32, i32
  }
  func.func @transform_2(%arg0: i32) -> (i32, i32, i32) {
    %c0_i32 = arith.constant 0 : i32
    %c0_i32_0 = arith.constant 0 : i32
    %c0_i32_1 = arith.constant 0 : i32
    %c0_i32_2 = arith.constant 0 : i32
    return %c0_i32, %c0_i32_0, %c0_i32_1 : i32, i32, i32
  }
  func.func @transform_3(%arg0: i32) -> (i32, i32) {
    %c0_i32 = arith.constant 0 : i32
    %c0_i32_0 = arith.constant 0 : i32
    %c0_i32_1 = arith.constant 0 : i32
    return %c0_i32, %c0_i32_0 : i32, i32
  }
  func.func @transform_4(%arg0: i32) -> (i32, i32) {
    %c0_i32 = arith.constant 0 : i32
    %c0_i32_0 = arith.constant 0 : i32
    %c0_i32_1 = arith.constant 0 : i32
    return %c0_i32, %c0_i32_0 : i32, i32
  }
  func.func @transform_5(%arg0: i32) -> (i32, i32) {
    %c0_i32 = arith.constant 0 : i32
    %c0_i32_0 = arith.constant 0 : i32
    %c0_i32_1 = arith.constant 0 : i32
    return %c0_i32, %c0_i32_0 : i32, i32
  }
  func.func @transform_6(%arg0: i32) -> (i32, i32) {
    %c0_i32 = arith.constant 0 : i32
    %c0_i32_0 = arith.constant 0 : i32
    %c0_i32_1 = arith.constant 0 : i32
    return %c0_i32, %c0_i32_0 : i32, i32
  }
  func.func @transform_7(%arg0: i32) -> (i32, i32) {
    %c0_i32 = arith.constant 0 : i32
    %c0_i32_0 = arith.constant 0 : i32
    return %arg0, %c0_i32 : i32, i32
  }
}

</mosaic_0001>

<llo_original>
// kernel: cnn1d_forward.1
$region0: #{cnn1d_forward.1}
  #allocation0 [shape = 'u32[]', space=smem, size = 0x4, offset = 0x4, fixed_abs, tag = 'smem constant byte address 0x4 - core index']
  #allocation1 [shape = 'u32[144,128]{1,0:T(1,128)}', space=vmem, size = 0x12000, scoped, tag = 'internal scratch']
  %s0 = inlined_call_operand.vmem [shape: f32[4,8,56,1], index: 0, kind: input, shape index: {}]
  %s1 = inlined_call_operand.vmem [shape: f32[3,1,1,64], index: 1, kind: input, shape index: {}]
  %s2 = inlined_call_operand.vmem [shape: f32[1,1,64], index: 2, kind: input, shape index: {}]
  %s3 = inlined_call_operand.vmem [shape: f32[3584,128], index: 3, kind: input, shape index: {}]
  %s4 = inlined_call_operand.vmem [shape: f32[1,128], index: 4, kind: input, shape index: {}]
  %s5 = inlined_call_operand.vmem [shape: f32[128,128], index: 5, kind: input, shape index: {}]
  %s6 = inlined_call_operand.vmem [shape: f32[1,128], index: 6, kind: input, shape index: {}]
  %s7 = inlined_call_operand.vmem [shape: f32[8,128], index: 7, kind: output, shape index: {}]
  %s8 = sld [smem:[#allocation0]]
  $region38: #{cnn1d_forward.1} parent=0
    _
  %s10 = ssub.s32 1, %s8
  %s11 = scalar_select 0, %s10, %s8
  // Predicated region
  $region2: #{cnn1d_forward.1} parent=0 // pred_check
    _
  $region3: #{cnn1d_forward.1} parent=0 // pred_check_branch
    %13 = sbr.rel (0) target = $region5
  $region4: #{cnn1d_forward.1} parent=0 // pred_region
    _
  $region5: #{cnn1d_forward.1} parent=0 // pred_fallthru
    _
  // Predicated region
  $region6: #{cnn1d_forward.1} parent=0 // pred_check
    _
  $region7: #{cnn1d_forward.1} parent=0 // pred_check_branch
    %15 = sbr.rel (0) target = $region9
  $region8: #{cnn1d_forward.1} parent=0 // pred_region
    _
  $region9: #{cnn1d_forward.1} parent=0 // pred_fallthru
    _
  // Predicated region
  $region10: #{cnn1d_forward.1} parent=0 // pred_check
    _
  $region11: #{cnn1d_forward.1} parent=0 // pred_check_branch
    %17 = sbr.rel (0) target = $region13
  $region12: #{cnn1d_forward.1} parent=0 // pred_region
    _
  $region13: #{cnn1d_forward.1} parent=0 // pred_fallthru
    _
  // Predicated region
  $region14: #{cnn1d_forward.1} parent=0 // pred_check
    _
  $region15: #{cnn1d_forward.1} parent=0 // pred_check_branch
    %19 = sbr.rel (0) target = $region17
  $region16: #{cnn1d_forward.1} parent=0 // pred_region
    _
  $region17: #{cnn1d_forward.1} parent=0 // pred_fallthru
    _
  // Predicated region
  $region18: #{cnn1d_forward.1} parent=0 // pred_check
    _
  $region19: #{cnn1d_forward.1} parent=0 // pred_check_branch
    %21 = sbr.rel (0) target = $region21
  $region20: #{cnn1d_forward.1} parent=0 // pred_region
    _
  $region21: #{cnn1d_forward.1} parent=0 // pred_fallthru
    _
  // Predicated region
  $region22: #{cnn1d_forward.1} parent=0 // pred_check
    _
  $region23: #{cnn1d_forward.1} parent=0 // pred_check_branch
    %23 = sbr.rel (0) target = $region25
  $region24: #{cnn1d_forward.1} parent=0 // pred_region
    _
  $region25: #{cnn1d_forward.1} parent=0 // pred_fallthru
    _
  // Predicated region
  $region26: #{cnn1d_forward.1} parent=0 // pred_check
    _
  $region27: #{cnn1d_forward.1} parent=0 // pred_check_branch
    %25 = sbr.rel (0) target = $region29
  $region28: #{cnn1d_forward.1} parent=0 // pred_region
    _
  $region29: #{cnn1d_forward.1} parent=0 // pred_fallthru
    _
  %v26 = vld [vmem:[%s0] sm:$0xff]
  %v27 = vld [vmem:[%s0 + $0x8] sm:$0xff]
  %v28 = vld [vmem:[%s0 + $0x10] sm:$0xff]
  %v29 = vld [vmem:[%s0 + $0x18] sm:$0xff]
  %v30 = vld [vmem:[%s0 + $0x20] sm:$0xff]
  %v31 = vld [vmem:[%s0 + $0x28] sm:$0xff]
  %v32 = vld [vmem:[%s0 + $0x30] sm:$0xff]
  %v33 = vld [vmem:[%s0 + $0x38] sm:$0xff]
  %v34 = vld [vmem:[%s0 + $0x40] sm:$0xff]
  %v35 = vld [vmem:[%s0 + $0x48] sm:$0xff]
  %v36 = vld [vmem:[%s0 + $0x50] sm:$0xff]
  %v37 = vld [vmem:[%s0 + $0x58] sm:$0xff]
  %v38 = vld [vmem:[%s0 + $0x60] sm:$0xff]
  %v39 = vld [vmem:[%s0 + $0x68] sm:$0xff]
  %v40 = vld [vmem:[%s0 + $0x70] sm:$0xff]
  %v41 = vld [vmem:[%s0 + $0x78] sm:$0xff]
  %v42 = vld [vmem:[%s0 + $0x80] sm:$0xff]
  %v43 = vld [vmem:[%s0 + $0x88] sm:$0xff]
  %v44 = vld [vmem:[%s0 + $0x90] sm:$0xff]
  %v45 = vld [vmem:[%s0 + $0x98] sm:$0xff]
  %v46 = vld [vmem:[%s0 + $0xa0] sm:$0xff]
  %v47 = vld [vmem:[%s0 + $0xa8] sm:$0xff]
  %v48 = vld [vmem:[%s0 + $0xb0] sm:$0xff]
  %v49 = vld [vmem:[%s0 + $0xb8] sm:$0xff]
  %v50 = vld [vmem:[%s0 + $0xc0] sm:$0xff]
  %v51 = vld [vmem:[%s0 + $0xc8] sm:$0xff]
  %v52 = vld [vmem:[%s0 + $0xd0] sm:$0xff]
  %v53 = vld [vmem:[%s0 + $0xd8] sm:$0xff]
  %v54 = vld [vmem:[%s0 + $0xe0] sm:$0xff]
  %v55 = vld [vmem:[%s0 + $0xe8] sm:$0xff]
  %v56 = vld [vmem:[%s0 + $0xf0] sm:$0xff]
  %v57 = vld [vmem:[%s0 + $0xf8] sm:$0xff]
  %v58 = vld [vmem:[%s0 + $0x100] sm:$0xff]
  %v59 = vld [vmem:[%s0 + $0x108] sm:$0xff]
  %v60 = vld [vmem:[%s0 + $0x110] sm:$0xff]
  %v61 = vld [vmem:[%s0 + $0x118] sm:$0xff]
  %v62 = vld [vmem:[%s0 + $0x120] sm:$0xff]
  %v63 = vld [vmem:[%s0 + $0x128] sm:$0xff]
  %v64 = vld [vmem:[%s0 + $0x130] sm:$0xff]
  %v65 = vld [vmem:[%s0 + $0x138] sm:$0xff]
  %v66 = vld [vmem:[%s0 + $0x140] sm:$0xff]
  %v67 = vld [vmem:[%s0 + $0x148] sm:$0xff]
  %v68 = vld [vmem:[%s0 + $0x150] sm:$0xff]
  %v69 = vld [vmem:[%s0 + $0x158] sm:$0xff]
  %v70 = vld [vmem:[%s0 + $0x160] sm:$0xff]
  %v71 = vld [vmem:[%s0 + $0x168] sm:$0xff]
  %v72 = vld [vmem:[%s0 + $0x170] sm:$0xff]
  %v73 = vld [vmem:[%s0 + $0x178] sm:$0xff]
  %v74 = vld [vmem:[%s0 + $0x180] sm:$0xff]
  %v75 = vld [vmem:[%s0 + $0x188] sm:$0xff]
  %v76 = vld [vmem:[%s0 + $0x190] sm:$0xff]
  %v77 = vld [vmem:[%s0 + $0x198] sm:$0xff]
  %v78 = vld [vmem:[%s0 + $0x1a0] sm:$0xff]
  %v79 = vld [vmem:[%s0 + $0x1a8] sm:$0xff]
  %v80 = vld [vmem:[%s0 + $0x1b0] sm:$0xff]
  %v81 = vld [vmem:[%s0 + $0x1b8] sm:$0xff]
  %s82 = scalar_lea.vmem %s0, 448
  %v83 = vld [vmem:[%s82] sm:$0xff]
  %v84 = vld [vmem:[%s82 + $0x8] sm:$0xff]
  %v85 = vld [vmem:[%s82 + $0x10] sm:$0xff]
  %v86 = vld [vmem:[%s82 + $0x18] sm:$0xff]
  %v87 = vld [vmem:[%s82 + $0x20] sm:$0xff]
  %v88 = vld [vmem:[%s82 + $0x28] sm:$0xff]
  %v89 = vld [vmem:[%s82 + $0x30] sm:$0xff]
  %v90 = vld [vmem:[%s82 + $0x38] sm:$0xff]
  %v91 = vld [vmem:[%s82 + $0x40] sm:$0xff]
  %v92 = vld [vmem:[%s82 + $0x48] sm:$0xff]
  %v93 = vld [vmem:[%s82 + $0x50] sm:$0xff]
  %v94 = vld [vmem:[%s82 + $0x58] sm:$0xff]
  %v95 = vld [vmem:[%s82 + $0x60] sm:$0xff]
  %v96 = vld [vmem:[%s82 + $0x68] sm:$0xff]
  %v97 = vld [vmem:[%s82 + $0x70] sm:$0xff]
  %v98 = vld [vmem:[%s82 + $0x78] sm:$0xff]
  %v99 = vld [vmem:[%s82 + $0x80] sm:$0xff]
  %v100 = vld [vmem:[%s82 + $0x88] sm:$0xff]
  %v101 = vld [vmem:[%s82 + $0x90] sm:$0xff]
  %v102 = vld [vmem:[%s82 + $0x98] sm:$0xff]
  %v103 = vld [vmem:[%s82 + $0xa0] sm:$0xff]
  %v104 = vld [vmem:[%s82 + $0xa8] sm:$0xff]
  %v105 = vld [vmem:[%s82 + $0xb0] sm:$0xff]
  %v106 = vld [vmem:[%s82 + $0xb8] sm:$0xff]
  %v107 = vld [vmem:[%s82 + $0xc0] sm:$0xff]
  %v108 = vld [vmem:[%s82 + $0xc8] sm:$0xff]
  %v109 = vld [vmem:[%s82 + $0xd0] sm:$0xff]
  %v110 = vld [vmem:[%s82 + $0xd8] sm:$0xff]
  %v111 = vld [vmem:[%s82 + $0xe0] sm:$0xff]
  %v112 = vld [vmem:[%s82 + $0xe8] sm:$0xff]
  %v113 = vld [vmem:[%s82 + $0xf0] sm:$0xff]
  %v114 = vld [vmem:[%s82 + $0xf8] sm:$0xff]
  %v115 = vld [vmem:[%s82 + $0x100] sm:$0xff]
  %v116 = vld [vmem:[%s82 + $0x108] sm:$0xff]
  %v117 = vld [vmem:[%s82 + $0x110] sm:$0xff]
  %v118 = vld [vmem:[%s82 + $0x118] sm:$0xff]
  %v119 = vld [vmem:[%s82 + $0x120] sm:$0xff]
  %v120 = vld [vmem:[%s82 + $0x128] sm:$0xff]
  %v121 = vld [vmem:[%s82 + $0x130] sm:$0xff]
  %v122 = vld [vmem:[%s82 + $0x138] sm:$0xff]
  %v123 = vld [vmem:[%s82 + $0x140] sm:$0xff]
  %v124 = vld [vmem:[%s82 + $0x148] sm:$0xff]
  %v125 = vld [vmem:[%s82 + $0x150] sm:$0xff]
  %v126 = vld [vmem:[%s82 + $0x158] sm:$0xff]
  %v127 = vld [vmem:[%s82 + $0x160] sm:$0xff]
  %v128 = vld [vmem:[%s82 + $0x168] sm:$0xff]
  %v129 = vld [vmem:[%s82 + $0x170] sm:$0xff]
  %v130 = vld [vmem:[%s82 + $0x178] sm:$0xff]
  %v131 = vld [vmem:[%s82 + $0x180] sm:$0xff]
  %v132 = vld [vmem:[%s82 + $0x188] sm:$0xff]
  %v133 = vld [vmem:[%s82 + $0x190] sm:$0xff]
  %v134 = vld [vmem:[%s82 + $0x198] sm:$0xff]
  %v135 = vld [vmem:[%s82 + $0x1a0] sm:$0xff]
  %v136 = vld [vmem:[%s82 + $0x1a8] sm:$0xff]
  %v137 = vld [vmem:[%s82 + $0x1b0] sm:$0xff]
  %v138 = vld [vmem:[%s82 + $0x1b8] sm:$0xff]
  %s139 = scalar_lea.vmem %s0, 896
  %v140 = vld [vmem:[%s139] sm:$0xff]
  %v141 = vld [vmem:[%s139 + $0x8] sm:$0xff]
  %v142 = vld [vmem:[%s139 + $0x10] sm:$0xff]
  %v143 = vld [vmem:[%s139 + $0x18] sm:$0xff]
  %v144 = vld [vmem:[%s139 + $0x20] sm:$0xff]
  %v145 = vld [vmem:[%s139 + $0x28] sm:$0xff]
  %v146 = vld [vmem:[%s139 + $0x30] sm:$0xff]
  %v147 = vld [vmem:[%s139 + $0x38] sm:$0xff]
  %v148 = vld [vmem:[%s139 + $0x40] sm:$0xff]
  %v149 = vld [vmem:[%s139 + $0x48] sm:$0xff]
  %v150 = vld [vmem:[%s139 + $0x50] sm:$0xff]
  %v151 = vld [vmem:[%s139 + $0x58] sm:$0xff]
  %v152 = vld [vmem:[%s139 + $0x60] sm:$0xff]
  %v153 = vld [vmem:[%s139 + $0x68] sm:$0xff]
  %v154 = vld [vmem:[%s139 + $0x70] sm:$0xff]
  %v155 = vld [vmem:[%s139 + $0x78] sm:$0xff]
  %v156 = vld [vmem:[%s139 + $0x80] sm:$0xff]
  %v157 = vld [vmem:[%s139 + $0x88] sm:$0xff]
  %v158 = vld [vmem:[%s139 + $0x90] sm:$0xff]
  %v159 = vld [vmem:[%s139 + $0x98] sm:$0xff]
  %v160 = vld [vmem:[%s139 + $0xa0] sm:$0xff]
  %v161 = vld [vmem:[%s139 + $0xa8] sm:$0xff]
  %v162 = vld [vmem:[%s139 + $0xb0] sm:$0xff]
  %v163 = vld [vmem:[%s139 + $0xb8] sm:$0xff]
  %v164 = vld [vmem:[%s139 + $0xc0] sm:$0xff]
  %v165 = vld [vmem:[%s139 + $0xc8] sm:$0xff]
  %v166 = vld [vmem:[%s139 + $0xd0] sm:$0xff]
  %v167 = vld [vmem:[%s139 + $0xd8] sm:$0xff]
  %v168 = vld [vmem:[%s139 + $0xe0] sm:$0xff]
  %v169 = vld [vmem:[%s139 + $0xe8] sm:$0xff]
  %v170 = vld [vmem:[%s139 + $0xf0] sm:$0xff]
  %v171 = vld [vmem:[%s139 + $0xf8] sm:$0xff]
  %v172 = vld [vmem:[%s139 + $0x100] sm:$0xff]
  %v173 = vld [vmem:[%s139 + $0x108] sm:$0xff]
  %v174 = vld [vmem:[%s139 + $0x110] sm:$0xff]
  %v175 = vld [vmem:[%s139 + $0x118] sm:$0xff]
  %v176 = vld [vmem:[%s139 + $0x120] sm:$0xff]
  %v177 = vld [vmem:[%s139 + $0x128] sm:$0xff]
  %v178 = vld [vmem:[%s139 + $0x130] sm:$0xff]
  %v179 = vld [vmem:[%s139 + $0x138] sm:$0xff]
  %v180 = vld [vmem:[%s139 + $0x140] sm:$0xff]
  %v181 = vld [vmem:[%s139 + $0x148] sm:$0xff]
  %v182 = vld [vmem:[%s139 + $0x150] sm:$0xff]
  %v183 = vld [vmem:[%s139 + $0x158] sm:$0xff]
  %v184 = vld [vmem:[%s139 + $0x160] sm:$0xff]
  %v185 = vld [vmem:[%s139 + $0x168] sm:$0xff]
  %v186 = vld [vmem:[%s139 + $0x170] sm:$0xff]
  %v187 = vld [vmem:[%s139 + $0x178] sm:$0xff]
  %v188 = vld [vmem:[%s139 + $0x180] sm:$0xff]
  %v189 = vld [vmem:[%s139 + $0x188] sm:$0xff]
  %v190 = vld [vmem:[%s139 + $0x190] sm:$0xff]
  %v191 = vld [vmem:[%s139 + $0x198] sm:$0xff]
  %v192 = vld [vmem:[%s139 + $0x1a0] sm:$0xff]
  %v193 = vld [vmem:[%s139 + $0x1a8] sm:$0xff]
  %v194 = vld [vmem:[%s139 + $0x1b0] sm:$0xff]
  %v195 = vld [vmem:[%s139 + $0x1b8] sm:$0xff]
  %s196 = scalar_lea.vmem %s0, 1344
  %v197 = vld [vmem:[%s196] sm:$0xff]
  %v198 = vld [vmem:[%s196 + $0x8] sm:$0xff]
  %v199 = vld [vmem:[%s196 + $0x10] sm:$0xff]
  %v200 = vld [vmem:[%s196 + $0x18] sm:$0xff]
  %v201 = vld [vmem:[%s196 + $0x20] sm:$0xff]
  %v202 = vld [vmem:[%s196 + $0x28] sm:$0xff]
  %v203 = vld [vmem:[%s196 + $0x30] sm:$0xff]
  %v204 = vld [vmem:[%s196 + $0x38] sm:$0xff]
  %v205 = vld [vmem:[%s196 + $0x40] sm:$0xff]
  %v206 = vld [vmem:[%s196 + $0x48] sm:$0xff]
  %v207 = vld [vmem:[%s196 + $0x50] sm:$0xff]
  %v208 = vld [vmem:[%s196 + $0x58] sm:$0xff]
  %v209 = vld [vmem:[%s196 + $0x60] sm:$0xff]
  %v210 = vld [vmem:[%s196 + $0x68] sm:$0xff]
  %v211 = vld [vmem:[%s196 + $0x70] sm:$0xff]
  %v212 = vld [vmem:[%s196 + $0x78] sm:$0xff]
  %v213 = vld [vmem:[%s196 + $0x80] sm:$0xff]
  %v214 = vld [vmem:[%s196 + $0x88] sm:$0xff]
  %v215 = vld [vmem:[%s196 + $0x90] sm:$0xff]
  %v216 = vld [vmem:[%s196 + $0x98] sm:$0xff]
  %v217 = vld [vmem:[%s196 + $0xa0] sm:$0xff]
  %v218 = vld [vmem:[%s196 + $0xa8] sm:$0xff]
  %v219 = vld [vmem:[%s196 + $0xb0] sm:$0xff]
  %v220 = vld [vmem:[%s196 + $0xb8] sm:$0xff]
  %v221 = vld [vmem:[%s196 + $0xc0] sm:$0xff]
  %v222 = vld [vmem:[%s196 + $0xc8] sm:$0xff]
  %v223 = vld [vmem:[%s196 + $0xd0] sm:$0xff]
  %v224 = vld [vmem:[%s196 + $0xd8] sm:$0xff]
  %v225 = vld [vmem:[%s196 + $0xe0] sm:$0xff]
  %v226 = vld [vmem:[%s196 + $0xe8] sm:$0xff]
  %v227 = vld [vmem:[%s196 + $0xf0] sm:$0xff]
  %v228 = vld [vmem:[%s196 + $0xf8] sm:$0xff]
  %v229 = vld [vmem:[%s196 + $0x100] sm:$0xff]
  %v230 = vld [vmem:[%s196 + $0x108] sm:$0xff]
  %v231 = vld [vmem:[%s196 + $0x110] sm:$0xff]
  %v232 = vld [vmem:[%s196 + $0x118] sm:$0xff]
  %v233 = vld [vmem:[%s196 + $0x120] sm:$0xff]
  %v234 = vld [vmem:[%s196 + $0x128] sm:$0xff]
  %v235 = vld [vmem:[%s196 + $0x130] sm:$0xff]
  %v236 = vld [vmem:[%s196 + $0x138] sm:$0xff]
  %v237 = vld [vmem:[%s196 + $0x140] sm:$0xff]
  %v238 = vld [vmem:[%s196 + $0x148] sm:$0xff]
  %v239 = vld [vmem:[%s196 + $0x150] sm:$0xff]
  %v240 = vld [vmem:[%s196 + $0x158] sm:$0xff]
  %v241 = vld [vmem:[%s196 + $0x160] sm:$0xff]
  %v242 = vld [vmem:[%s196 + $0x168] sm:$0xff]
  %v243 = vld [vmem:[%s196 + $0x170] sm:$0xff]
  %v244 = vld [vmem:[%s196 + $0x178] sm:$0xff]
  %v245 = vld [vmem:[%s196 + $0x180] sm:$0xff]
  %v246 = vld [vmem:[%s196 + $0x188] sm:$0xff]
  %v247 = vld [vmem:[%s196 + $0x190] sm:$0xff]
  %v248 = vld [vmem:[%s196 + $0x198] sm:$0xff]
  %v249 = vld [vmem:[%s196 + $0x1a0] sm:$0xff]
  %v250 = vld [vmem:[%s196 + $0x1a8] sm:$0xff]
  %v251 = vld [vmem:[%s196 + $0x1b0] sm:$0xff]
  %v252 = vld [vmem:[%s196 + $0x1b8] sm:$0xff]
  %v253 = vld [vmem:[%s1] sm:$0x1]
  %s254 = scalar_lea.vmem %s1, 1
  %v255 = vld [vmem:[%s254] sm:$0x1]
  %s256 = scalar_lea.vmem %s1, 2
  %v257 = vld [vmem:[%s256] sm:$0x1]
  %v258 = vld [vmem:[%s2] sm:$0x1]
  %260 = vset.pattern.permute.xlu0 0
  %261 = vperm.xlu0 %260, %v26
  %v262 = vpop.permute.xlu0 %261
  %265 = vset.pattern.permute.xlu0 0
  %266 = vperm.xlu0 %265, %v27
  %v267 = vpop.permute.xlu0 %266
  %270 = vset.pattern.permute.xlu0 0
  %271 = vperm.xlu0 %270, %v28
  %v272 = vpop.permute.xlu0 %271
  %275 = vset.pattern.permute.xlu0 0
  %276 = vperm.xlu0 %275, %v29
  %v277 = vpop.permute.xlu0 %276
  %280 = vset.pattern.permute.xlu0 0
  %281 = vperm.xlu0 %280, %v30
  %v282 = vpop.permute.xlu0 %281
  %285 = vset.pattern.permute.xlu0 0
  %286 = vperm.xlu0 %285, %v31
  %v287 = vpop.permute.xlu0 %286
  %290 = vset.pattern.permute.xlu0 0
  %291 = vperm.xlu0 %290, %v32
  %v292 = vpop.permute.xlu0 %291
  %295 = vset.pattern.permute.xlu0 0
  %296 = vperm.xlu0 %295, %v33
  %v297 = vpop.permute.xlu0 %296
  %300 = vset.pattern.permute.xlu0 0
  %301 = vperm.xlu0 %300, %v34
  %v302 = vpop.permute.xlu0 %301
  %305 = vset.pattern.permute.xlu0 0
  %306 = vperm.xlu0 %305, %v35
  %v307 = vpop.permute.xlu0 %306
  %310 = vset.pattern.permute.xlu0 0
  %311 = vperm.xlu0 %310, %v36
  %v312 = vpop.permute.xlu0 %311
  %315 = vset.pattern.permute.xlu0 0
  %316 = vperm.xlu0 %315, %v37
  %v317 = vpop.permute.xlu0 %316
  %320 = vset.pattern.permute.xlu0 0
  %321 = vperm.xlu0 %320, %v38
  %v322 = vpop.permute.xlu0 %321
  %325 = vset.pattern.permute.xlu0 0
  %326 = vperm.xlu0 %325, %v39
  %v327 = vpop.permute.xlu0 %326
  %330 = vset.pattern.permute.xlu0 0
  %331 = vperm.xlu0 %330, %v40
  %v332 = vpop.permute.xlu0 %331
  %335 = vset.pattern.permute.xlu0 0
  %336 = vperm.xlu0 %335, %v41
  %v337 = vpop.permute.xlu0 %336
  %340 = vset.pattern.permute.xlu0 0
  %341 = vperm.xlu0 %340, %v42
  %v342 = vpop.permute.xlu0 %341
  %345 = vset.pattern.permute.xlu0 0
  %346 = vperm.xlu0 %345, %v43
  %v347 = vpop.permute.xlu0 %346
  %350 = vset.pattern.permute.xlu0 0
  %351 = vperm.xlu0 %350, %v44
  %v352 = vpop.permute.xlu0 %351
  %355 = vset.pattern.permute.xlu0 0
  %356 = vperm.xlu0 %355, %v45
  %v357 = vpop.permute.xlu0 %356
  %360 = vset.pattern.permute.xlu0 0
  %361 = vperm.xlu0 %360, %v46
  %v362 = vpop.permute.xlu0 %361
  %365 = vset.pattern.permute.xlu0 0
  %366 = vperm.xlu0 %365, %v47
  %v367 = vpop.permute.xlu0 %366
  %370 = vset.pattern.permute.xlu0 0
  %371 = vperm.xlu0 %370, %v48
  %v372 = vpop.permute.xlu0 %371
  %375 = vset.pattern.permute.xlu0 0
  %376 = vperm.xlu0 %375, %v49
  %v377 = vpop.permute.xlu0 %376
  %380 = vset.pattern.permute.xlu0 0
  %381 = vperm.xlu0 %380, %v50
  %v382 = vpop.permute.xlu0 %381
  %385 = vset.pattern.permute.xlu0 0
  %386 = vperm.xlu0 %385, %v51
  %v387 = vpop.permute.xlu0 %386
  %390 = vset.pattern.permute.xlu0 0
  %391 = vperm.xlu0 %390, %v52
  %v392 = vpop.permute.xlu0 %391
  %395 = vset.pattern.permute.xlu0 0
  %396 = vperm.xlu0 %395, %v53
  %v397 = vpop.permute.xlu0 %396
  %400 = vset.pattern.permute.xlu0 0
  %401 = vperm.xlu0 %400, %v54
  %v402 = vpop.permute.xlu0 %401
  %405 = vset.pattern.permute.xlu0 0
  %406 = vperm.xlu0 %405, %v55
  %v407 = vpop.permute.xlu0 %406
  %410 = vset.pattern.permute.xlu0 0
  %411 = vperm.xlu0 %410, %v56
  %v412 = vpop.permute.xlu0 %411
  %415 = vset.pattern.permute.xlu0 0
  %416 = vperm.xlu0 %415, %v57
  %v417 = vpop.permute.xlu0 %416
  %420 = vset.pattern.permute.xlu0 0
  %421 = vperm.xlu0 %420, %v58
  %v422 = vpop.permute.xlu0 %421
  %425 = vset.pattern.permute.xlu0 0
  %426 = vperm.xlu0 %425, %v59
  %v427 = vpop.permute.xlu0 %426
  %430 = vset.pattern.permute.xlu0 0
  %431 = vperm.xlu0 %430, %v60
  %v432 = vpop.permute.xlu0 %431
  %435 = vset.pattern.permute.xlu0 0
  %436 = vperm.xlu0 %435, %v61
  %v437 = vpop.permute.xlu0 %436
  %440 = vset.pattern.permute.xlu0 0
  %441 = vperm.xlu0 %440, %v62
  %v442 = vpop.permute.xlu0 %441
  %445 = vset.pattern.permute.xlu0 0
  %446 = vperm.xlu0 %445, %v63
  %v447 = vpop.permute.xlu0 %446
  %450 = vset.pattern.permute.xlu0 0
  %451 = vperm.xlu0 %450, %v64
  %v452 = vpop.permute.xlu0 %451
  %455 = vset.pattern.permute.xlu0 0
  %456 = vperm.xlu0 %455, %v65
  %v457 = vpop.permute.xlu0 %456
  %460 = vset.pattern.permute.xlu0 0
  %461 = vperm.xlu0 %460, %v66
  %v462 = vpop.permute.xlu0 %461
  %465 = vset.pattern.permute.xlu0 0
  %466 = vperm.xlu0 %465, %v67
  %v467 = vpop.permute.xlu0 %466
  %470 = vset.pattern.permute.xlu0 0
  %471 = vperm.xlu0 %470, %v68
  %v472 = vpop.permute.xlu0 %471
  %475 = vset.pattern.permute.xlu0 0
  %476 = vperm.xlu0 %475, %v69
  %v477 = vpop.permute.xlu0 %476
  %480 = vset.pattern.permute.xlu0 0
  %481 = vperm.xlu0 %480, %v70
  %v482 = vpop.permute.xlu0 %481
  %485 = vset.pattern.permute.xlu0 0
  %486 = vperm.xlu0 %485, %v71
  %v487 = vpop.permute.xlu0 %486
  %490 = vset.pattern.permute.xlu0 0
  %491 = vperm.xlu0 %490, %v72
  %v492 = vpop.permute.xlu0 %491
  %495 = vset.pattern.permute.xlu0 0
  %496 = vperm.xlu0 %495, %v73
  %v497 = vpop.permute.xlu0 %496
  %500 = vset.pattern.permute.xlu0 0
  %501 = vperm.xlu0 %500, %v74
  %v502 = vpop.permute.xlu0 %501
  %505 = vset.pattern.permute.xlu0 0
  %506 = vperm.xlu0 %505, %v75
  %v507 = vpop.permute.xlu0 %506
  %510 = vset.pattern.permute.xlu0 0
  %511 = vperm.xlu0 %510, %v76
  %v512 = vpop.permute.xlu0 %511
  %515 = vset.pattern.permute.xlu0 0
  %516 = vperm.xlu0 %515, %v77
  %v517 = vpop.permute.xlu0 %516
  %520 = vset.pattern.permute.xlu0 0
  %521 = vperm.xlu0 %520, %v78
  %v522 = vpop.permute.xlu0 %521
  %525 = vset.pattern.permute.xlu0 0
  %526 = vperm.xlu0 %525, %v79
  %v527 = vpop.permute.xlu0 %526
  %530 = vset.pattern.permute.xlu0 0
  %531 = vperm.xlu0 %530, %v80
  %v532 = vpop.permute.xlu0 %531
  %535 = vset.pattern.permute.xlu0 0
  %536 = vperm.xlu0 %535, %v81
  %v537 = vpop.permute.xlu0 %536
  %v540 = vlaneseq
  %v541 = vshrl.u32 %v540, 7
  %v542 = vsub.s32 0, %v541
  %v543 = vrot.slane %v253, %v542
  %v545 = vmul.f32 %v262, %v543
  %v546 = vmul.f32 %v267, %v543
  %v547 = vmul.f32 %v272, %v543
  %v548 = vmul.f32 %v277, %v543
  %v549 = vmul.f32 %v282, %v543
  %v550 = vmul.f32 %v287, %v543
  %v551 = vmul.f32 %v292, %v543
  %v552 = vmul.f32 %v297, %v543
  %v553 = vmul.f32 %v302, %v543
  %v554 = vmul.f32 %v307, %v543
  %v555 = vmul.f32 %v312, %v543
  %v556 = vmul.f32 %v317, %v543
  %v557 = vmul.f32 %v322, %v543
  %v558 = vmul.f32 %v327, %v543
  %v559 = vmul.f32 %v332, %v543
  %v560 = vmul.f32 %v337, %v543
  %v561 = vmul.f32 %v342, %v543
  %v562 = vmul.f32 %v347, %v543
  %v563 = vmul.f32 %v352, %v543
  %v564 = vmul.f32 %v357, %v543
  %v565 = vmul.f32 %v362, %v543
  %v566 = vmul.f32 %v367, %v543
  %v567 = vmul.f32 %v372, %v543
  %v568 = vmul.f32 %v377, %v543
  %v569 = vmul.f32 %v382, %v543
  %v570 = vmul.f32 %v387, %v543
  %v571 = vmul.f32 %v392, %v543
  %v572 = vmul.f32 %v397, %v543
  %v573 = vmul.f32 %v402, %v543
  %v574 = vmul.f32 %v407, %v543
  %v575 = vmul.f32 %v412, %v543
  %v576 = vmul.f32 %v417, %v543
  %v577 = vmul.f32 %v422, %v543
  %v578 = vmul.f32 %v427, %v543
  %v579 = vmul.f32 %v432, %v543
  %v580 = vmul.f32 %v437, %v543
  %v581 = vmul.f32 %v442, %v543
  %v582 = vmul.f32 %v447, %v543
  %v583 = vmul.f32 %v452, %v543
  %v584 = vmul.f32 %v457, %v543
  %v585 = vmul.f32 %v462, %v543
  %v586 = vmul.f32 %v467, %v543
  %v587 = vmul.f32 %v472, %v543
  %v588 = vmul.f32 %v477, %v543
  %v589 = vmul.f32 %v482, %v543
  %v590 = vmul.f32 %v487, %v543
  %v591 = vmul.f32 %v492, %v543
  %v592 = vmul.f32 %v497, %v543
  %v593 = vmul.f32 %v502, %v543
  %v594 = vmul.f32 %v507, %v543
  %v595 = vmul.f32 %v512, %v543
  %v596 = vmul.f32 %v517, %v543
  %v597 = vmul.f32 %v522, %v543
  %v598 = vmul.f32 %v527, %v543
  %v599 = vmul.f32 %v532, %v543
  %v600 = vmul.f32 %v537, %v543
  %602 = vset.pattern.permute.xlu0 0
  %603 = vperm.xlu0 %602, %v83
  %v604 = vpop.permute.xlu0 %603
  %607 = vset.pattern.permute.xlu0 0
  %608 = vperm.xlu0 %607, %v84
  %v609 = vpop.permute.xlu0 %608
  %612 = vset.pattern.permute.xlu0 0
  %613 = vperm.xlu0 %612, %v85
  %v614 = vpop.permute.xlu0 %613
  %617 = vset.pattern.permute.xlu0 0
  %618 = vperm.xlu0 %617, %v86
  %v619 = vpop.permute.xlu0 %618
  %622 = vset.pattern.permute.xlu0 0
  %623 = vperm.xlu0 %622, %v87
  %v624 = vpop.permute.xlu0 %623
  %627 = vset.pattern.permute.xlu0 0
  %628 = vperm.xlu0 %627, %v88
  %v629 = vpop.permute.xlu0 %628
  %632 = vset.pattern.permute.xlu0 0
  %633 = vperm.xlu0 %632, %v89
  %v634 = vpop.permute.xlu0 %633
  %637 = vset.pattern.permute.xlu0 0
  %638 = vperm.xlu0 %637, %v90
  %v639 = vpop.permute.xlu0 %638
  %642 = vset.pattern.permute.xlu0 0
  %643 = vperm.xlu0 %642, %v91
  %v644 = vpop.permute.xlu0 %643
  %647 = vset.pattern.permute.xlu0 0
  %648 = vperm.xlu0 %647, %v92
  %v649 = vpop.permute.xlu0 %648
  %652 = vset.pattern.permute.xlu0 0
  %653 = vperm.xlu0 %652, %v93
  %v654 = vpop.permute.xlu0 %653
  %657 = vset.pattern.permute.xlu0 0
  %658 = vperm.xlu0 %657, %v94
  %v659 = vpop.permute.xlu0 %658
  %662 = vset.pattern.permute.xlu0 0
  %663 = vperm.xlu0 %662, %v95
  %v664 = vpop.permute.xlu0 %663
  %667 = vset.pattern.permute.xlu0 0
  %668 = vperm.xlu0 %667, %v96
  %v669 = vpop.permute.xlu0 %668
  %672 = vset.pattern.permute.xlu0 0
  %673 = vperm.xlu0 %672, %v97
  %v674 = vpop.permute.xlu0 %673
  %677 = vset.pattern.permute.xlu0 0
  %678 = vperm.xlu0 %677, %v98
  %v679 = vpop.permute.xlu0 %678
  %682 = vset.pattern.permute.xlu0 0
  %683 = vperm.xlu0 %682, %v99
  %v684 = vpop.permute.xlu0 %683
  %687 = vset.pattern.permute.xlu0 0
  %688 = vperm.xlu0 %687, %v100
  %v689 = vpop.permute.xlu0 %688
  %692 = vset.pattern.permute.xlu0 0
  %693 = vperm.xlu0 %692, %v101
  %v694 = vpop.permute.xlu0 %693
  %697 = vset.pattern.permute.xlu0 0
  %698 = vperm.xlu0 %697, %v102
  %v699 = vpop.permute.xlu0 %698
  %702 = vset.pattern.permute.xlu0 0
  %703 = vperm.xlu0 %702, %v103
  %v704 = vpop.permute.xlu0 %703
  %707 = vset.pattern.permute.xlu0 0
  %708 = vperm.xlu0 %707, %v104
  %v709 = vpop.permute.xlu0 %708
  %712 = vset.pattern.permute.xlu0 0
  %713 = vperm.xlu0 %712, %v105
  %v714 = vpop.permute.xlu0 %713
  %717 = vset.pattern.permute.xlu0 0
  %718 = vperm.xlu0 %717, %v106
  %v719 = vpop.permute.xlu0 %718
  %722 = vset.pattern.permute.xlu0 0
  %723 = vperm.xlu0 %722, %v107
  %v724 = vpop.permute.xlu0 %723
  %727 = vset.pattern.permute.xlu0 0
  %728 = vperm.xlu0 %727, %v108
  %v729 = vpop.permute.xlu0 %728
  %732 = vset.pattern.permute.xlu0 0
  %733 = vperm.xlu0 %732, %v109
  %v734 = vpop.permute.xlu0 %733
  %737 = vset.pattern.permute.xlu0 0
  %738 = vperm.xlu0 %737, %v110
  %v739 = vpop.permute.xlu0 %738
  %742 = vset.pattern.permute.xlu0 0
  %743 = vperm.xlu0 %742, %v111
  %v744 = vpop.permute.xlu0 %743
  %747 = vset.pattern.permute.xlu0 0
  %748 = vperm.xlu0 %747, %v112
  %v749 = vpop.permute.xlu0 %748
  %752 = vset.pattern.permute.xlu0 0
  %753 = vperm.xlu0 %752, %v113
  %v754 = vpop.permute.xlu0 %753
  %757 = vset.pattern.permute.xlu0 0
  %758 = vperm.xlu0 %757, %v114
  %v759 = vpop.permute.xlu0 %758
  %762 = vset.pattern.permute.xlu0 0
  %763 = vperm.xlu0 %762, %v115
  %v764 = vpop.permute.xlu0 %763
  %767 = vset.pattern.permute.xlu0 0
  %768 = vperm.xlu0 %767, %v116
  %v769 = vpop.permute.xlu0 %768
  %772 = vset.pattern.permute.xlu0 0
  %773 = vperm.xlu0 %772, %v117
  %v774 = vpop.permute.xlu0 %773
  %777 = vset.pattern.permute.xlu0 0
  %778 = vperm.xlu0 %777, %v118
  %v779 = vpop.permute.xlu0 %778
  %782 = vset.pattern.permute.xlu0 0
  %783 = vperm.xlu0 %782, %v119
  %v784 = vpop.permute.xlu0 %783
  %787 = vset.pattern.permute.xlu0 0
  %788 = vperm.xlu0 %787, %v120
  %v789 = vpop.permute.xlu0 %788
  %792 = vset.pattern.permute.xlu0 0
  %793 = vperm.xlu0 %792, %v121
  %v794 = vpop.permute.xlu0 %793
  %797 = vset.pattern.permute.xlu0 0
  %798 = vperm.xlu0 %797, %v122
  %v799 = vpop.permute.xlu0 %798
  %802 = vset.pattern.permute.xlu0 0
  %803 = vperm.xlu0 %802, %v123
  %v804 = vpop.permute.xlu0 %803
  %807 = vset.pattern.permute.xlu0 0
  %808 = vperm.xlu0 %807, %v124
  %v809 = vpop.permute.xlu0 %808
  %812 = vset.pattern.permute.xlu0 0
  %813 = vperm.xlu0 %812, %v125
  %v814 = vpop.permute.xlu0 %813
  %817 = vset.pattern.permute.xlu0 0
  %818 = vperm.xlu0 %817, %v126
  %v819 = vpop.permute.xlu0 %818
  %822 = vset.pattern.permute.xlu0 0
  %823 = vperm.xlu0 %822, %v127
  %v824 = vpop.permute.xlu0 %823
  %827 = vset.pattern.permute.xlu0 0
  %828 = vperm.xlu0 %827, %v128
  %v829 = vpop.permute.xlu0 %828
  %832 = vset.pattern.permute.xlu0 0
  %833 = vperm.xlu0 %832, %v129
  %v834 = vpop.permute.xlu0 %833
  %837 = vset.pattern.permute.xlu0 0
  %838 = vperm.xlu0 %837, %v130
  %v839 = vpop.permute.xlu0 %838
  %842 = vset.pattern.permute.xlu0 0
  %843 = vperm.xlu0 %842, %v131
  %v844 = vpop.permute.xlu0 %843
  %847 = vset.pattern.permute.xlu0 0
  %848 = vperm.xlu0 %847, %v132
  %v849 = vpop.permute.xlu0 %848
  %852 = vset.pattern.permute.xlu0 0
  %853 = vperm.xlu0 %852, %v133
  %v854 = vpop.permute.xlu0 %853
  %857 = vset.pattern.permute.xlu0 0
  %858 = vperm.xlu0 %857, %v134
  %v859 = vpop.permute.xlu0 %858
  %862 = vset.pattern.permute.xlu0 0
  %863 = vperm.xlu0 %862, %v135
  %v864 = vpop.permute.xlu0 %863
  %867 = vset.pattern.permute.xlu0 0
  %868 = vperm.xlu0 %867, %v136
  %v869 = vpop.permute.xlu0 %868
  %872 = vset.pattern.permute.xlu0 0
  %873 = vperm.xlu0 %872, %v137
  %v874 = vpop.permute.xlu0 %873
  %877 = vset.pattern.permute.xlu0 0
  %878 = vperm.xlu0 %877, %v138
  %v879 = vpop.permute.xlu0 %878
  %v882 = vlaneseq
  %v883 = vshrl.u32 %v882, 7
  %v884 = vsub.s32 0, %v883
  %v885 = vrot.slane %v255, %v884
  %v887 = vmul.f32 %v604, %v885
  %v888 = vmul.f32 %v609, %v885
  %v889 = vmul.f32 %v614, %v885
  %v890 = vmul.f32 %v619, %v885
  %v891 = vmul.f32 %v624, %v885
  %v892 = vmul.f32 %v629, %v885
  %v893 = vmul.f32 %v634, %v885
  %v894 = vmul.f32 %v639, %v885
  %v895 = vmul.f32 %v644, %v885
  %v896 = vmul.f32 %v649, %v885
  %v897 = vmul.f32 %v654, %v885
  %v898 = vmul.f32 %v659, %v885
  %v899 = vmul.f32 %v664, %v885
  %v900 = vmul.f32 %v669, %v885
  %v901 = vmul.f32 %v674, %v885
  %v902 = vmul.f32 %v679, %v885
  %v903 = vmul.f32 %v684, %v885
  %v904 = vmul.f32 %v689, %v885
  %v905 = vmul.f32 %v694, %v885
  %v906 = vmul.f32 %v699, %v885
  %v907 = vmul.f32 %v704, %v885
  %v908 = vmul.f32 %v709, %v885
  %v909 = vmul.f32 %v714, %v885
  %v910 = vmul.f32 %v719, %v885
  %v911 = vmul.f32 %v724, %v885
  %v912 = vmul.f32 %v729, %v885
  %v913 = vmul.f32 %v734, %v885
  %v914 = vmul.f32 %v739, %v885
  %v915 = vmul.f32 %v744, %v885
  %v916 = vmul.f32 %v749, %v885
  %v917 = vmul.f32 %v754, %v885
  %v918 = vmul.f32 %v759, %v885
  %v919 = vmul.f32 %v764, %v885
  %v920 = vmul.f32 %v769, %v885
  %v921 = vmul.f32 %v774, %v885
  %v922 = vmul.f32 %v779, %v885
  %v923 = vmul.f32 %v784, %v885
  %v924 = vmul.f32 %v789, %v885
  %v925 = vmul.f32 %v794, %v885
  %v926 = vmul.f32 %v799, %v885
  %v927 = vmul.f32 %v804, %v885
  %v928 = vmul.f32 %v809, %v885
  %v929 = vmul.f32 %v814, %v885
  %v930 = vmul.f32 %v819, %v885
  %v931 = vmul.f32 %v824, %v885
  %v932 = vmul.f32 %v829, %v885
  %v933 = vmul.f32 %v834, %v885
  %v934 = vmul.f32 %v839, %v885
  %v935 = vmul.f32 %v844, %v885
  %v936 = vmul.f32 %v849, %v885
  %v937 = vmul.f32 %v854, %v885
  %v938 = vmul.f32 %v859, %v885
  %v939 = vmul.f32 %v864, %v885
  %v940 = vmul.f32 %v869, %v885
  %v941 = vmul.f32 %v874, %v885
  %v942 = vmul.f32 %v879, %v885
  %v943 = vadd.f32 %v545, %v887
  %v944 = vadd.f32 %v546, %v888
  %v945 = vadd.f32 %v547, %v889
  %v946 = vadd.f32 %v548, %v890
  %v947 = vadd.f32 %v549, %v891
  %v948 = vadd.f32 %v550, %v892
  %v949 = vadd.f32 %v551, %v893
  %v950 = vadd.f32 %v552, %v894
  %v951 = vadd.f32 %v553, %v895
  %v952 = vadd.f32 %v554, %v896
  %v953 = vadd.f32 %v555, %v897
  %v954 = vadd.f32 %v556, %v898
  %v955 = vadd.f32 %v557, %v899
  %v956 = vadd.f32 %v558, %v900
  %v957 = vadd.f32 %v559, %v901
  %v958 = vadd.f32 %v560, %v902
  %v959 = vadd.f32 %v561, %v903
  %v960 = vadd.f32 %v562, %v904
  %v961 = vadd.f32 %v563, %v905
  %v962 = vadd.f32 %v564, %v906
  %v963 = vadd.f32 %v565, %v907
  %v964 = vadd.f32 %v566, %v908
  %v965 = vadd.f32 %v567, %v909
  %v966 = vadd.f32 %v568, %v910
  %v967 = vadd.f32 %v569, %v911
  %v968 = vadd.f32 %v570, %v912
  %v969 = vadd.f32 %v571, %v913
  %v970 = vadd.f32 %v572, %v914
  %v971 = vadd.f32 %v573, %v915
  %v972 = vadd.f32 %v574, %v916
  %v973 = vadd.f32 %v575, %v917
  %v974 = vadd.f32 %v576, %v918
  %v975 = vadd.f32 %v577, %v919
  %v976 = vadd.f32 %v578, %v920
  %v977 = vadd.f32 %v579, %v921
  %v978 = vadd.f32 %v580, %v922
  %v979 = vadd.f32 %v581, %v923
  %v980 = vadd.f32 %v582, %v924
  %v981 = vadd.f32 %v583, %v925
  %v982 = vadd.f32 %v584, %v926
  %v983 = vadd.f32 %v585, %v927
  %v984 = vadd.f32 %v586, %v928
  %v985 = vadd.f32 %v587, %v929
  %v986 = vadd.f32 %v588, %v930
  %v987 = vadd.f32 %v589, %v931
  %v988 = vadd.f32 %v590, %v932
  %v989 = vadd.f32 %v591, %v933
  %v990 = vadd.f32 %v592, %v934
  %v991 = vadd.f32 %v593, %v935
  %v992 = vadd.f32 %v594, %v936
  %v993 = vadd.f32 %v595, %v937
  %v994 = vadd.f32 %v596, %v938
  %v995 = vadd.f32 %v597, %v939
  %v996 = vadd.f32 %v598, %v940
  %v997 = vadd.f32 %v599, %v941
  %v998 = vadd.f32 %v600, %v942
  %1000 = vset.pattern.permute.xlu0 0
  %1001 = vperm.xlu0 %1000, %v140
  %v1002 = vpop.permute.xlu0 %1001
  %1005 = vset.pattern.permute.xlu0 0
  %1006 = vperm.xlu0 %1005, %v141
  %v1007 = vpop.permute.xlu0 %1006
  %1010 = vset.pattern.permute.xlu0 0
  %1011 = vperm.xlu0 %1010, %v142
  %v1012 = vpop.permute.xlu0 %1011
  %1015 = vset.pattern.permute.xlu0 0
  %1016 = vperm.xlu0 %1015, %v143
  %v1017 = vpop.permute.xlu0 %1016
  %1020 = vset.pattern.permute.xlu0 0
  %1021 = vperm.xlu0 %1020, %v144
  %v1022 = vpop.permute.xlu0 %1021
  %1025 = vset.pattern.permute.xlu0 0
  %1026 = vperm.xlu0 %1025, %v145
  %v1027 = vpop.permute.xlu0 %1026
  %1030 = vset.pattern.permute.xlu0 0
  %1031 = vperm.xlu0 %1030, %v146
  %v1032 = vpop.permute.xlu0 %1031
  %1035 = vset.pattern.permute.xlu0 0
  %1036 = vperm.xlu0 %1035, %v147
  %v1037 = vpop.permute.xlu0 %1036
  %1040 = vset.pattern.permute.xlu0 0
  %1041 = vperm.xlu0 %1040, %v148
  %v1042 = vpop.permute.xlu0 %1041
  %1045 = vset.pattern.permute.xlu0 0
  %1046 = vperm.xlu0 %1045, %v149
  %v1047 = vpop.permute.xlu0 %1046
  %1050 = vset.pattern.permute.xlu0 0
  %1051 = vperm.xlu0 %1050, %v150
  %v1052 = vpop.permute.xlu0 %1051
  %1055 = vset.pattern.permute.xlu0 0
  %1056 = vperm.xlu0 %1055, %v151
  %v1057 = vpop.permute.xlu0 %1056
  %1060 = vset.pattern.permute.xlu0 0
  %1061 = vperm.xlu0 %1060, %v152
  %v1062 = vpop.permute.xlu0 %1061
  %1065 = vset.pattern.permute.xlu0 0
  %1066 = vperm.xlu0 %1065, %v153
  %v1067 = vpop.permute.xlu0 %1066
  %1070 = vset.pattern.permute.xlu0 0
  %1071 = vperm.xlu0 %1070, %v154
  %v1072 = vpop.permute.xlu0 %1071
  %1075 = vset.pattern.permute.xlu0 0
  %1076 = vperm.xlu0 %1075, %v155
  %v1077 = vpop.permute.xlu0 %1076
  %1080 = vset.pattern.permute.xlu0 0
  %1081 = vperm.xlu0 %1080, %v156
  %v1082 = vpop.permute.xlu0 %1081
  %1085 = vset.pattern.permute.xlu0 0
  %1086 = vperm.xlu0 %1085, %v157
  %v1087 = vpop.permute.xlu0 %1086
  %1090 = vset.pattern.permute.xlu0 0
  %1091 = vperm.xlu0 %1090, %v158
  %v1092 = vpop.permute.xlu0 %1091
  %1095 = vset.pattern.permute.xlu0 0
  %1096 = vperm.xlu0 %1095, %v159
  %v1097 = vpop.permute.xlu0 %1096
  %1100 = vset.pattern.permute.xlu0 0
  %1101 = vperm.xlu0 %1100, %v160
  %v1102 = vpop.permute.xlu0 %1101
  %1105 = vset.pattern.permute.xlu0 0
  %1106 = vperm.xlu0 %1105, %v161
  %v1107 = vpop.permute.xlu0 %1106
  %1110 = vset.pattern.permute.xlu0 0
  %1111 = vperm.xlu0 %1110, %v162
  %v1112 = vpop.permute.xlu0 %1111
  %1115 = vset.pattern.permute.xlu0 0
  %1116 = vperm.xlu0 %1115, %v163
  %v1117 = vpop.permute.xlu0 %1116
  %1120 = vset.pattern.permute.xlu0 0
  %1121 = vperm.xlu0 %1120, %v164
  %v1122 = vpop.permute.xlu0 %1121
  %1125 = vset.pattern.permute.xlu0 0
  %1126 = vperm.xlu0 %1125, %v165
  %v1127 = vpop.permute.xlu0 %1126
  %1130 = vset.pattern.permute.xlu0 0
  %1131 = vperm.xlu0 %1130, %v166
  %v1132 = vpop.permute.xlu0 %1131
  %1135 = vset.pattern.permute.xlu0 0
  %1136 = vperm.xlu0 %1135, %v167
  %v1137 = vpop.permute.xlu0 %1136
  %1140 = vset.pattern.permute.xlu0 0
  %1141 = vperm.xlu0 %1140, %v168
  %v1142 = vpop.permute.xlu0 %1141
  %1145 = vset.pattern.permute.xlu0 0
  %1146 = vperm.xlu0 %1145, %v169
  %v1147 = vpop.permute.xlu0 %1146
  %1150 = vset.pattern.permute.xlu0 0
  %1151 = vperm.xlu0 %1150, %v170
  %v1152 = vpop.permute.xlu0 %1151
  %1155 = vset.pattern.permute.xlu0 0
  %1156 = vperm.xlu0 %1155, %v171
  %v1157 = vpop.permute.xlu0 %1156
  %1160 = vset.pattern.permute.xlu0 0
  %1161 = vperm.xlu0 %1160, %v172
  %v1162 = vpop.permute.xlu0 %1161
  %1165 = vset.pattern.permute.xlu0 0
  %1166 = vperm.xlu0 %1165, %v173
  %v1167 = vpop.permute.xlu0 %1166
  %1170 = vset.pattern.permute.xlu0 0
  %1171 = vperm.xlu0 %1170, %v174
  %v1172 = vpop.permute.xlu0 %1171
  %1175 = vset.pattern.permute.xlu0 0
  %1176 = vperm.xlu0 %1175, %v175
  %v1177 = vpop.permute.xlu0 %1176
  %1180 = vset.pattern.permute.xlu0 0
  %1181 = vperm.xlu0 %1180, %v176
  %v1182 = vpop.permute.xlu0 %1181
  %1185 = vset.pattern.permute.xlu0 0
  %1186 = vperm.xlu0 %1185, %v177
  %v1187 = vpop.permute.xlu0 %1186
  %1190 = vset.pattern.permute.xlu0 0
  %1191 = vperm.xlu0 %1190, %v178
  %v1192 = vpop.permute.xlu0 %1191
  %1195 = vset.pattern.permute.xlu0 0
  %1196 = vperm.xlu0 %1195, %v179
  %v1197 = vpop.permute.xlu0 %1196
  %1200 = vset.pattern.permute.xlu0 0
  %1201 = vperm.xlu0 %1200, %v180
  %v1202 = vpop.permute.xlu0 %1201
  %1205 = vset.pattern.permute.xlu0 0
  %1206 = vperm.xlu0 %1205, %v181
  %v1207 = vpop.permute.xlu0 %1206
  %1210 = vset.pattern.permute.xlu0 0
  %1211 = vperm.xlu0 %1210, %v182
  %v1212 = vpop.permute.xlu0 %1211
  %1215 = vset.pattern.permute.xlu0 0
  %1216 = vperm.xlu0 %1215, %v183
  %v1217 = vpop.permute.xlu0 %1216
  %1220 = vset.pattern.permute.xlu0 0
  %1221 = vperm.xlu0 %1220, %v184
  %v1222 = vpop.permute.xlu0 %1221
  %1225 = vset.pattern.permute.xlu0 0
  %1226 = vperm.xlu0 %1225, %v185
  %v1227 = vpop.permute.xlu0 %1226
  %1230 = vset.pattern.permute.xlu0 0
  %1231 = vperm.xlu0 %1230, %v186
  %v1232 = vpop.permute.xlu0 %1231
  %1235 = vset.pattern.permute.xlu0 0
  %1236 = vperm.xlu0 %1235, %v187
  %v1237 = vpop.permute.xlu0 %1236
  %1240 = vset.pattern.permute.xlu0 0
  %1241 = vperm.xlu0 %1240, %v188
  %v1242 = vpop.permute.xlu0 %1241
  %1245 = vset.pattern.permute.xlu0 0
  %1246 = vperm.xlu0 %1245, %v189
  %v1247 = vpop.permute.xlu0 %1246
  %1250 = vset.pattern.permute.xlu0 0
  %1251 = vperm.xlu0 %1250, %v190
  %v1252 = vpop.permute.xlu0 %1251
  %1255 = vset.pattern.permute.xlu0 0
  %1256 = vperm.xlu0 %1255, %v191
  %v1257 = vpop.permute.xlu0 %1256
  %1260 = vset.pattern.permute.xlu0 0
  %1261 = vperm.xlu0 %1260, %v192
  %v1262 = vpop.permute.xlu0 %1261
  %1265 = vset.pattern.permute.xlu0 0
  %1266 = vperm.xlu0 %1265, %v193
  %v1267 = vpop.permute.xlu0 %1266
  %1270 = vset.pattern.permute.xlu0 0
  %1271 = vperm.xlu0 %1270, %v194
  %v1272 = vpop.permute.xlu0 %1271
  %1275 = vset.pattern.permute.xlu0 0
  %1276 = vperm.xlu0 %1275, %v195
  %v1277 = vpop.permute.xlu0 %1276
  %v1280 = vlaneseq
  %v1281 = vshrl.u32 %v1280, 7
  %v1282 = vsub.s32 0, %v1281
  %v1283 = vrot.slane %v257, %v1282
  %v1285 = vmul.f32 %v1002, %v1283
  %v1286 = vmul.f32 %v1007, %v1283
  %v1287 = vmul.f32 %v1012, %v1283
  %v1288 = vmul.f32 %v1017, %v1283
  %v1289 = vmul.f32 %v1022, %v1283
  %v1290 = vmul.f32 %v1027, %v1283
  %v1291 = vmul.f32 %v1032, %v1283
  %v1292 = vmul.f32 %v1037, %v1283
  %v1293 = vmul.f32 %v1042, %v1283
  %v1294 = vmul.f32 %v1047, %v1283
  %v1295 = vmul.f32 %v1052, %v1283
  %v1296 = vmul.f32 %v1057, %v1283
  %v1297 = vmul.f32 %v1062, %v1283
  %v1298 = vmul.f32 %v1067, %v1283
  %v1299 = vmul.f32 %v1072, %v1283
  %v1300 = vmul.f32 %v1077, %v1283
  %v1301 = vmul.f32 %v1082, %v1283
  %v1302 = vmul.f32 %v1087, %v1283
  %v1303 = vmul.f32 %v1092, %v1283
  %v1304 = vmul.f32 %v1097, %v1283
  %v1305 = vmul.f32 %v1102, %v1283
  %v1306 = vmul.f32 %v1107, %v1283
  %v1307 = vmul.f32 %v1112, %v1283
  %v1308 = vmul.f32 %v1117, %v1283
  %v1309 = vmul.f32 %v1122, %v1283
  %v1310 = vmul.f32 %v1127, %v1283
  %v1311 = vmul.f32 %v1132, %v1283
  %v1312 = vmul.f32 %v1137, %v1283
  %v1313 = vmul.f32 %v1142, %v1283
  %v1314 = vmul.f32 %v1147, %v1283
  %v1315 = vmul.f32 %v1152, %v1283
  %v1316 = vmul.f32 %v1157, %v1283
  %v1317 = vmul.f32 %v1162, %v1283
  %v1318 = vmul.f32 %v1167, %v1283
  %v1319 = vmul.f32 %v1172, %v1283
  %v1320 = vmul.f32 %v1177, %v1283
  %v1321 = vmul.f32 %v1182, %v1283
  %v1322 = vmul.f32 %v1187, %v1283
  %v1323 = vmul.f32 %v1192, %v1283
  %v1324 = vmul.f32 %v1197, %v1283
  %v1325 = vmul.f32 %v1202, %v1283
  %v1326 = vmul.f32 %v1207, %v1283
  %v1327 = vmul.f32 %v1212, %v1283
  %v1328 = vmul.f32 %v1217, %v1283
  %v1329 = vmul.f32 %v1222, %v1283
  %v1330 = vmul.f32 %v1227, %v1283
  %v1331 = vmul.f32 %v1232, %v1283
  %v1332 = vmul.f32 %v1237, %v1283
  %v1333 = vmul.f32 %v1242, %v1283
  %v1334 = vmul.f32 %v1247, %v1283
  %v1335 = vmul.f32 %v1252, %v1283
  %v1336 = vmul.f32 %v1257, %v1283
  %v1337 = vmul.f32 %v1262, %v1283
  %v1338 = vmul.f32 %v1267, %v1283
  %v1339 = vmul.f32 %v1272, %v1283
  %v1340 = vmul.f32 %v1277, %v1283
  %v1341 = vadd.f32 %v943, %v1285
  %v1342 = vadd.f32 %v944, %v1286
  %v1343 = vadd.f32 %v945, %v1287
  %v1344 = vadd.f32 %v946, %v1288
  %v1345 = vadd.f32 %v947, %v1289
  %v1346 = vadd.f32 %v948, %v1290
  %v1347 = vadd.f32 %v949, %v1291
  %v1348 = vadd.f32 %v950, %v1292
  %v1349 = vadd.f32 %v951, %v1293
  %v1350 = vadd.f32 %v952, %v1294
  %v1351 = vadd.f32 %v953, %v1295
  %v1352 = vadd.f32 %v954, %v1296
  %v1353 = vadd.f32 %v955, %v1297
  %v1354 = vadd.f32 %v956, %v1298
  %v1355 = vadd.f32 %v957, %v1299
  %v1356 = vadd.f32 %v958, %v1300
  %v1357 = vadd.f32 %v959, %v1301
  %v1358 = vadd.f32 %v960, %v1302
  %v1359 = vadd.f32 %v961, %v1303
  %v1360 = vadd.f32 %v962, %v1304
  %v1361 = vadd.f32 %v963, %v1305
  %v1362 = vadd.f32 %v964, %v1306
  %v1363 = vadd.f32 %v965, %v1307
  %v1364 = vadd.f32 %v966, %v1308
  %v1365 = vadd.f32 %v967, %v1309
  %v1366 = vadd.f32 %v968, %v1310
  %v1367 = vadd.f32 %v969, %v1311
  %v1368 = vadd.f32 %v970, %v1312
  %v1369 = vadd.f32 %v971, %v1313
  %v1370 = vadd.f32 %v972, %v1314
  %v1371 = vadd.f32 %v973, %v1315
  %v1372 = vadd.f32 %v974, %v1316
  %v1373 = vadd.f32 %v975, %v1317
  %v1374 = vadd.f32 %v976, %v1318
  %v1375 = vadd.f32 %v977, %v1319
  %v1376 = vadd.f32 %v978, %v1320
  %v1377 = vadd.f32 %v979, %v1321
  %v1378 = vadd.f32 %v980, %v1322
  %v1379 = vadd.f32 %v981, %v1323
  %v1380 = vadd.f32 %v982, %v1324
  %v1381 = vadd.f32 %v983, %v1325
  %v1382 = vadd.f32 %v984, %v1326
  %v1383 = vadd.f32 %v985, %v1327
  %v1384 = vadd.f32 %v986, %v1328
  %v1385 = vadd.f32 %v987, %v1329
  %v1386 = vadd.f32 %v988, %v1330
  %v1387 = vadd.f32 %v989, %v1331
  %v1388 = vadd.f32 %v990, %v1332
  %v1389 = vadd.f32 %v991, %v1333
  %v1390 = vadd.f32 %v992, %v1334
  %v1391 = vadd.f32 %v993, %v1335
  %v1392 = vadd.f32 %v994, %v1336
  %v1393 = vadd.f32 %v995, %v1337
  %v1394 = vadd.f32 %v996, %v1338
  %v1395 = vadd.f32 %v997, %v1339
  %v1396 = vadd.f32 %v998, %v1340
  %v1398 = vlaneseq
  %v1399 = vshrl.u32 %v1398, 7
  %v1400 = vsub.s32 0, %v1399
  %v1401 = vrot.slane %v258, %v1400
  %v1403 = vadd.f32 %v1341, %v1401
  %v1404 = vadd.f32 %v1342, %v1401
  %v1405 = vadd.f32 %v1343, %v1401
  %v1406 = vadd.f32 %v1344, %v1401
  %v1407 = vadd.f32 %v1345, %v1401
  %v1408 = vadd.f32 %v1346, %v1401
  %v1409 = vadd.f32 %v1347, %v1401
  %v1410 = vadd.f32 %v1348, %v1401
  %v1411 = vadd.f32 %v1349, %v1401
  %v1412 = vadd.f32 %v1350, %v1401
  %v1413 = vadd.f32 %v1351, %v1401
  %v1414 = vadd.f32 %v1352, %v1401
  %v1415 = vadd.f32 %v1353, %v1401
  %v1416 = vadd.f32 %v1354, %v1401
  %v1417 = vadd.f32 %v1355, %v1401
  %v1418 = vadd.f32 %v1356, %v1401
  %v1419 = vadd.f32 %v1357, %v1401
  %v1420 = vadd.f32 %v1358, %v1401
  %v1421 = vadd.f32 %v1359, %v1401
  %v1422 = vadd.f32 %v1360, %v1401
  %v1423 = vadd.f32 %v1361, %v1401
  %v1424 = vadd.f32 %v1362, %v1401
  %v1425 = vadd.f32 %v1363, %v1401
  %v1426 = vadd.f32 %v1364, %v1401
  %v1427 = vadd.f32 %v1365, %v1401
  %v1428 = vadd.f32 %v1366, %v1401
  %v1429 = vadd.f32 %v1367, %v1401
  %v1430 = vadd.f32 %v1368, %v1401
  %v1431 = vadd.f32 %v1369, %v1401
  %v1432 = vadd.f32 %v1370, %v1401
  %v1433 = vadd.f32 %v1371, %v1401
  %v1434 = vadd.f32 %v1372, %v1401
  %v1435 = vadd.f32 %v1373, %v1401
  %v1436 = vadd.f32 %v1374, %v1401
  %v1437 = vadd.f32 %v1375, %v1401
  %v1438 = vadd.f32 %v1376, %v1401
  %v1439 = vadd.f32 %v1377, %v1401
  %v1440 = vadd.f32 %v1378, %v1401
  %v1441 = vadd.f32 %v1379, %v1401
  %v1442 = vadd.f32 %v1380, %v1401
  %v1443 = vadd.f32 %v1381, %v1401
  %v1444 = vadd.f32 %v1382, %v1401
  %v1445 = vadd.f32 %v1383, %v1401
  %v1446 = vadd.f32 %v1384, %v1401
  %v1447 = vadd.f32 %v1385, %v1401
  %v1448 = vadd.f32 %v1386, %v1401
  %v1449 = vadd.f32 %v1387, %v1401
  %v1450 = vadd.f32 %v1388, %v1401
  %v1451 = vadd.f32 %v1389, %v1401
  %v1452 = vadd.f32 %v1390, %v1401
  %v1453 = vadd.f32 %v1391, %v1401
  %v1454 = vadd.f32 %v1392, %v1401
  %v1455 = vadd.f32 %v1393, %v1401
  %v1456 = vadd.f32 %v1394, %v1401
  %v1457 = vadd.f32 %v1395, %v1401
  %v1458 = vadd.f32 %v1396, %v1401
  %v1459 = vmul.f32 %v604, %v543
  %v1460 = vmul.f32 %v609, %v543
  %v1461 = vmul.f32 %v614, %v543
  %v1462 = vmul.f32 %v619, %v543
  %v1463 = vmul.f32 %v624, %v543
  %v1464 = vmul.f32 %v629, %v543
  %v1465 = vmul.f32 %v634, %v543
  %v1466 = vmul.f32 %v639, %v543
  %v1467 = vmul.f32 %v644, %v543
  %v1468 = vmul.f32 %v649, %v543
  %v1469 = vmul.f32 %v654, %v543
  %v1470 = vmul.f32 %v659, %v543
  %v1471 = vmul.f32 %v664, %v543
  %v1472 = vmul.f32 %v669, %v543
  %v1473 = vmul.f32 %v674, %v543
  %v1474 = vmul.f32 %v679, %v543
  %v1475 = vmul.f32 %v684, %v543
  %v1476 = vmul.f32 %v689, %v543
  %v1477 = vmul.f32 %v694, %v543
  %v1478 = vmul.f32 %v699, %v543
  %v1479 = vmul.f32 %v704, %v543
  %v1480 = vmul.f32 %v709, %v543
  %v1481 = vmul.f32 %v714, %v543
  %v1482 = vmul.f32 %v719, %v543
  %v1483 = vmul.f32 %v724, %v543
  %v1484 = vmul.f32 %v729, %v543
  %v1485 = vmul.f32 %v734, %v543
  %v1486 = vmul.f32 %v739, %v543
  %v1487 = vmul.f32 %v744, %v543
  %v1488 = vmul.f32 %v749, %v543
  %v1489 = vmul.f32 %v754, %v543
  %v1490 = vmul.f32 %v759, %v543
  %v1491 = vmul.f32 %v764, %v543
  %v1492 = vmul.f32 %v769, %v543
  %v1493 = vmul.f32 %v774, %v543
  %v1494 = vmul.f32 %v779, %v543
  %v1495 = vmul.f32 %v784, %v543
  %v1496 = vmul.f32 %v789, %v543
  %v1497 = vmul.f32 %v794, %v543
  %v1498 = vmul.f32 %v799, %v543
  %v1499 = vmul.f32 %v804, %v543
  %v1500 = vmul.f32 %v809, %v543
  %v1501 = vmul.f32 %v814, %v543
  %v1502 = vmul.f32 %v819, %v543
  %v1503 = vmul.f32 %v824, %v543
  %v1504 = vmul.f32 %v829, %v543
  %v1505 = vmul.f32 %v834, %v543
  %v1506 = vmul.f32 %v839, %v543
  %v1507 = vmul.f32 %v844, %v543
  %v1508 = vmul.f32 %v849, %v543
  %v1509 = vmul.f32 %v854, %v543
  %v1510 = vmul.f32 %v859, %v543
  %v1511 = vmul.f32 %v864, %v543
  %v1512 = vmul.f32 %v869, %v543
  %v1513 = vmul.f32 %v874, %v543
  %v1514 = vmul.f32 %v879, %v543
  %v1515 = vmul.f32 %v1002, %v885
  %v1516 = vmul.f32 %v1007, %v885
  %v1517 = vmul.f32 %v1012, %v885
  %v1518 = vmul.f32 %v1017, %v885
  %v1519 = vmul.f32 %v1022, %v885
  %v1520 = vmul.f32 %v1027, %v885
  %v1521 = vmul.f32 %v1032, %v885
  %v1522 = vmul.f32 %v1037, %v885
  %v1523 = vmul.f32 %v1042, %v885
  %v1524 = vmul.f32 %v1047, %v885
  %v1525 = vmul.f32 %v1052, %v885
  %v1526 = vmul.f32 %v1057, %v885
  %v1527 = vmul.f32 %v1062, %v885
  %v1528 = vmul.f32 %v1067, %v885
  %v1529 = vmul.f32 %v1072, %v885
  %v1530 = vmul.f32 %v1077, %v885
  %v1531 = vmul.f32 %v1082, %v885
  %v1532 = vmul.f32 %v1087, %v885
  %v1533 = vmul.f32 %v1092, %v885
  %v1534 = vmul.f32 %v1097, %v885
  %v1535 = vmul.f32 %v1102, %v885
  %v1536 = vmul.f32 %v1107, %v885
  %v1537 = vmul.f32 %v1112, %v885
  %v1538 = vmul.f32 %v1117, %v885
  %v1539 = vmul.f32 %v1122, %v885
  %v1540 = vmul.f32 %v1127, %v885
  %v1541 = vmul.f32 %v1132, %v885
  %v1542 = vmul.f32 %v1137, %v885
  %v1543 = vmul.f32 %v1142, %v885
  %v1544 = vmul.f32 %v1147, %v885
  %v1545 = vmul.f32 %v1152, %v885
  %v1546 = vmul.f32 %v1157, %v885
  %v1547 = vmul.f32 %v1162, %v885
  %v1548 = vmul.f32 %v1167, %v885
  %v1549 = vmul.f32 %v1172, %v885
  %v1550 = vmul.f32 %v1177, %v885
  %v1551 = vmul.f32 %v1182, %v885
  %v1552 = vmul.f32 %v1187, %v885
  %v1553 = vmul.f32 %v1192, %v885
  %v1554 = vmul.f32 %v1197, %v885
  %v1555 = vmul.f32 %v1202, %v885
  %v1556 = vmul.f32 %v1207, %v885
  %v1557 = vmul.f32 %v1212, %v885
  %v1558 = vmul.f32 %v1217, %v885
  %v1559 = vmul.f32 %v1222, %v885
  %v1560 = vmul.f32 %v1227, %v885
  %v1561 = vmul.f32 %v1232, %v885
  %v1562 = vmul.f32 %v1237, %v885
  %v1563 = vmul.f32 %v1242, %v885
  %v1564 = vmul.f32 %v1247, %v885
  %v1565 = vmul.f32 %v1252, %v885
  %v1566 = vmul.f32 %v1257, %v885
  %v1567 = vmul.f32 %v1262, %v885
  %v1568 = vmul.f32 %v1267, %v885
  %v1569 = vmul.f32 %v1272, %v885
  %v1570 = vmul.f32 %v1277, %v885
  %v1571 = vadd.f32 %v1459, %v1515
  %v1572 = vadd.f32 %v1460, %v1516
  %v1573 = vadd.f32 %v1461, %v1517
  %v1574 = vadd.f32 %v1462, %v1518
  %v1575 = vadd.f32 %v1463, %v1519
  %v1576 = vadd.f32 %v1464, %v1520
  %v1577 = vadd.f32 %v1465, %v1521
  %v1578 = vadd.f32 %v1466, %v1522
  %v1579 = vadd.f32 %v1467, %v1523
  %v1580 = vadd.f32 %v1468, %v1524
  %v1581 = vadd.f32 %v1469, %v1525
  %v1582 = vadd.f32 %v1470, %v1526
  %v1583 = vadd.f32 %v1471, %v1527
  %v1584 = vadd.f32 %v1472, %v1528
  %v1585 = vadd.f32 %v1473, %v1529
  %v1586 = vadd.f32 %v1474, %v1530
  %v1587 = vadd.f32 %v1475, %v1531
  %v1588 = vadd.f32 %v1476, %v1532
  %v1589 = vadd.f32 %v1477, %v1533
  %v1590 = vadd.f32 %v1478, %v1534
  %v1591 = vadd.f32 %v1479, %v1535
  %v1592 = vadd.f32 %v1480, %v1536
  %v1593 = vadd.f32 %v1481, %v1537
  %v1594 = vadd.f32 %v1482, %v1538
  %v1595 = vadd.f32 %v1483, %v1539
  %v1596 = vadd.f32 %v1484, %v1540
  %v1597 = vadd.f32 %v1485, %v1541
  %v1598 = vadd.f32 %v1486, %v1542
  %v1599 = vadd.f32 %v1487, %v1543
  %v1600 = vadd.f32 %v1488, %v1544
  %v1601 = vadd.f32 %v1489, %v1545
  %v1602 = vadd.f32 %v1490, %v1546
  %v1603 = vadd.f32 %v1491, %v1547
  %v1604 = vadd.f32 %v1492, %v1548
  %v1605 = vadd.f32 %v1493, %v1549
  %v1606 = vadd.f32 %v1494, %v1550
  %v1607 = vadd.f32 %v1495, %v1551
  %v1608 = vadd.f32 %v1496, %v1552
  %v1609 = vadd.f32 %v1497, %v1553
  %v1610 = vadd.f32 %v1498, %v1554
  %v1611 = vadd.f32 %v1499, %v1555
  %v1612 = vadd.f32 %v1500, %v1556
  %v1613 = vadd.f32 %v1501, %v1557
  %v1614 = vadd.f32 %v1502, %v1558
  %v1615 = vadd.f32 %v1503, %v1559
  %v1616 = vadd.f32 %v1504, %v1560
  %v1617 = vadd.f32 %v1505, %v1561
  %v1618 = vadd.f32 %v1506, %v1562
  %v1619 = vadd.f32 %v1507, %v1563
  %v1620 = vadd.f32 %v1508, %v1564
  %v1621 = vadd.f32 %v1509, %v1565
  %v1622 = vadd.f32 %v1510, %v1566
  %v1623 = vadd.f32 %v1511, %v1567
  %v1624 = vadd.f32 %v1512, %v1568
  %v1625 = vadd.f32 %v1513, %v1569
  %v1626 = vadd.f32 %v1514, %v1570
  %1628 = vset.pattern.permute.xlu0 0
  %1629 = vperm.xlu0 %1628, %v197
  %v1630 = vpop.permute.xlu0 %1629
  %1633 = vset.pattern.permute.xlu0 0
  %1634 = vperm.xlu0 %1633, %v198
  %v1635 = vpop.permute.xlu0 %1634
  %1638 = vset.pattern.permute.xlu0 0
  %1639 = vperm.xlu0 %1638, %v199
  %v1640 = vpop.permute.xlu0 %1639
  %1643 = vset.pattern.permute.xlu0 0
  %1644 = vperm.xlu0 %1643, %v200
  %v1645 = vpop.permute.xlu0 %1644
  %1648 = vset.pattern.permute.xlu0 0
  %1649 = vperm.xlu0 %1648, %v201
  %v1650 = vpop.permute.xlu0 %1649
  %1653 = vset.pattern.permute.xlu0 0
  %1654 = vperm.xlu0 %1653, %v202
  %v1655 = vpop.permute.xlu0 %1654
  %1658 = vset.pattern.permute.xlu0 0
  %1659 = vperm.xlu0 %1658, %v203
  %v1660 = vpop.permute.xlu0 %1659
  %1663 = vset.pattern.permute.xlu0 0
  %1664 = vperm.xlu0 %1663, %v204
  %v1665 = vpop.permute.xlu0 %1664
  %1668 = vset.pattern.permute.xlu0 0
  %1669 = vperm.xlu0 %1668, %v205
  %v1670 = vpop.permute.xlu0 %1669
  %1673 = vset.pattern.permute.xlu0 0
  %1674 = vperm.xlu0 %1673, %v206
  %v1675 = vpop.permute.xlu0 %1674
  %1678 = vset.pattern.permute.xlu0 0
  %1679 = vperm.xlu0 %1678, %v207
  %v1680 = vpop.permute.xlu0 %1679
  %1683 = vset.pattern.permute.xlu0 0
  %1684 = vperm.xlu0 %1683, %v208
  %v1685 = vpop.permute.xlu0 %1684
  %1688 = vset.pattern.permute.xlu0 0
  %1689 = vperm.xlu0 %1688, %v209
  %v1690 = vpop.permute.xlu0 %1689
  %1693 = vset.pattern.permute.xlu0 0
  %1694 = vperm.xlu0 %1693, %v210
  %v1695 = vpop.permute.xlu0 %1694
  %1698 = vset.pattern.permute.xlu0 0
  %1699 = vperm.xlu0 %1698, %v211
  %v1700 = vpop.permute.xlu0 %1699
  %1703 = vset.pattern.permute.xlu0 0
  %1704 = vperm.xlu0 %1703, %v212
  %v1705 = vpop.permute.xlu0 %1704
  %1708 = vset.pattern.permute.xlu0 0
  %1709 = vperm.xlu0 %1708, %v213
  %v1710 = vpop.permute.xlu0 %1709
  %1713 = vset.pattern.permute.xlu0 0
  %1714 = vperm.xlu0 %1713, %v214
  %v1715 = vpop.permute.xlu0 %1714
  %1718 = vset.pattern.permute.xlu0 0
  %1719 = vperm.xlu0 %1718, %v215
  %v1720 = vpop.permute.xlu0 %1719
  %1723 = vset.pattern.permute.xlu0 0
  %1724 = vperm.xlu0 %1723, %v216
  %v1725 = vpop.permute.xlu0 %1724
  %1728 = vset.pattern.permute.xlu0 0
  %1729 = vperm.xlu0 %1728, %v217
  %v1730 = vpop.permute.xlu0 %1729
  %1733 = vset.pattern.permute.xlu0 0
  %1734 = vperm.xlu0 %1733, %v218
  %v1735 = vpop.permute.xlu0 %1734
  %1738 = vset.pattern.permute.xlu0 0
  %1739 = vperm.xlu0 %1738, %v219
  %v1740 = vpop.permute.xlu0 %1739
  %1743 = vset.pattern.permute.xlu0 0
  %1744 = vperm.xlu0 %1743, %v220
  %v1745 = vpop.permute.xlu0 %1744
  %1748 = vset.pattern.permute.xlu0 0
  %1749 = vperm.xlu0 %1748, %v221
  %v1750 = vpop.permute.xlu0 %1749
  %1753 = vset.pattern.permute.xlu0 0
  %1754 = vperm.xlu0 %1753, %v222
  %v1755 = vpop.permute.xlu0 %1754
  %1758 = vset.pattern.permute.xlu0 0
  %1759 = vperm.xlu0 %1758, %v223
  %v1760 = vpop.permute.xlu0 %1759
  %1763 = vset.pattern.permute.xlu0 0
  %1764 = vperm.xlu0 %1763, %v224
  %v1765 = vpop.permute.xlu0 %1764
  %1768 = vset.pattern.permute.xlu0 0
  %1769 = vperm.xlu0 %1768, %v225
  %v1770 = vpop.permute.xlu0 %1769
  %1773 = vset.pattern.permute.xlu0 0
  %1774 = vperm.xlu0 %1773, %v226
  %v1775 = vpop.permute.xlu0 %1774
  %1778 = vset.pattern.permute.xlu0 0
  %1779 = vperm.xlu0 %1778, %v227
  %v1780 = vpop.permute.xlu0 %1779
  %1783 = vset.pattern.permute.xlu0 0
  %1784 = vperm.xlu0 %1783, %v228
  %v1785 = vpop.permute.xlu0 %1784
  %1788 = vset.pattern.permute.xlu0 0
  %1789 = vperm.xlu0 %1788, %v229
  %v1790 = vpop.permute.xlu0 %1789
  %1793 = vset.pattern.permute.xlu0 0
  %1794 = vperm.xlu0 %1793, %v230
  %v1795 = vpop.permute.xlu0 %1794
  %1798 = vset.pattern.permute.xlu0 0
  %1799 = vperm.xlu0 %1798, %v231
  %v1800 = vpop.permute.xlu0 %1799
  %1803 = vset.pattern.permute.xlu0 0
  %1804 = vperm.xlu0 %1803, %v232
  %v1805 = vpop.permute.xlu0 %1804
  %1808 = vset.pattern.permute.xlu0 0
  %1809 = vperm.xlu0 %1808, %v233
  %v1810 = vpop.permute.xlu0 %1809
  %1813 = vset.pattern.permute.xlu0 0
  %1814 = vperm.xlu0 %1813, %v234
  %v1815 = vpop.permute.xlu0 %1814
  %1818 = vset.pattern.permute.xlu0 0
  %1819 = vperm.xlu0 %1818, %v235
  %v1820 = vpop.permute.xlu0 %1819
  %1823 = vset.pattern.permute.xlu0 0
  %1824 = vperm.xlu0 %1823, %v236
  %v1825 = vpop.permute.xlu0 %1824
  %1828 = vset.pattern.permute.xlu0 0
  %1829 = vperm.xlu0 %1828, %v237
  %v1830 = vpop.permute.xlu0 %1829
  %1833 = vset.pattern.permute.xlu0 0
  %1834 = vperm.xlu0 %1833, %v238
  %v1835 = vpop.permute.xlu0 %1834
  %1838 = vset.pattern.permute.xlu0 0
  %1839 = vperm.xlu0 %1838, %v239
  %v1840 = vpop.permute.xlu0 %1839
  %1843 = vset.pattern.permute.xlu0 0
  %1844 = vperm.xlu0 %1843, %v240
  %v1845 = vpop.permute.xlu0 %1844
  %1848 = vset.pattern.permute.xlu0 0
  %1849 = vperm.xlu0 %1848, %v241
  %v1850 = vpop.permute.xlu0 %1849
  %1853 = vset.pattern.permute.xlu0 0
  %1854 = vperm.xlu0 %1853, %v242
  %v1855 = vpop.permute.xlu0 %1854
  %1858 = vset.pattern.permute.xlu0 0
  %1859 = vperm.xlu0 %1858, %v243
  %v1860 = vpop.permute.xlu0 %1859
  %1863 = vset.pattern.permute.xlu0 0
  %1864 = vperm.xlu0 %1863, %v244
  %v1865 = vpop.permute.xlu0 %1864
  %1868 = vset.pattern.permute.xlu0 0
  %1869 = vperm.xlu0 %1868, %v245
  %v1870 = vpop.permute.xlu0 %1869
  %1873 = vset.pattern.permute.xlu0 0
  %1874 = vperm.xlu0 %1873, %v246
  %v1875 = vpop.permute.xlu0 %1874
  %1878 = vset.pattern.permute.xlu0 0
  %1879 = vperm.xlu0 %1878, %v247
  %v1880 = vpop.permute.xlu0 %1879
  %1883 = vset.pattern.permute.xlu0 0
  %1884 = vperm.xlu0 %1883, %v248
  %v1885 = vpop.permute.xlu0 %1884
  %1888 = vset.pattern.permute.xlu0 0
  %1889 = vperm.xlu0 %1888, %v249
  %v1890 = vpop.permute.xlu0 %1889
  %1893 = vset.pattern.permute.xlu0 0
  %1894 = vperm.xlu0 %1893, %v250
  %v1895 = vpop.permute.xlu0 %1894
  %1898 = vset.pattern.permute.xlu0 0
  %1899 = vperm.xlu0 %1898, %v251
  %v1900 = vpop.permute.xlu0 %1899
  %1903 = vset.pattern.permute.xlu0 0
  %1904 = vperm.xlu0 %1903, %v252
  %v1905 = vpop.permute.xlu0 %1904
  %v1907 = vmul.f32 %v1630, %v1283
  %v1908 = vmul.f32 %v1635, %v1283
  %v1909 = vmul.f32 %v1640, %v1283
  %v1910 = vmul.f32 %v1645, %v1283
  %v1911 = vmul.f32 %v1650, %v1283
  %v1912 = vmul.f32 %v1655, %v1283
  %v1913 = vmul.f32 %v1660, %v1283
  %v1914 = vmul.f32 %v1665, %v1283
  %v1915 = vmul.f32 %v1670, %v1283
  %v1916 = vmul.f32 %v1675, %v1283
  %v1917 = vmul.f32 %v1680, %v1283
  %v1918 = vmul.f32 %v1685, %v1283
  %v1919 = vmul.f32 %v1690, %v1283
  %v1920 = vmul.f32 %v1695, %v1283
  %v1921 = vmul.f32 %v1700, %v1283
  %v1922 = vmul.f32 %v1705, %v1283
  %v1923 = vmul.f32 %v1710, %v1283
  %v1924 = vmul.f32 %v1715, %v1283
  %v1925 = vmul.f32 %v1720, %v1283
  %v1926 = vmul.f32 %v1725, %v1283
  %v1927 = vmul.f32 %v1730, %v1283
  %v1928 = vmul.f32 %v1735, %v1283
  %v1929 = vmul.f32 %v1740, %v1283
  %v1930 = vmul.f32 %v1745, %v1283
  %v1931 = vmul.f32 %v1750, %v1283
  %v1932 = vmul.f32 %v1755, %v1283
  %v1933 = vmul.f32 %v1760, %v1283
  %v1934 = vmul.f32 %v1765, %v1283
  %v1935 = vmul.f32 %v1770, %v1283
  %v1936 = vmul.f32 %v1775, %v1283
  %v1937 = vmul.f32 %v1780, %v1283
  %v1938 = vmul.f32 %v1785, %v1283
  %v1939 = vmul.f32 %v1790, %v1283
  %v1940 = vmul.f32 %v1795, %v1283
  %v1941 = vmul.f32 %v1800, %v1283
  %v1942 = vmul.f32 %v1805, %v1283
  %v1943 = vmul.f32 %v1810, %v1283
  %v1944 = vmul.f32 %v1815, %v1283
  %v1945 = vmul.f32 %v1820, %v1283
  %v1946 = vmul.f32 %v1825, %v1283
  %v1947 = vmul.f32 %v1830, %v1283
  %v1948 = vmul.f32 %v1835, %v1283
  %v1949 = vmul.f32 %v1840, %v1283
  %v1950 = vmul.f32 %v1845, %v1283
  %v1951 = vmul.f32 %v1850, %v1283
  %v1952 = vmul.f32 %v1855, %v1283
  %v1953 = vmul.f32 %v1860, %v1283
  %v1954 = vmul.f32 %v1865, %v1283
  %v1955 = vmul.f32 %v1870, %v1283
  %v1956 = vmul.f32 %v1875, %v1283
  %v1957 = vmul.f32 %v1880, %v1283
  %v1958 = vmul.f32 %v1885, %v1283
  %v1959 = vmul.f32 %v1890, %v1283
  %v1960 = vmul.f32 %v1895, %v1283
  %v1961 = vmul.f32 %v1900, %v1283
  %v1962 = vmul.f32 %v1905, %v1283
  %v1963 = vadd.f32 %v1571, %v1907
  %v1964 = vadd.f32 %v1572, %v1908
  %v1965 = vadd.f32 %v1573, %v1909
  %v1966 = vadd.f32 %v1574, %v1910
  %v1967 = vadd.f32 %v1575, %v1911
  %v1968 = vadd.f32 %v1576, %v1912
  %v1969 = vadd.f32 %v1577, %v1913
  %v1970 = vadd.f32 %v1578, %v1914
  %v1971 = vadd.f32 %v1579, %v1915
  %v1972 = vadd.f32 %v1580, %v1916
  %v1973 = vadd.f32 %v1581, %v1917
  %v1974 = vadd.f32 %v1582, %v1918
  %v1975 = vadd.f32 %v1583, %v1919
  %v1976 = vadd.f32 %v1584, %v1920
  %v1977 = vadd.f32 %v1585, %v1921
  %v1978 = vadd.f32 %v1586, %v1922
  %v1979 = vadd.f32 %v1587, %v1923
  %v1980 = vadd.f32 %v1588, %v1924
  %v1981 = vadd.f32 %v1589, %v1925
  %v1982 = vadd.f32 %v1590, %v1926
  %v1983 = vadd.f32 %v1591, %v1927
  %v1984 = vadd.f32 %v1592, %v1928
  %v1985 = vadd.f32 %v1593, %v1929
  %v1986 = vadd.f32 %v1594, %v1930
  %v1987 = vadd.f32 %v1595, %v1931
  %v1988 = vadd.f32 %v1596, %v1932
  %v1989 = vadd.f32 %v1597, %v1933
  %v1990 = vadd.f32 %v1598, %v1934
  %v1991 = vadd.f32 %v1599, %v1935
  %v1992 = vadd.f32 %v1600, %v1936
  %v1993 = vadd.f32 %v1601, %v1937
  %v1994 = vadd.f32 %v1602, %v1938
  %v1995 = vadd.f32 %v1603, %v1939
  %v1996 = vadd.f32 %v1604, %v1940
  %v1997 = vadd.f32 %v1605, %v1941
  %v1998 = vadd.f32 %v1606, %v1942
  %v1999 = vadd.f32 %v1607, %v1943
  %v2000 = vadd.f32 %v1608, %v1944
  %v2001 = vadd.f32 %v1609, %v1945
  %v2002 = vadd.f32 %v1610, %v1946
  %v2003 = vadd.f32 %v1611, %v1947
  %v2004 = vadd.f32 %v1612, %v1948
  %v2005 = vadd.f32 %v1613, %v1949
  %v2006 = vadd.f32 %v1614, %v1950
  %v2007 = vadd.f32 %v1615, %v1951
  %v2008 = vadd.f32 %v1616, %v1952
  %v2009 = vadd.f32 %v1617, %v1953
  %v2010 = vadd.f32 %v1618, %v1954
  %v2011 = vadd.f32 %v1619, %v1955
  %v2012 = vadd.f32 %v1620, %v1956
  %v2013 = vadd.f32 %v1621, %v1957
  %v2014 = vadd.f32 %v1622, %v1958
  %v2015 = vadd.f32 %v1623, %v1959
  %v2016 = vadd.f32 %v1624, %v1960
  %v2017 = vadd.f32 %v1625, %v1961
  %v2018 = vadd.f32 %v1626, %v1962
  %v2019 = vadd.f32 %v1963, %v1401
  %v2020 = vadd.f32 %v1964, %v1401
  %v2021 = vadd.f32 %v1965, %v1401
  %v2022 = vadd.f32 %v1966, %v1401
  %v2023 = vadd.f32 %v1967, %v1401
  %v2024 = vadd.f32 %v1968, %v1401
  %v2025 = vadd.f32 %v1969, %v1401
  %v2026 = vadd.f32 %v1970, %v1401
  %v2027 = vadd.f32 %v1971, %v1401
  %v2028 = vadd.f32 %v1972, %v1401
  %v2029 = vadd.f32 %v1973, %v1401
  %v2030 = vadd.f32 %v1974, %v1401
  %v2031 = vadd.f32 %v1975, %v1401
  %v2032 = vadd.f32 %v1976, %v1401
  %v2033 = vadd.f32 %v1977, %v1401
  %v2034 = vadd.f32 %v1978, %v1401
  %v2035 = vadd.f32 %v1979, %v1401
  %v2036 = vadd.f32 %v1980, %v1401
  %v2037 = vadd.f32 %v1981, %v1401
  %v2038 = vadd.f32 %v1982, %v1401
  %v2039 = vadd.f32 %v1983, %v1401
  %v2040 = vadd.f32 %v1984, %v1401
  %v2041 = vadd.f32 %v1985, %v1401
  %v2042 = vadd.f32 %v1986, %v1401
  %v2043 = vadd.f32 %v1987, %v1401
  %v2044 = vadd.f32 %v1988, %v1401
  %v2045 = vadd.f32 %v1989, %v1401
  %v2046 = vadd.f32 %v1990, %v1401
  %v2047 = vadd.f32 %v1991, %v1401
  %v2048 = vadd.f32 %v1992, %v1401
  %v2049 = vadd.f32 %v1993, %v1401
  %v2050 = vadd.f32 %v1994, %v1401
  %v2051 = vadd.f32 %v1995, %v1401
  %v2052 = vadd.f32 %v1996, %v1401
  %v2053 = vadd.f32 %v1997, %v1401
  %v2054 = vadd.f32 %v1998, %v1401
  %v2055 = vadd.f32 %v1999, %v1401
  %v2056 = vadd.f32 %v2000, %v1401
  %v2057 = vadd.f32 %v2001, %v1401
  %v2058 = vadd.f32 %v2002, %v1401
  %v2059 = vadd.f32 %v2003, %v1401
  %v2060 = vadd.f32 %v2004, %v1401
  %v2061 = vadd.f32 %v2005, %v1401
  %v2062 = vadd.f32 %v2006, %v1401
  %v2063 = vadd.f32 %v2007, %v1401
  %v2064 = vadd.f32 %v2008, %v1401
  %v2065 = vadd.f32 %v2009, %v1401
  %v2066 = vadd.f32 %v2010, %v1401
  %v2067 = vadd.f32 %v2011, %v1401
  %v2068 = vadd.f32 %v2012, %v1401
  %v2069 = vadd.f32 %v2013, %v1401
  %v2070 = vadd.f32 %v2014, %v1401
  %v2071 = vadd.f32 %v2015, %v1401
  %v2072 = vadd.f32 %v2016, %v1401
  %v2073 = vadd.f32 %v2017, %v1401
  %v2074 = vadd.f32 %v2018, %v1401
  %v2075 = vmax.f32 %v1403, %v2019
  %v2076 = vmax.f32 %v1404, %v2020
  %v2077 = vmax.f32 %v1405, %v2021
  %v2078 = vmax.f32 %v1406, %v2022
  %v2079 = vmax.f32 %v1407, %v2023
  %v2080 = vmax.f32 %v1408, %v2024
  %v2081 = vmax.f32 %v1409, %v2025
  %v2082 = vmax.f32 %v1410, %v2026
  %v2083 = vmax.f32 %v1411, %v2027
  %v2084 = vmax.f32 %v1412, %v2028
  %v2085 = vmax.f32 %v1413, %v2029
  %v2086 = vmax.f32 %v1414, %v2030
  %v2087 = vmax.f32 %v1415, %v2031
  %v2088 = vmax.f32 %v1416, %v2032
  %v2089 = vmax.f32 %v1417, %v2033
  %v2090 = vmax.f32 %v1418, %v2034
  %v2091 = vmax.f32 %v1419, %v2035
  %v2092 = vmax.f32 %v1420, %v2036
  %v2093 = vmax.f32 %v1421, %v2037
  %v2094 = vmax.f32 %v1422, %v2038
  %v2095 = vmax.f32 %v1423, %v2039
  %v2096 = vmax.f32 %v1424, %v2040
  %v2097 = vmax.f32 %v1425, %v2041
  %v2098 = vmax.f32 %v1426, %v2042
  %v2099 = vmax.f32 %v1427, %v2043
  %v2100 = vmax.f32 %v1428, %v2044
  %v2101 = vmax.f32 %v1429, %v2045
  %v2102 = vmax.f32 %v1430, %v2046
  %v2103 = vmax.f32 %v1431, %v2047
  %v2104 = vmax.f32 %v1432, %v2048
  %v2105 = vmax.f32 %v1433, %v2049
  %v2106 = vmax.f32 %v1434, %v2050
  %v2107 = vmax.f32 %v1435, %v2051
  %v2108 = vmax.f32 %v1436, %v2052
  %v2109 = vmax.f32 %v1437, %v2053
  %v2110 = vmax.f32 %v1438, %v2054
  %v2111 = vmax.f32 %v1439, %v2055
  %v2112 = vmax.f32 %v1440, %v2056
  %v2113 = vmax.f32 %v1441, %v2057
  %v2114 = vmax.f32 %v1442, %v2058
  %v2115 = vmax.f32 %v1443, %v2059
  %v2116 = vmax.f32 %v1444, %v2060
  %v2117 = vmax.f32 %v1445, %v2061
  %v2118 = vmax.f32 %v1446, %v2062
  %v2119 = vmax.f32 %v1447, %v2063
  %v2120 = vmax.f32 %v1448, %v2064
  %v2121 = vmax.f32 %v1449, %v2065
  %v2122 = vmax.f32 %v1450, %v2066
  %v2123 = vmax.f32 %v1451, %v2067
  %v2124 = vmax.f32 %v1452, %v2068
  %v2125 = vmax.f32 %v1453, %v2069
  %v2126 = vmax.f32 %v1454, %v2070
  %v2127 = vmax.f32 %v1455, %v2071
  %v2128 = vmax.f32 %v1456, %v2072
  %v2129 = vmax.f32 %v1457, %v2073
  %v2130 = vmax.f32 %v1458, %v2074
  %v2131 = vmax.f32 %v2075, 0.0
  %v2132 = vmax.f32 %v2076, 0.0
  %v2133 = vmax.f32 %v2077, 0.0
  %v2134 = vmax.f32 %v2078, 0.0
  %v2135 = vmax.f32 %v2079, 0.0
  %v2136 = vmax.f32 %v2080, 0.0
  %v2137 = vmax.f32 %v2081, 0.0
  %v2138 = vmax.f32 %v2082, 0.0
  %v2139 = vmax.f32 %v2083, 0.0
  %v2140 = vmax.f32 %v2084, 0.0
  %v2141 = vmax.f32 %v2085, 0.0
  %v2142 = vmax.f32 %v2086, 0.0
  %v2143 = vmax.f32 %v2087, 0.0
  %v2144 = vmax.f32 %v2088, 0.0
  %v2145 = vmax.f32 %v2089, 0.0
  %v2146 = vmax.f32 %v2090, 0.0
  %v2147 = vmax.f32 %v2091, 0.0
  %v2148 = vmax.f32 %v2092, 0.0
  %v2149 = vmax.f32 %v2093, 0.0
  %v2150 = vmax.f32 %v2094, 0.0
  %v2151 = vmax.f32 %v2095, 0.0
  %v2152 = vmax.f32 %v2096, 0.0
  %v2153 = vmax.f32 %v2097, 0.0
  %v2154 = vmax.f32 %v2098, 0.0
  %v2155 = vmax.f32 %v2099, 0.0
  %v2156 = vmax.f32 %v2100, 0.0
  %v2157 = vmax.f32 %v2101, 0.0
  %v2158 = vmax.f32 %v2102, 0.0
  %v2159 = vmax.f32 %v2103, 0.0
  %v2160 = vmax.f32 %v2104, 0.0
  %v2161 = vmax.f32 %v2105, 0.0
  %v2162 = vmax.f32 %v2106, 0.0
  %v2163 = vmax.f32 %v2107, 0.0
  %v2164 = vmax.f32 %v2108, 0.0
  %v2165 = vmax.f32 %v2109, 0.0
  %v2166 = vmax.f32 %v2110, 0.0
  %v2167 = vmax.f32 %v2111, 0.0
  %v2168 = vmax.f32 %v2112, 0.0
  %v2169 = vmax.f32 %v2113, 0.0
  %v2170 = vmax.f32 %v2114, 0.0
  %v2171 = vmax.f32 %v2115, 0.0
  %v2172 = vmax.f32 %v2116, 0.0
  %v2173 = vmax.f32 %v2117, 0.0
  %v2174 = vmax.f32 %v2118, 0.0
  %v2175 = vmax.f32 %v2119, 0.0
  %v2176 = vmax.f32 %v2120, 0.0
  %v2177 = vmax.f32 %v2121, 0.0
  %v2178 = vmax.f32 %v2122, 0.0
  %v2179 = vmax.f32 %v2123, 0.0
  %v2180 = vmax.f32 %v2124, 0.0
  %v2181 = vmax.f32 %v2125, 0.0
  %v2182 = vmax.f32 %v2126, 0.0
  %v2183 = vmax.f32 %v2127, 0.0
  %v2184 = vmax.f32 %v2128, 0.0
  %v2185 = vmax.f32 %v2129, 0.0
  %v2186 = vmax.f32 %v2130, 0.0
  %v2187 = vcombine.low %v2131, %v2145
  %v2188 = vcombine.high %v2131, %v2145
  %v2190 = vunpack.c.l.s4 1983009808
  %v2191 = vunpack.c.0.s8 %v2190
  %v2192 = vlaneseq
  %v2193 = vshrl.u32 %v2192, 7
  %v2194 = vsub.s32 %v2191, %v2193
  %v2195 = vrot.slane %v2187, %v2194
  %v2197 = vunpack.c.l.s4 1983009808
  %v2198 = vunpack.c.0.s8 %v2197
  %v2199 = vlaneseq
  %v2200 = vshrl.u32 %v2199, 7
  %v2201 = vsub.s32 %v2198, %v2200
  %v2202 = vrot.slane %v2188, %v2201
  %v2203 = vcombine.low %v2138, %v2152
  %v2204 = vcombine.high %v2138, %v2152
  %v2206 = vunpack.c.l.s4 1983009808
  %v2207 = vunpack.c.0.s8 %v2206
  %v2208 = vlaneseq
  %v2209 = vshrl.u32 %v2208, 7
  %v2210 = vsub.s32 %v2207, %v2209
  %v2211 = vrot.slane %v2203, %v2210
  %v2213 = vunpack.c.l.s4 1983009808
  %v2214 = vunpack.c.0.s8 %v2213
  %v2215 = vlaneseq
  %v2216 = vshrl.u32 %v2215, 7
  %v2217 = vsub.s32 %v2214, %v2216
  %v2218 = vrot.slane %v2204, %v2217
  %v2219 = vcombine.low %v2159, %v2173
  %v2220 = vcombine.high %v2159, %v2173
  %v2222 = vunpack.c.l.s4 1983009808
  %v2223 = vunpack.c.0.s8 %v2222
  %v2224 = vlaneseq
  %v2225 = vshrl.u32 %v2224, 7
  %v2226 = vsub.s32 %v2223, %v2225
  %v2227 = vrot.slane %v2219, %v2226
  %v2229 = vunpack.c.l.s4 1983009808
  %v2230 = vunpack.c.0.s8 %v2229
  %v2231 = vlaneseq
  %v2232 = vshrl.u32 %v2231, 7
  %v2233 = vsub.s32 %v2230, %v2232
  %v2234 = vrot.slane %v2220, %v2233
  %v2235 = vcombine.low %v2166, %v2180
  %v2236 = vcombine.high %v2166, %v2180
  %v2238 = vunpack.c.l.s4 1983009808
  %v2239 = vunpack.c.0.s8 %v2238
  %v2240 = vlaneseq
  %v2241 = vshrl.u32 %v2240, 7
  %v2242 = vsub.s32 %v2239, %v2241
  %v2243 = vrot.slane %v2235, %v2242
  %v2245 = vunpack.c.l.s4 1983009808
  %v2246 = vunpack.c.0.s8 %v2245
  %v2247 = vlaneseq
  %v2248 = vshrl.u32 %v2247, 7
  %v2249 = vsub.s32 %v2246, %v2248
  %v2250 = vrot.slane %v2236, %v2249
  %v2251 = vcombine.low %v2195, %v2211
  %v2252 = vcombine.high %v2195, %v2211
  %v2254 = vunpack.c.l.s4 1934713408
  %v2255 = vunpack.c.0.s8 %v2254
  %v2256 = vlaneseq
  %v2257 = vshrl.u32 %v2256, 7
  %v2258 = vsub.s32 %v2255, %v2257
  %v2259 = vrot.slane %v2251, %v2258
  %v2261 = vunpack.c.l.s4 1934713408
  %v2262 = vunpack.c.0.s8 %v2261
  %v2263 = vlaneseq
  %v2264 = vshrl.u32 %v2263, 7
  %v2265 = vsub.s32 %v2262, %v2264
  %v2266 = vrot.slane %v2252, %v2265
  %v2267 = vcombine.low %v2202, %v2218
  %v2268 = vcombine.high %v2202, %v2218
  %v2270 = vunpack.c.l.s4 1934713408
  %v2271 = vunpack.c.0.s8 %v2270
  %v2272 = vlaneseq
  %v2273 = vshrl.u32 %v2272, 7
  %v2274 = vsub.s32 %v2271, %v2273
  %v2275 = vrot.slane %v2267, %v2274
  %v2277 = vunpack.c.l.s4 1934713408
  %v2278 = vunpack.c.0.s8 %v2277
  %v2279 = vlaneseq
  %v2280 = vshrl.u32 %v2279, 7
  %v2281 = vsub.s32 %v2278, %v2280
  %v2282 = vrot.slane %v2268, %v2281
  %v2283 = vcombine.low %v2227, %v2243
  %v2284 = vcombine.high %v2227, %v2243
  %v2286 = vunpack.c.l.s4 1934713408
  %v2287 = vunpack.c.0.s8 %v2286
  %v2288 = vlaneseq
  %v2289 = vshrl.u32 %v2288, 7
  %v2290 = vsub.s32 %v2287, %v2289
  %v2291 = vrot.slane %v2283, %v2290
  %v2293 = vunpack.c.l.s4 1934713408
  %v2294 = vunpack.c.0.s8 %v2293
  %v2295 = vlaneseq
  %v2296 = vshrl.u32 %v2295, 7
  %v2297 = vsub.s32 %v2294, %v2296
  %v2298 = vrot.slane %v2284, %v2297
  %v2299 = vcombine.low %v2234, %v2250
  %v2300 = vcombine.high %v2234, %v2250
  %v2302 = vunpack.c.l.s4 1934713408
  %v2303 = vunpack.c.0.s8 %v2302
  %v2304 = vlaneseq
  %v2305 = vshrl.u32 %v2304, 7
  %v2306 = vsub.s32 %v2303, %v2305
  %v2307 = vrot.slane %v2299, %v2306
  %v2309 = vunpack.c.l.s4 1934713408
  %v2310 = vunpack.c.0.s8 %v2309
  %v2311 = vlaneseq
  %v2312 = vshrl.u32 %v2311, 7
  %v2313 = vsub.s32 %v2310, %v2312
  %v2314 = vrot.slane %v2300, %v2313
  %v2315 = vcombine.low %v2259, %v2291
  %v2316 = vcombine.high %v2259, %v2291
  %v2317 = vcombine.low %v2266, %v2298
  %v2318 = vcombine.high %v2266, %v2298
  %v2319 = vcombine.low %v2275, %v2307
  %v2320 = vcombine.high %v2275, %v2307
  %v2321 = vcombine.low %v2282, %v2314
  %v2322 = vcombine.high %v2282, %v2314
  %v2323 = vcombine.low %v2132, %v2146
  %v2324 = vcombine.high %v2132, %v2146
  %v2326 = vunpack.c.l.s4 1983009808
  %v2327 = vunpack.c.0.s8 %v2326
  %v2328 = vlaneseq
  %v2329 = vshrl.u32 %v2328, 7
  %v2330 = vsub.s32 %v2327, %v2329
  %v2331 = vrot.slane %v2323, %v2330
  %v2333 = vunpack.c.l.s4 1983009808
  %v2334 = vunpack.c.0.s8 %v2333
  %v2335 = vlaneseq
  %v2336 = vshrl.u32 %v2335, 7
  %v2337 = vsub.s32 %v2334, %v2336
  %v2338 = vrot.slane %v2324, %v2337
  %v2339 = vcombine.low %v2139, %v2153
  %v2340 = vcombine.high %v2139, %v2153
  %v2342 = vunpack.c.l.s4 1983009808
  %v2343 = vunpack.c.0.s8 %v2342
  %v2344 = vlaneseq
  %v2345 = vshrl.u32 %v2344, 7
  %v2346 = vsub.s32 %v2343, %v2345
  %v2347 = vrot.slane %v2339, %v2346
  %v2349 = vunpack.c.l.s4 1983009808
  %v2350 = vunpack.c.0.s8 %v2349
  %v2351 = vlaneseq
  %v2352 = vshrl.u32 %v2351, 7
  %v2353 = vsub.s32 %v2350, %v2352
  %v2354 = vrot.slane %v2340, %v2353
  %v2355 = vcombine.low %v2160, %v2174
  %v2356 = vcombine.high %v2160, %v2174
  %v2358 = vunpack.c.l.s4 1983009808
  %v2359 = vunpack.c.0.s8 %v2358
  %v2360 = vlaneseq
  %v2361 = vshrl.u32 %v2360, 7
  %v2362 = vsub.s32 %v2359, %v2361
  %v2363 = vrot.slane %v2355, %v2362
  %v2365 = vunpack.c.l.s4 1983009808
  %v2366 = vunpack.c.0.s8 %v2365
  %v2367 = vlaneseq
  %v2368 = vshrl.u32 %v2367, 7
  %v2369 = vsub.s32 %v2366, %v2368
  %v2370 = vrot.slane %v2356, %v2369
  %v2371 = vcombine.low %v2167, %v2181
  %v2372 = vcombine.high %v2167, %v2181
  %v2374 = vunpack.c.l.s4 1983009808
  %v2375 = vunpack.c.0.s8 %v2374
  %v2376 = vlaneseq
  %v2377 = vshrl.u32 %v2376, 7
  %v2378 = vsub.s32 %v2375, %v2377
  %v2379 = vrot.slane %v2371, %v2378
  %v2381 = vunpack.c.l.s4 1983009808
  %v2382 = vunpack.c.0.s8 %v2381
  %v2383 = vlaneseq
  %v2384 = vshrl.u32 %v2383, 7
  %v2385 = vsub.s32 %v2382, %v2384
  %v2386 = vrot.slane %v2372, %v2385
  %v2387 = vcombine.low %v2331, %v2347
  %v2388 = vcombine.high %v2331, %v2347
  %v2390 = vunpack.c.l.s4 1934713408
  %v2391 = vunpack.c.0.s8 %v2390
  %v2392 = vlaneseq
  %v2393 = vshrl.u32 %v2392, 7
  %v2394 = vsub.s32 %v2391, %v2393
  %v2395 = vrot.slane %v2387, %v2394
  %v2397 = vunpack.c.l.s4 1934713408
  %v2398 = vunpack.c.0.s8 %v2397
  %v2399 = vlaneseq
  %v2400 = vshrl.u32 %v2399, 7
  %v2401 = vsub.s32 %v2398, %v2400
  %v2402 = vrot.slane %v2388, %v2401
  %v2403 = vcombine.low %v2338, %v2354
  %v2404 = vcombine.high %v2338, %v2354
  %v2406 = vunpack.c.l.s4 1934713408
  %v2407 = vunpack.c.0.s8 %v2406
  %v2408 = vlaneseq
  %v2409 = vshrl.u32 %v2408, 7
  %v2410 = vsub.s32 %v2407, %v2409
  %v2411 = vrot.slane %v2403, %v2410
  %v2413 = vunpack.c.l.s4 1934713408
  %v2414 = vunpack.c.0.s8 %v2413
  %v2415 = vlaneseq
  %v2416 = vshrl.u32 %v2415, 7
  %v2417 = vsub.s32 %v2414, %v2416
  %v2418 = vrot.slane %v2404, %v2417
  %v2419 = vcombine.low %v2363, %v2379
  %v2420 = vcombine.high %v2363, %v2379
  %v2422 = vunpack.c.l.s4 1934713408
  %v2423 = vunpack.c.0.s8 %v2422
  %v2424 = vlaneseq
  %v2425 = vshrl.u32 %v2424, 7
  %v2426 = vsub.s32 %v2423, %v2425
  %v2427 = vrot.slane %v2419, %v2426
  %v2429 = vunpack.c.l.s4 1934713408
  %v2430 = vunpack.c.0.s8 %v2429
  %v2431 = vlaneseq
  %v2432 = vshrl.u32 %v2431, 7
  %v2433 = vsub.s32 %v2430, %v2432
  %v2434 = vrot.slane %v2420, %v2433
  %v2435 = vcombine.low %v2370, %v2386
  %v2436 = vcombine.high %v2370, %v2386
  %v2438 = vunpack.c.l.s4 1934713408
  %v2439 = vunpack.c.0.s8 %v2438
  %v2440 = vlaneseq
  %v2441 = vshrl.u32 %v2440, 7
  %v2442 = vsub.s32 %v2439, %v2441
  %v2443 = vrot.slane %v2435, %v2442
  %v2445 = vunpack.c.l.s4 1934713408
  %v2446 = vunpack.c.0.s8 %v2445
  %v2447 = vlaneseq
  %v2448 = vshrl.u32 %v2447, 7
  %v2449 = vsub.s32 %v2446, %v2448
  %v2450 = vrot.slane %v2436, %v2449
  %v2451 = vcombine.low %v2395, %v2427
  %v2452 = vcombine.high %v2395, %v2427
  %v2453 = vcombine.low %v2402, %v2434
  %v2454 = vcombine.high %v2402, %v2434
  %v2455 = vcombine.low %v2411, %v2443
  %v2456 = vcombine.high %v2411, %v2443
  %v2457 = vcombine.low %v2418, %v2450
  %v2458 = vcombine.high %v2418, %v2450
  %v2459 = vcombine.low %v2133, %v2147
  %v2460 = vcombine.high %v2133, %v2147
  %v2462 = vunpack.c.l.s4 1983009808
  %v2463 = vunpack.c.0.s8 %v2462
  %v2464 = vlaneseq
  %v2465 = vshrl.u32 %v2464, 7
  %v2466 = vsub.s32 %v2463, %v2465
  %v2467 = vrot.slane %v2459, %v2466
  %v2469 = vunpack.c.l.s4 1983009808
  %v2470 = vunpack.c.0.s8 %v2469
  %v2471 = vlaneseq
  %v2472 = vshrl.u32 %v2471, 7
  %v2473 = vsub.s32 %v2470, %v2472
  %v2474 = vrot.slane %v2460, %v2473
  %v2475 = vcombine.low %v2140, %v2154
  %v2476 = vcombine.high %v2140, %v2154
  %v2478 = vunpack.c.l.s4 1983009808
  %v2479 = vunpack.c.0.s8 %v2478
  %v2480 = vlaneseq
  %v2481 = vshrl.u32 %v2480, 7
  %v2482 = vsub.s32 %v2479, %v2481
  %v2483 = vrot.slane %v2475, %v2482
  %v2485 = vunpack.c.l.s4 1983009808
  %v2486 = vunpack.c.0.s8 %v2485
  %v2487 = vlaneseq
  %v2488 = vshrl.u32 %v2487, 7
  %v2489 = vsub.s32 %v2486, %v2488
  %v2490 = vrot.slane %v2476, %v2489
  %v2491 = vcombine.low %v2161, %v2175
  %v2492 = vcombine.high %v2161, %v2175
  %v2494 = vunpack.c.l.s4 1983009808
  %v2495 = vunpack.c.0.s8 %v2494
  %v2496 = vlaneseq
  %v2497 = vshrl.u32 %v2496, 7
  %v2498 = vsub.s32 %v2495, %v2497
  %v2499 = vrot.slane %v2491, %v2498
  %v2501 = vunpack.c.l.s4 1983009808
  %v2502 = vunpack.c.0.s8 %v2501
  %v2503 = vlaneseq
  %v2504 = vshrl.u32 %v2503, 7
  %v2505 = vsub.s32 %v2502, %v2504
  %v2506 = vrot.slane %v2492, %v2505
  %v2507 = vcombine.low %v2168, %v2182
  %v2508 = vcombine.high %v2168, %v2182
  %v2510 = vunpack.c.l.s4 1983009808
  %v2511 = vunpack.c.0.s8 %v2510
  %v2512 = vlaneseq
  %v2513 = vshrl.u32 %v2512, 7
  %v2514 = vsub.s32 %v2511, %v2513
  %v2515 = vrot.slane %v2507, %v2514
  %v2517 = vunpack.c.l.s4 1983009808
  %v2518 = vunpack.c.0.s8 %v2517
  %v2519 = vlaneseq
  %v2520 = vshrl.u32 %v2519, 7
  %v2521 = vsub.s32 %v2518, %v2520
  %v2522 = vrot.slane %v2508, %v2521
  %v2523 = vcombine.low %v2467, %v2483
  %v2524 = vcombine.high %v2467, %v2483
  %v2526 = vunpack.c.l.s4 1934713408
  %v2527 = vunpack.c.0.s8 %v2526
  %v2528 = vlaneseq
  %v2529 = vshrl.u32 %v2528, 7
  %v2530 = vsub.s32 %v2527, %v2529
  %v2531 = vrot.slane %v2523, %v2530
  %v2533 = vunpack.c.l.s4 1934713408
  %v2534 = vunpack.c.0.s8 %v2533
  %v2535 = vlaneseq
  %v2536 = vshrl.u32 %v2535, 7
  %v2537 = vsub.s32 %v2534, %v2536
  %v2538 = vrot.slane %v2524, %v2537
  %v2539 = vcombine.low %v2474, %v2490
  %v2540 = vcombine.high %v2474, %v2490
  %v2542 = vunpack.c.l.s4 1934713408
  %v2543 = vunpack.c.0.s8 %v2542
  %v2544 = vlaneseq
  %v2545 = vshrl.u32 %v2544, 7
  %v2546 = vsub.s32 %v2543, %v2545
  %v2547 = vrot.slane %v2539, %v2546
  %v2549 = vunpack.c.l.s4 1934713408
  %v2550 = vunpack.c.0.s8 %v2549
  %v2551 = vlaneseq
  %v2552 = vshrl.u32 %v2551, 7
  %v2553 = vsub.s32 %v2550, %v2552
  %v2554 = vrot.slane %v2540, %v2553
  %v2555 = vcombine.low %v2499, %v2515
  %v2556 = vcombine.high %v2499, %v2515
  %v2558 = vunpack.c.l.s4 1934713408
  %v2559 = vunpack.c.0.s8 %v2558
  %v2560 = vlaneseq
  %v2561 = vshrl.u32 %v2560, 7
  %v2562 = vsub.s32 %v2559, %v2561
  %v2563 = vrot.slane %v2555, %v2562
  %v2565 = vunpack.c.l.s4 1934713408
  %v2566 = vunpack.c.0.s8 %v2565
  %v2567 = vlaneseq
  %v2568 = vshrl.u32 %v2567, 7
  %v2569 = vsub.s32 %v2566, %v2568
  %v2570 = vrot.slane %v2556, %v2569
  %v2571 = vcombine.low %v2506, %v2522
  %v2572 = vcombine.high %v2506, %v2522
  %v2574 = vunpack.c.l.s4 1934713408
  %v2575 = vunpack.c.0.s8 %v2574
  %v2576 = vlaneseq
  %v2577 = vshrl.u32 %v2576, 7
  %v2578 = vsub.s32 %v2575, %v2577
  %v2579 = vrot.slane %v2571, %v2578
  %v2581 = vunpack.c.l.s4 1934713408
  %v2582 = vunpack.c.0.s8 %v2581
  %v2583 = vlaneseq
  %v2584 = vshrl.u32 %v2583, 7
  %v2585 = vsub.s32 %v2582, %v2584
  %v2586 = vrot.slane %v2572, %v2585
  %v2587 = vcombine.low %v2531, %v2563
  %v2588 = vcombine.high %v2531, %v2563
  %v2589 = vcombine.low %v2538, %v2570
  %v2590 = vcombine.high %v2538, %v2570
  %v2591 = vcombine.low %v2547, %v2579
  %v2592 = vcombine.high %v2547, %v2579
  %v2593 = vcombine.low %v2554, %v2586
  %v2594 = vcombine.high %v2554, %v2586
  %v2595 = vcombine.low %v2134, %v2148
  %v2596 = vcombine.high %v2134, %v2148
  %v2598 = vunpack.c.l.s4 1983009808
  %v2599 = vunpack.c.0.s8 %v2598
  %v2600 = vlaneseq
  %v2601 = vshrl.u32 %v2600, 7
  %v2602 = vsub.s32 %v2599, %v2601
  %v2603 = vrot.slane %v2595, %v2602
  %v2605 = vunpack.c.l.s4 1983009808
  %v2606 = vunpack.c.0.s8 %v2605
  %v2607 = vlaneseq
  %v2608 = vshrl.u32 %v2607, 7
  %v2609 = vsub.s32 %v2606, %v2608
  %v2610 = vrot.slane %v2596, %v2609
  %v2611 = vcombine.low %v2141, %v2155
  %v2612 = vcombine.high %v2141, %v2155
  %v2614 = vunpack.c.l.s4 1983009808
  %v2615 = vunpack.c.0.s8 %v2614
  %v2616 = vlaneseq
  %v2617 = vshrl.u32 %v2616, 7
  %v2618 = vsub.s32 %v2615, %v2617
  %v2619 = vrot.slane %v2611, %v2618
  %v2621 = vunpack.c.l.s4 1983009808
  %v2622 = vunpack.c.0.s8 %v2621
  %v2623 = vlaneseq
  %v2624 = vshrl.u32 %v2623, 7
  %v2625 = vsub.s32 %v2622, %v2624
  %v2626 = vrot.slane %v2612, %v2625
  %v2627 = vcombine.low %v2162, %v2176
  %v2628 = vcombine.high %v2162, %v2176
  %v2630 = vunpack.c.l.s4 1983009808
  %v2631 = vunpack.c.0.s8 %v2630
  %v2632 = vlaneseq
  %v2633 = vshrl.u32 %v2632, 7
  %v2634 = vsub.s32 %v2631, %v2633
  %v2635 = vrot.slane %v2627, %v2634
  %v2637 = vunpack.c.l.s4 1983009808
  %v2638 = vunpack.c.0.s8 %v2637
  %v2639 = vlaneseq
  %v2640 = vshrl.u32 %v2639, 7
  %v2641 = vsub.s32 %v2638, %v2640
  %v2642 = vrot.slane %v2628, %v2641
  %v2643 = vcombine.low %v2169, %v2183
  %v2644 = vcombine.high %v2169, %v2183
  %v2646 = vunpack.c.l.s4 1983009808
  %v2647 = vunpack.c.0.s8 %v2646
  %v2648 = vlaneseq
  %v2649 = vshrl.u32 %v2648, 7
  %v2650 = vsub.s32 %v2647, %v2649
  %v2651 = vrot.slane %v2643, %v2650
  %v2653 = vunpack.c.l.s4 1983009808
  %v2654 = vunpack.c.0.s8 %v2653
  %v2655 = vlaneseq
  %v2656 = vshrl.u32 %v2655, 7
  %v2657 = vsub.s32 %v2654, %v2656
  %v2658 = vrot.slane %v2644, %v2657
  %v2659 = vcombine.low %v2603, %v2619
  %v2660 = vcombine.high %v2603, %v2619
  %v2662 = vunpack.c.l.s4 1934713408
  %v2663 = vunpack.c.0.s8 %v2662
  %v2664 = vlaneseq
  %v2665 = vshrl.u32 %v2664, 7
  %v2666 = vsub.s32 %v2663, %v2665
  %v2667 = vrot.slane %v2659, %v2666
  %v2669 = vunpack.c.l.s4 1934713408
  %v2670 = vunpack.c.0.s8 %v2669
  %v2671 = vlaneseq
  %v2672 = vshrl.u32 %v2671, 7
  %v2673 = vsub.s32 %v2670, %v2672
  %v2674 = vrot.slane %v2660, %v2673
  %v2675 = vcombine.low %v2610, %v2626
  %v2676 = vcombine.high %v2610, %v2626
  %v2678 = vunpack.c.l.s4 1934713408
  %v2679 = vunpack.c.0.s8 %v2678
  %v2680 = vlaneseq
  %v2681 = vshrl.u32 %v2680, 7
  %v2682 = vsub.s32 %v2679, %v2681
  %v2683 = vrot.slane %v2675, %v2682
  %v2685 = vunpack.c.l.s4 1934713408
  %v2686 = vunpack.c.0.s8 %v2685
  %v2687 = vlaneseq
  %v2688 = vshrl.u32 %v2687, 7
  %v2689 = vsub.s32 %v2686, %v2688
  %v2690 = vrot.slane %v2676, %v2689
  %v2691 = vcombine.low %v2635, %v2651
  %v2692 = vcombine.high %v2635, %v2651
  %v2694 = vunpack.c.l.s4 1934713408
  %v2695 = vunpack.c.0.s8 %v2694
  %v2696 = vlaneseq
  %v2697 = vshrl.u32 %v2696, 7
  %v2698 = vsub.s32 %v2695, %v2697
  %v2699 = vrot.slane %v2691, %v2698
  %v2701 = vunpack.c.l.s4 1934713408
  %v2702 = vunpack.c.0.s8 %v2701
  %v2703 = vlaneseq
  %v2704 = vshrl.u32 %v2703, 7
  %v2705 = vsub.s32 %v2702, %v2704
  %v2706 = vrot.slane %v2692, %v2705
  %v2707 = vcombine.low %v2642, %v2658
  %v2708 = vcombine.high %v2642, %v2658
  %v2710 = vunpack.c.l.s4 1934713408
  %v2711 = vunpack.c.0.s8 %v2710
  %v2712 = vlaneseq
  %v2713 = vshrl.u32 %v2712, 7
  %v2714 = vsub.s32 %v2711, %v2713
  %v2715 = vrot.slane %v2707, %v2714
  %v2717 = vunpack.c.l.s4 1934713408
  %v2718 = vunpack.c.0.s8 %v2717
  %v2719 = vlaneseq
  %v2720 = vshrl.u32 %v2719, 7
  %v2721 = vsub.s32 %v2718, %v2720
  %v2722 = vrot.slane %v2708, %v2721
  %v2723 = vcombine.low %v2667, %v2699
  %v2724 = vcombine.high %v2667, %v2699
  %v2725 = vcombine.low %v2674, %v2706
  %v2726 = vcombine.high %v2674, %v2706
  %v2727 = vcombine.low %v2683, %v2715
  %v2728 = vcombine.high %v2683, %v2715
  %v2729 = vcombine.low %v2690, %v2722
  %v2730 = vcombine.high %v2690, %v2722
  %v2731 = vcombine.low %v2135, %v2149
  %v2732 = vcombine.high %v2135, %v2149
  %v2734 = vunpack.c.l.s4 1983009808
  %v2735 = vunpack.c.0.s8 %v2734
  %v2736 = vlaneseq
  %v2737 = vshrl.u32 %v2736, 7
  %v2738 = vsub.s32 %v2735, %v2737
  %v2739 = vrot.slane %v2731, %v2738
  %v2741 = vunpack.c.l.s4 1983009808
  %v2742 = vunpack.c.0.s8 %v2741
  %v2743 = vlaneseq
  %v2744 = vshrl.u32 %v2743, 7
  %v2745 = vsub.s32 %v2742, %v2744
  %v2746 = vrot.slane %v2732, %v2745
  %v2747 = vcombine.low %v2142, %v2156
  %v2748 = vcombine.high %v2142, %v2156
  %v2750 = vunpack.c.l.s4 1983009808
  %v2751 = vunpack.c.0.s8 %v2750
  %v2752 = vlaneseq
  %v2753 = vshrl.u32 %v2752, 7
  %v2754 = vsub.s32 %v2751, %v2753
  %v2755 = vrot.slane %v2747, %v2754
  %v2757 = vunpack.c.l.s4 1983009808
  %v2758 = vunpack.c.0.s8 %v2757
  %v2759 = vlaneseq
  %v2760 = vshrl.u32 %v2759, 7
  %v2761 = vsub.s32 %v2758, %v2760
  %v2762 = vrot.slane %v2748, %v2761
  %v2763 = vcombine.low %v2163, %v2177
  %v2764 = vcombine.high %v2163, %v2177
  %v2766 = vunpack.c.l.s4 1983009808
  %v2767 = vunpack.c.0.s8 %v2766
  %v2768 = vlaneseq
  %v2769 = vshrl.u32 %v2768, 7
  %v2770 = vsub.s32 %v2767, %v2769
  %v2771 = vrot.slane %v2763, %v2770
  %v2773 = vunpack.c.l.s4 1983009808
  %v2774 = vunpack.c.0.s8 %v2773
  %v2775 = vlaneseq
  %v2776 = vshrl.u32 %v2775, 7
  %v2777 = vsub.s32 %v2774, %v2776
  %v2778 = vrot.slane %v2764, %v2777
  %v2779 = vcombine.low %v2170, %v2184
  %v2780 = vcombine.high %v2170, %v2184
  %v2782 = vunpack.c.l.s4 1983009808
  %v2783 = vunpack.c.0.s8 %v2782
  %v2784 = vlaneseq
  %v2785 = vshrl.u32 %v2784, 7
  %v2786 = vsub.s32 %v2783, %v2785
  %v2787 = vrot.slane %v2779, %v2786
  %v2789 = vunpack.c.l.s4 1983009808
  %v2790 = vunpack.c.0.s8 %v2789
  %v2791 = vlaneseq
  %v2792 = vshrl.u32 %v2791, 7
  %v2793 = vsub.s32 %v2790, %v2792
  %v2794 = vrot.slane %v2780, %v2793
  %v2795 = vcombine.low %v2739, %v2755
  %v2796 = vcombine.high %v2739, %v2755
  %v2798 = vunpack.c.l.s4 1934713408
  %v2799 = vunpack.c.0.s8 %v2798
  %v2800 = vlaneseq
  %v2801 = vshrl.u32 %v2800, 7
  %v2802 = vsub.s32 %v2799, %v2801
  %v2803 = vrot.slane %v2795, %v2802
  %v2805 = vunpack.c.l.s4 1934713408
  %v2806 = vunpack.c.0.s8 %v2805
  %v2807 = vlaneseq
  %v2808 = vshrl.u32 %v2807, 7
  %v2809 = vsub.s32 %v2806, %v2808
  %v2810 = vrot.slane %v2796, %v2809
  %v2811 = vcombine.low %v2746, %v2762
  %v2812 = vcombine.high %v2746, %v2762
  %v2814 = vunpack.c.l.s4 1934713408
  %v2815 = vunpack.c.0.s8 %v2814
  %v2816 = vlaneseq
  %v2817 = vshrl.u32 %v2816, 7
  %v2818 = vsub.s32 %v2815, %v2817
  %v2819 = vrot.slane %v2811, %v2818
  %v2821 = vunpack.c.l.s4 1934713408
  %v2822 = vunpack.c.0.s8 %v2821
  %v2823 = vlaneseq
  %v2824 = vshrl.u32 %v2823, 7
  %v2825 = vsub.s32 %v2822, %v2824
  %v2826 = vrot.slane %v2812, %v2825
  %v2827 = vcombine.low %v2771, %v2787
  %v2828 = vcombine.high %v2771, %v2787
  %v2830 = vunpack.c.l.s4 1934713408
  %v2831 = vunpack.c.0.s8 %v2830
  %v2832 = vlaneseq
  %v2833 = vshrl.u32 %v2832, 7
  %v2834 = vsub.s32 %v2831, %v2833
  %v2835 = vrot.slane %v2827, %v2834
  %v2837 = vunpack.c.l.s4 1934713408
  %v2838 = vunpack.c.0.s8 %v2837
  %v2839 = vlaneseq
  %v2840 = vshrl.u32 %v2839, 7
  %v2841 = vsub.s32 %v2838, %v2840
  %v2842 = vrot.slane %v2828, %v2841
  %v2843 = vcombine.low %v2778, %v2794
  %v2844 = vcombine.high %v2778, %v2794
  %v2846 = vunpack.c.l.s4 1934713408
  %v2847 = vunpack.c.0.s8 %v2846
  %v2848 = vlaneseq
  %v2849 = vshrl.u32 %v2848, 7
  %v2850 = vsub.s32 %v2847, %v2849
  %v2851 = vrot.slane %v2843, %v2850
  %v2853 = vunpack.c.l.s4 1934713408
  %v2854 = vunpack.c.0.s8 %v2853
  %v2855 = vlaneseq
  %v2856 = vshrl.u32 %v2855, 7
  %v2857 = vsub.s32 %v2854, %v2856
  %v2858 = vrot.slane %v2844, %v2857
  %v2859 = vcombine.low %v2803, %v2835
  %v2860 = vcombine.high %v2803, %v2835
  %v2861 = vcombine.low %v2810, %v2842
  %v2862 = vcombine.high %v2810, %v2842
  %v2863 = vcombine.low %v2819, %v2851
  %v2864 = vcombine.high %v2819, %v2851
  %v2865 = vcombine.low %v2826, %v2858
  %v2866 = vcombine.high %v2826, %v2858
  %v2867 = vcombine.low %v2136, %v2150
  %v2868 = vcombine.high %v2136, %v2150
  %v2870 = vunpack.c.l.s4 1983009808
  %v2871 = vunpack.c.0.s8 %v2870
  %v2872 = vlaneseq
  %v2873 = vshrl.u32 %v2872, 7
  %v2874 = vsub.s32 %v2871, %v2873
  %v2875 = vrot.slane %v2867, %v2874
  %v2877 = vunpack.c.l.s4 1983009808
  %v2878 = vunpack.c.0.s8 %v2877
  %v2879 = vlaneseq
  %v2880 = vshrl.u32 %v2879, 7
  %v2881 = vsub.s32 %v2878, %v2880
  %v2882 = vrot.slane %v2868, %v2881
  %v2883 = vcombine.low %v2143, %v2157
  %v2884 = vcombine.high %v2143, %v2157
  %v2886 = vunpack.c.l.s4 1983009808
  %v2887 = vunpack.c.0.s8 %v2886
  %v2888 = vlaneseq
  %v2889 = vshrl.u32 %v2888, 7
  %v2890 = vsub.s32 %v2887, %v2889
  %v2891 = vrot.slane %v2883, %v2890
  %v2893 = vunpack.c.l.s4 1983009808
  %v2894 = vunpack.c.0.s8 %v2893
  %v2895 = vlaneseq
  %v2896 = vshrl.u32 %v2895, 7
  %v2897 = vsub.s32 %v2894, %v2896
  %v2898 = vrot.slane %v2884, %v2897
  %v2899 = vcombine.low %v2164, %v2178
  %v2900 = vcombine.high %v2164, %v2178
  %v2902 = vunpack.c.l.s4 1983009808
  %v2903 = vunpack.c.0.s8 %v2902
  %v2904 = vlaneseq
  %v2905 = vshrl.u32 %v2904, 7
  %v2906 = vsub.s32 %v2903, %v2905
  %v2907 = vrot.slane %v2899, %v2906
  %v2909 = vunpack.c.l.s4 1983009808
  %v2910 = vunpack.c.0.s8 %v2909
  %v2911 = vlaneseq
  %v2912 = vshrl.u32 %v2911, 7
  %v2913 = vsub.s32 %v2910, %v2912
  %v2914 = vrot.slane %v2900, %v2913
  %v2915 = vcombine.low %v2171, %v2185
  %v2916 = vcombine.high %v2171, %v2185
  %v2918 = vunpack.c.l.s4 1983009808
  %v2919 = vunpack.c.0.s8 %v2918
  %v2920 = vlaneseq
  %v2921 = vshrl.u32 %v2920, 7
  %v2922 = vsub.s32 %v2919, %v2921
  %v2923 = vrot.slane %v2915, %v2922
  %v2925 = vunpack.c.l.s4 1983009808
  %v2926 = vunpack.c.0.s8 %v2925
  %v2927 = vlaneseq
  %v2928 = vshrl.u32 %v2927, 7
  %v2929 = vsub.s32 %v2926, %v2928
  %v2930 = vrot.slane %v2916, %v2929
  %v2931 = vcombine.low %v2875, %v2891
  %v2932 = vcombine.high %v2875, %v2891
  %v2934 = vunpack.c.l.s4 1934713408
  %v2935 = vunpack.c.0.s8 %v2934
  %v2936 = vlaneseq
  %v2937 = vshrl.u32 %v2936, 7
  %v2938 = vsub.s32 %v2935, %v2937
  %v2939 = vrot.slane %v2931, %v2938
  %v2941 = vunpack.c.l.s4 1934713408
  %v2942 = vunpack.c.0.s8 %v2941
  %v2943 = vlaneseq
  %v2944 = vshrl.u32 %v2943, 7
  %v2945 = vsub.s32 %v2942, %v2944
  %v2946 = vrot.slane %v2932, %v2945
  %v2947 = vcombine.low %v2882, %v2898
  %v2948 = vcombine.high %v2882, %v2898
  %v2950 = vunpack.c.l.s4 1934713408
  %v2951 = vunpack.c.0.s8 %v2950
  %v2952 = vlaneseq
  %v2953 = vshrl.u32 %v2952, 7
  %v2954 = vsub.s32 %v2951, %v2953
  %v2955 = vrot.slane %v2947, %v2954
  %v2957 = vunpack.c.l.s4 1934713408
  %v2958 = vunpack.c.0.s8 %v2957
  %v2959 = vlaneseq
  %v2960 = vshrl.u32 %v2959, 7
  %v2961 = vsub.s32 %v2958, %v2960
  %v2962 = vrot.slane %v2948, %v2961
  %v2963 = vcombine.low %v2907, %v2923
  %v2964 = vcombine.high %v2907, %v2923
  %v2966 = vunpack.c.l.s4 1934713408
  %v2967 = vunpack.c.0.s8 %v2966
  %v2968 = vlaneseq
  %v2969 = vshrl.u32 %v2968, 7
  %v2970 = vsub.s32 %v2967, %v2969
  %v2971 = vrot.slane %v2963, %v2970
  %v2973 = vunpack.c.l.s4 1934713408
  %v2974 = vunpack.c.0.s8 %v2973
  %v2975 = vlaneseq
  %v2976 = vshrl.u32 %v2975, 7
  %v2977 = vsub.s32 %v2974, %v2976
  %v2978 = vrot.slane %v2964, %v2977
  %v2979 = vcombine.low %v2914, %v2930
  %v2980 = vcombine.high %v2914, %v2930
  %v2982 = vunpack.c.l.s4 1934713408
  %v2983 = vunpack.c.0.s8 %v2982
  %v2984 = vlaneseq
  %v2985 = vshrl.u32 %v2984, 7
  %v2986 = vsub.s32 %v2983, %v2985
  %v2987 = vrot.slane %v2979, %v2986
  %v2989 = vunpack.c.l.s4 1934713408
  %v2990 = vunpack.c.0.s8 %v2989
  %v2991 = vlaneseq
  %v2992 = vshrl.u32 %v2991, 7
  %v2993 = vsub.s32 %v2990, %v2992
  %v2994 = vrot.slane %v2980, %v2993
  %v2995 = vcombine.low %v2939, %v2971
  %v2996 = vcombine.high %v2939, %v2971
  %v2997 = vcombine.low %v2946, %v2978
  %v2998 = vcombine.high %v2946, %v2978
  %v2999 = vcombine.low %v2955, %v2987
  %v3000 = vcombine.high %v2955, %v2987
  %v3001 = vcombine.low %v2962, %v2994
  %v3002 = vcombine.high %v2962, %v2994
  %v3003 = vcombine.low %v2137, %v2151
  %v3004 = vcombine.high %v2137, %v2151
  %v3006 = vunpack.c.l.s4 1983009808
  %v3007 = vunpack.c.0.s8 %v3006
  %v3008 = vlaneseq
  %v3009 = vshrl.u32 %v3008, 7
  %v3010 = vsub.s32 %v3007, %v3009
  %v3011 = vrot.slane %v3003, %v3010
  %v3013 = vunpack.c.l.s4 1983009808
  %v3014 = vunpack.c.0.s8 %v3013
  %v3015 = vlaneseq
  %v3016 = vshrl.u32 %v3015, 7
  %v3017 = vsub.s32 %v3014, %v3016
  %v3018 = vrot.slane %v3004, %v3017
  %v3019 = vcombine.low %v2144, %v2158
  %v3020 = vcombine.high %v2144, %v2158
  %v3022 = vunpack.c.l.s4 1983009808
  %v3023 = vunpack.c.0.s8 %v3022
  %v3024 = vlaneseq
  %v3025 = vshrl.u32 %v3024, 7
  %v3026 = vsub.s32 %v3023, %v3025
  %v3027 = vrot.slane %v3019, %v3026
  %v3029 = vunpack.c.l.s4 1983009808
  %v3030 = vunpack.c.0.s8 %v3029
  %v3031 = vlaneseq
  %v3032 = vshrl.u32 %v3031, 7
  %v3033 = vsub.s32 %v3030, %v3032
  %v3034 = vrot.slane %v3020, %v3033
  %v3035 = vcombine.low %v2165, %v2179
  %v3036 = vcombine.high %v2165, %v2179
  %v3038 = vunpack.c.l.s4 1983009808
  %v3039 = vunpack.c.0.s8 %v3038
  %v3040 = vlaneseq
  %v3041 = vshrl.u32 %v3040, 7
  %v3042 = vsub.s32 %v3039, %v3041
  %v3043 = vrot.slane %v3035, %v3042
  %v3045 = vunpack.c.l.s4 1983009808
  %v3046 = vunpack.c.0.s8 %v3045
  %v3047 = vlaneseq
  %v3048 = vshrl.u32 %v3047, 7
  %v3049 = vsub.s32 %v3046, %v3048
  %v3050 = vrot.slane %v3036, %v3049
  %v3051 = vcombine.low %v2172, %v2186
  %v3052 = vcombine.high %v2172, %v2186
  %v3054 = vunpack.c.l.s4 1983009808
  %v3055 = vunpack.c.0.s8 %v3054
  %v3056 = vlaneseq
  %v3057 = vshrl.u32 %v3056, 7
  %v3058 = vsub.s32 %v3055, %v3057
  %v3059 = vrot.slane %v3051, %v3058
  %v3061 = vunpack.c.l.s4 1983009808
  %v3062 = vunpack.c.0.s8 %v3061
  %v3063 = vlaneseq
  %v3064 = vshrl.u32 %v3063, 7
  %v3065 = vsub.s32 %v3062, %v3064
  %v3066 = vrot.slane %v3052, %v3065
  %v3067 = vcombine.low %v3011, %v3027
  %v3068 = vcombine.high %v3011, %v3027
  %v3070 = vunpack.c.l.s4 1934713408
  %v3071 = vunpack.c.0.s8 %v3070
  %v3072 = vlaneseq
  %v3073 = vshrl.u32 %v3072, 7
  %v3074 = vsub.s32 %v3071, %v3073
  %v3075 = vrot.slane %v3067, %v3074
  %v3077 = vunpack.c.l.s4 1934713408
  %v3078 = vunpack.c.0.s8 %v3077
  %v3079 = vlaneseq
  %v3080 = vshrl.u32 %v3079, 7
  %v3081 = vsub.s32 %v3078, %v3080
  %v3082 = vrot.slane %v3068, %v3081
  %v3083 = vcombine.low %v3018, %v3034
  %v3084 = vcombine.high %v3018, %v3034
  %v3086 = vunpack.c.l.s4 1934713408
  %v3087 = vunpack.c.0.s8 %v3086
  %v3088 = vlaneseq
  %v3089 = vshrl.u32 %v3088, 7
  %v3090 = vsub.s32 %v3087, %v3089
  %v3091 = vrot.slane %v3083, %v3090
  %v3093 = vunpack.c.l.s4 1934713408
  %v3094 = vunpack.c.0.s8 %v3093
  %v3095 = vlaneseq
  %v3096 = vshrl.u32 %v3095, 7
  %v3097 = vsub.s32 %v3094, %v3096
  %v3098 = vrot.slane %v3084, %v3097
  %v3099 = vcombine.low %v3043, %v3059
  %v3100 = vcombine.high %v3043, %v3059
  %v3102 = vunpack.c.l.s4 1934713408
  %v3103 = vunpack.c.0.s8 %v3102
  %v3104 = vlaneseq
  %v3105 = vshrl.u32 %v3104, 7
  %v3106 = vsub.s32 %v3103, %v3105
  %v3107 = vrot.slane %v3099, %v3106
  %v3109 = vunpack.c.l.s4 1934713408
  %v3110 = vunpack.c.0.s8 %v3109
  %v3111 = vlaneseq
  %v3112 = vshrl.u32 %v3111, 7
  %v3113 = vsub.s32 %v3110, %v3112
  %v3114 = vrot.slane %v3100, %v3113
  %v3115 = vcombine.low %v3050, %v3066
  %v3116 = vcombine.high %v3050, %v3066
  %v3118 = vunpack.c.l.s4 1934713408
  %v3119 = vunpack.c.0.s8 %v3118
  %v3120 = vlaneseq
  %v3121 = vshrl.u32 %v3120, 7
  %v3122 = vsub.s32 %v3119, %v3121
  %v3123 = vrot.slane %v3115, %v3122
  %v3125 = vunpack.c.l.s4 1934713408
  %v3126 = vunpack.c.0.s8 %v3125
  %v3127 = vlaneseq
  %v3128 = vshrl.u32 %v3127, 7
  %v3129 = vsub.s32 %v3126, %v3128
  %v3130 = vrot.slane %v3116, %v3129
  %v3131 = vcombine.low %v3075, %v3107
  %v3132 = vcombine.high %v3075, %v3107
  %v3133 = vcombine.low %v3082, %v3114
  %v3134 = vcombine.high %v3082, %v3114
  %v3135 = vcombine.low %v3091, %v3123
  %v3136 = vcombine.high %v3091, %v3123
  %v3137 = vcombine.low %v3098, %v3130
  %v3138 = vcombine.high %v3098, %v3130
  %3140 = vrot.lane.b32.xlu0 %v2316, 64
  %v3141 = vpop.permute.xlu0 %3140
  %3144 = vrot.lane.b32.xlu0 %v2318, 64
  %v3145 = vpop.permute.xlu0 %3144
  %3148 = vrot.lane.b32.xlu0 %v2320, 64
  %v3149 = vpop.permute.xlu0 %3148
  %3152 = vrot.lane.b32.xlu0 %v2322, 64
  %v3153 = vpop.permute.xlu0 %3152
  %3156 = vrot.lane.b32.xlu0 %v2452, 64
  %v3157 = vpop.permute.xlu0 %3156
  %3160 = vrot.lane.b32.xlu0 %v2454, 64
  %v3161 = vpop.permute.xlu0 %3160
  %3164 = vrot.lane.b32.xlu0 %v2456, 64
  %v3165 = vpop.permute.xlu0 %3164
  %3168 = vrot.lane.b32.xlu0 %v2458, 64
  %v3169 = vpop.permute.xlu0 %3168
  %3172 = vrot.lane.b32.xlu0 %v2588, 64
  %v3173 = vpop.permute.xlu0 %3172
  %3176 = vrot.lane.b32.xlu0 %v2590, 64
  %v3177 = vpop.permute.xlu0 %3176
  %3180 = vrot.lane.b32.xlu0 %v2592, 64
  %v3181 = vpop.permute.xlu0 %3180
  %3184 = vrot.lane.b32.xlu0 %v2594, 64
  %v3185 = vpop.permute.xlu0 %3184
  %3188 = vrot.lane.b32.xlu0 %v2724, 64
  %v3189 = vpop.permute.xlu0 %3188
  %3192 = vrot.lane.b32.xlu0 %v2726, 64
  %v3193 = vpop.permute.xlu0 %3192
  %3196 = vrot.lane.b32.xlu0 %v2728, 64
  %v3197 = vpop.permute.xlu0 %3196
  %3200 = vrot.lane.b32.xlu0 %v2730, 64
  %v3201 = vpop.permute.xlu0 %3200
  %3204 = vrot.lane.b32.xlu0 %v2860, 64
  %v3205 = vpop.permute.xlu0 %3204
  %3208 = vrot.lane.b32.xlu0 %v2862, 64
  %v3209 = vpop.permute.xlu0 %3208
  %3212 = vrot.lane.b32.xlu0 %v2864, 64
  %v3213 = vpop.permute.xlu0 %3212
  %3216 = vrot.lane.b32.xlu0 %v2866, 64
  %v3217 = vpop.permute.xlu0 %3216
  %3220 = vrot.lane.b32.xlu0 %v2996, 64
  %v3221 = vpop.permute.xlu0 %3220
  %3224 = vrot.lane.b32.xlu0 %v2998, 64
  %v3225 = vpop.permute.xlu0 %3224
  %3228 = vrot.lane.b32.xlu0 %v3000, 64
  %v3229 = vpop.permute.xlu0 %3228
  %3232 = vrot.lane.b32.xlu0 %v3002, 64
  %v3233 = vpop.permute.xlu0 %3232
  %3236 = vrot.lane.b32.xlu0 %v3132, 64
  %v3237 = vpop.permute.xlu0 %3236
  %3240 = vrot.lane.b32.xlu0 %v3134, 64
  %v3241 = vpop.permute.xlu0 %3240
  %3244 = vrot.lane.b32.xlu0 %v3136, 64
  %v3245 = vpop.permute.xlu0 %3244
  %3248 = vrot.lane.b32.xlu0 %v3138, 64
  %v3249 = vpop.permute.xlu0 %3248
  %vm3251 = vcmask 523264
  %v3252 = vsel %vm3251, %v2315, %v3141
  %v3253 = vsel %vm3251, %v2317, %v3145
  %v3254 = vsel %vm3251, %v2319, %v3149
  %v3255 = vsel %vm3251, %v2321, %v3153
  %v3256 = vsel %vm3251, %v2451, %v3157
  %v3257 = vsel %vm3251, %v2453, %v3161
  %v3258 = vsel %vm3251, %v2455, %v3165
  %v3259 = vsel %vm3251, %v2457, %v3169
  %v3260 = vsel %vm3251, %v2587, %v3173
  %v3261 = vsel %vm3251, %v2589, %v3177
  %v3262 = vsel %vm3251, %v2591, %v3181
  %v3263 = vsel %vm3251, %v2593, %v3185
  %v3264 = vsel %vm3251, %v2723, %v3189
  %v3265 = vsel %vm3251, %v2725, %v3193
  %v3266 = vsel %vm3251, %v2727, %v3197
  %v3267 = vsel %vm3251, %v2729, %v3201
  %v3268 = vsel %vm3251, %v2859, %v3205
  %v3269 = vsel %vm3251, %v2861, %v3209
  %v3270 = vsel %vm3251, %v2863, %v3213
  %v3271 = vsel %vm3251, %v2865, %v3217
  %v3272 = vsel %vm3251, %v2995, %v3221
  %v3273 = vsel %vm3251, %v2997, %v3225
  %v3274 = vsel %vm3251, %v2999, %v3229
  %v3275 = vsel %vm3251, %v3001, %v3233
  %v3276 = vsel %vm3251, %v3131, %v3237
  %v3277 = vsel %vm3251, %v3133, %v3241
  %v3278 = vsel %vm3251, %v3135, %v3245
  %v3279 = vsel %vm3251, %v3137, %v3249
  %v3280 = vld [vmem:[%s3] sm:$0xff]
  %v3281 = vld [vmem:[%s3 + $0x8] sm:$0xff]
  %v3282 = vld [vmem:[%s3 + $0x10] sm:$0xff]
  %v3283 = vld [vmem:[%s3 + $0x18] sm:$0xff]
  %v3284 = vld [vmem:[%s3 + $0x20] sm:$0xff]
  %v3285 = vld [vmem:[%s3 + $0x28] sm:$0xff]
  %v3286 = vld [vmem:[%s3 + $0x30] sm:$0xff]
  %v3287 = vld [vmem:[%s3 + $0x38] sm:$0xff]
  %v3288 = vld [vmem:[%s3 + $0x40] sm:$0xff]
  %v3289 = vld [vmem:[%s3 + $0x48] sm:$0xff]
  %v3290 = vld [vmem:[%s3 + $0x50] sm:$0xff]
  %v3291 = vld [vmem:[%s3 + $0x58] sm:$0xff]
  %v3292 = vld [vmem:[%s3 + $0x60] sm:$0xff]
  %v3293 = vld [vmem:[%s3 + $0x68] sm:$0xff]
  %v3294 = vld [vmem:[%s3 + $0x70] sm:$0xff]
  %v3295 = vld [vmem:[%s3 + $0x78] sm:$0xff]
  %v3296 = vld [vmem:[%s3 + $0x80] sm:$0xff]
  %v3297 = vld [vmem:[%s3 + $0x88] sm:$0xff]
  %v3298 = vld [vmem:[%s3 + $0x90] sm:$0xff]
  %v3299 = vld [vmem:[%s3 + $0x98] sm:$0xff]
  %v3300 = vld [vmem:[%s3 + $0xa0] sm:$0xff]
  %v3301 = vld [vmem:[%s3 + $0xa8] sm:$0xff]
  %v3302 = vld [vmem:[%s3 + $0xb0] sm:$0xff]
  %v3303 = vld [vmem:[%s3 + $0xb8] sm:$0xff]
  %v3304 = vld [vmem:[%s3 + $0xc0] sm:$0xff]
  %v3305 = vld [vmem:[%s3 + $0xc8] sm:$0xff]
  %v3306 = vld [vmem:[%s3 + $0xd0] sm:$0xff]
  %v3307 = vld [vmem:[%s3 + $0xd8] sm:$0xff]
  %v3308 = vld [vmem:[%s3 + $0xe0] sm:$0xff]
  %v3309 = vld [vmem:[%s3 + $0xe8] sm:$0xff]
  %v3310 = vld [vmem:[%s3 + $0xf0] sm:$0xff]
  %v3311 = vld [vmem:[%s3 + $0xf8] sm:$0xff]
  %v3312 = vld [vmem:[%s3 + $0x100] sm:$0xff]
  %v3313 = vld [vmem:[%s3 + $0x108] sm:$0xff]
  %v3314 = vld [vmem:[%s3 + $0x110] sm:$0xff]
  %v3315 = vld [vmem:[%s3 + $0x118] sm:$0xff]
  %v3316 = vld [vmem:[%s3 + $0x120] sm:$0xff]
  %v3317 = vld [vmem:[%s3 + $0x128] sm:$0xff]
  %v3318 = vld [vmem:[%s3 + $0x130] sm:$0xff]
  %v3319 = vld [vmem:[%s3 + $0x138] sm:$0xff]
  %v3320 = vld [vmem:[%s3 + $0x140] sm:$0xff]
  %v3321 = vld [vmem:[%s3 + $0x148] sm:$0xff]
  %v3322 = vld [vmem:[%s3 + $0x150] sm:$0xff]
  %v3323 = vld [vmem:[%s3 + $0x158] sm:$0xff]
  %v3324 = vld [vmem:[%s3 + $0x160] sm:$0xff]
  %v3325 = vld [vmem:[%s3 + $0x168] sm:$0xff]
  %v3326 = vld [vmem:[%s3 + $0x170] sm:$0xff]
  %v3327 = vld [vmem:[%s3 + $0x178] sm:$0xff]
  %v3328 = vld [vmem:[%s3 + $0x180] sm:$0xff]
  %v3329 = vld [vmem:[%s3 + $0x188] sm:$0xff]
  %v3330 = vld [vmem:[%s3 + $0x190] sm:$0xff]
  %v3331 = vld [vmem:[%s3 + $0x198] sm:$0xff]
  %v3332 = vld [vmem:[%s3 + $0x1a0] sm:$0xff]
  %v3333 = vld [vmem:[%s3 + $0x1a8] sm:$0xff]
  %v3334 = vld [vmem:[%s3 + $0x1b0] sm:$0xff]
  %v3335 = vld [vmem:[%s3 + $0x1b8] sm:$0xff]
  %v3336 = vld [vmem:[%s3 + $0x1c0] sm:$0xff]
  %v3337 = vld [vmem:[%s3 + $0x1c8] sm:$0xff]
  %v3338 = vld [vmem:[%s3 + $0x1d0] sm:$0xff]
  %v3339 = vld [vmem:[%s3 + $0x1d8] sm:$0xff]
  %v3340 = vld [vmem:[%s3 + $0x1e0] sm:$0xff]
  %v3341 = vld [vmem:[%s3 + $0x1e8] sm:$0xff]
  %v3342 = vld [vmem:[%s3 + $0x1f0] sm:$0xff]
  %v3343 = vld [vmem:[%s3 + $0x1f8] sm:$0xff]
  %v3344 = vld [vmem:[%s3 + $0x200] sm:$0xff]
  %v3345 = vld [vmem:[%s3 + $0x208] sm:$0xff]
  %v3346 = vld [vmem:[%s3 + $0x210] sm:$0xff]
  %v3347 = vld [vmem:[%s3 + $0x218] sm:$0xff]
  %v3348 = vld [vmem:[%s3 + $0x220] sm:$0xff]
  %v3349 = vld [vmem:[%s3 + $0x228] sm:$0xff]
  %v3350 = vld [vmem:[%s3 + $0x230] sm:$0xff]
  %v3351 = vld [vmem:[%s3 + $0x238] sm:$0xff]
  %v3352 = vld [vmem:[%s3 + $0x240] sm:$0xff]
  %v3353 = vld [vmem:[%s3 + $0x248] sm:$0xff]
  %v3354 = vld [vmem:[%s3 + $0x250] sm:$0xff]
  %v3355 = vld [vmem:[%s3 + $0x258] sm:$0xff]
  %v3356 = vld [vmem:[%s3 + $0x260] sm:$0xff]
  %v3357 = vld [vmem:[%s3 + $0x268] sm:$0xff]
  %v3358 = vld [vmem:[%s3 + $0x270] sm:$0xff]
  %v3359 = vld [vmem:[%s3 + $0x278] sm:$0xff]
  %v3360 = vld [vmem:[%s3 + $0x280] sm:$0xff]
  %v3361 = vld [vmem:[%s3 + $0x288] sm:$0xff]
  %v3362 = vld [vmem:[%s3 + $0x290] sm:$0xff]
  %v3363 = vld [vmem:[%s3 + $0x298] sm:$0xff]
  %v3364 = vld [vmem:[%s3 + $0x2a0] sm:$0xff]
  %v3365 = vld [vmem:[%s3 + $0x2a8] sm:$0xff]
  %v3366 = vld [vmem:[%s3 + $0x2b0] sm:$0xff]
  %v3367 = vld [vmem:[%s3 + $0x2b8] sm:$0xff]
  %v3368 = vld [vmem:[%s3 + $0x2c0] sm:$0xff]
  %v3369 = vld [vmem:[%s3 + $0x2c8] sm:$0xff]
  %v3370 = vld [vmem:[%s3 + $0x2d0] sm:$0xff]
  %v3371 = vld [vmem:[%s3 + $0x2d8] sm:$0xff]
  %v3372 = vld [vmem:[%s3 + $0x2e0] sm:$0xff]
  %v3373 = vld [vmem:[%s3 + $0x2e8] sm:$0xff]
  %v3374 = vld [vmem:[%s3 + $0x2f0] sm:$0xff]
  %v3375 = vld [vmem:[%s3 + $0x2f8] sm:$0xff]
  %v3376 = vld [vmem:[%s3 + $0x300] sm:$0xff]
  %v3377 = vld [vmem:[%s3 + $0x308] sm:$0xff]
  %v3378 = vld [vmem:[%s3 + $0x310] sm:$0xff]
  %v3379 = vld [vmem:[%s3 + $0x318] sm:$0xff]
  %v3380 = vld [vmem:[%s3 + $0x320] sm:$0xff]
  %v3381 = vld [vmem:[%s3 + $0x328] sm:$0xff]
  %v3382 = vld [vmem:[%s3 + $0x330] sm:$0xff]
  %v3383 = vld [vmem:[%s3 + $0x338] sm:$0xff]
  %v3384 = vld [vmem:[%s3 + $0x340] sm:$0xff]
  %v3385 = vld [vmem:[%s3 + $0x348] sm:$0xff]
  %v3386 = vld [vmem:[%s3 + $0x350] sm:$0xff]
  %v3387 = vld [vmem:[%s3 + $0x358] sm:$0xff]
  %v3388 = vld [vmem:[%s3 + $0x360] sm:$0xff]
  %v3389 = vld [vmem:[%s3 + $0x368] sm:$0xff]
  %v3390 = vld [vmem:[%s3 + $0x370] sm:$0xff]
  %v3391 = vld [vmem:[%s3 + $0x378] sm:$0xff]
  %v3392 = vld [vmem:[%s3 + $0x380] sm:$0xff]
  %v3393 = vld [vmem:[%s3 + $0x388] sm:$0xff]
  %v3394 = vld [vmem:[%s3 + $0x390] sm:$0xff]
  %v3395 = vld [vmem:[%s3 + $0x398] sm:$0xff]
  %v3396 = vld [vmem:[%s3 + $0x3a0] sm:$0xff]
  %v3397 = vld [vmem:[%s3 + $0x3a8] sm:$0xff]
  %v3398 = vld [vmem:[%s3 + $0x3b0] sm:$0xff]
  %v3399 = vld [vmem:[%s3 + $0x3b8] sm:$0xff]
  %v3400 = vld [vmem:[%s3 + $0x3c0] sm:$0xff]
  %v3401 = vld [vmem:[%s3 + $0x3c8] sm:$0xff]
  %v3402 = vld [vmem:[%s3 + $0x3d0] sm:$0xff]
  %v3403 = vld [vmem:[%s3 + $0x3d8] sm:$0xff]
  %v3404 = vld [vmem:[%s3 + $0x3e0] sm:$0xff]
  %v3405 = vld [vmem:[%s3 + $0x3e8] sm:$0xff]
  %v3406 = vld [vmem:[%s3 + $0x3f0] sm:$0xff]
  %v3407 = vld [vmem:[%s3 + $0x3f8] sm:$0xff]
  %v3408 = vld [vmem:[%s3 + $0x400] sm:$0xff]
  %v3409 = vld [vmem:[%s3 + $0x408] sm:$0xff]
  %v3410 = vld [vmem:[%s3 + $0x410] sm:$0xff]
  %v3411 = vld [vmem:[%s3 + $0x418] sm:$0xff]
  %v3412 = vld [vmem:[%s3 + $0x420] sm:$0xff]
  %v3413 = vld [vmem:[%s3 + $0x428] sm:$0xff]
  %v3414 = vld [vmem:[%s3 + $0x430] sm:$0xff]
  %v3415 = vld [vmem:[%s3 + $0x438] sm:$0xff]
  %v3416 = vld [vmem:[%s3 + $0x440] sm:$0xff]
  %v3417 = vld [vmem:[%s3 + $0x448] sm:$0xff]
  %v3418 = vld [vmem:[%s3 + $0x450] sm:$0xff]
  %v3419 = vld [vmem:[%s3 + $0x458] sm:$0xff]
  %v3420 = vld [vmem:[%s3 + $0x460] sm:$0xff]
  %v3421 = vld [vmem:[%s3 + $0x468] sm:$0xff]
  %v3422 = vld [vmem:[%s3 + $0x470] sm:$0xff]
  %v3423 = vld [vmem:[%s3 + $0x478] sm:$0xff]
  %v3424 = vld [vmem:[%s3 + $0x480] sm:$0xff]
  %v3425 = vld [vmem:[%s3 + $0x488] sm:$0xff]
  %v3426 = vld [vmem:[%s3 + $0x490] sm:$0xff]
  %v3427 = vld [vmem:[%s3 + $0x498] sm:$0xff]
  %v3428 = vld [vmem:[%s3 + $0x4a0] sm:$0xff]
  %v3429 = vld [vmem:[%s3 + $0x4a8] sm:$0xff]
  %v3430 = vld [vmem:[%s3 + $0x4b0] sm:$0xff]
  %v3431 = vld [vmem:[%s3 + $0x4b8] sm:$0xff]
  %v3432 = vld [vmem:[%s3 + $0x4c0] sm:$0xff]
  %v3433 = vld [vmem:[%s3 + $0x4c8] sm:$0xff]
  %v3434 = vld [vmem:[%s3 + $0x4d0] sm:$0xff]
  %v3435 = vld [vmem:[%s3 + $0x4d8] sm:$0xff]
  %v3436 = vld [vmem:[%s3 + $0x4e0] sm:$0xff]
  %v3437 = vld [vmem:[%s3 + $0x4e8] sm:$0xff]
  %v3438 = vld [vmem:[%s3 + $0x4f0] sm:$0xff]
  %v3439 = vld [vmem:[%s3 + $0x4f8] sm:$0xff]
  %v3440 = vld [vmem:[%s3 + $0x500] sm:$0xff]
  %v3441 = vld [vmem:[%s3 + $0x508] sm:$0xff]
  %v3442 = vld [vmem:[%s3 + $0x510] sm:$0xff]
  %v3443 = vld [vmem:[%s3 + $0x518] sm:$0xff]
  %v3444 = vld [vmem:[%s3 + $0x520] sm:$0xff]
  %v3445 = vld [vmem:[%s3 + $0x528] sm:$0xff]
  %v3446 = vld [vmem:[%s3 + $0x530] sm:$0xff]
  %v3447 = vld [vmem:[%s3 + $0x538] sm:$0xff]
  %v3448 = vld [vmem:[%s3 + $0x540] sm:$0xff]
  %v3449 = vld [vmem:[%s3 + $0x548] sm:$0xff]
  %v3450 = vld [vmem:[%s3 + $0x550] sm:$0xff]
  %v3451 = vld [vmem:[%s3 + $0x558] sm:$0xff]
  %v3452 = vld [vmem:[%s3 + $0x560] sm:$0xff]
  %v3453 = vld [vmem:[%s3 + $0x568] sm:$0xff]
  %v3454 = vld [vmem:[%s3 + $0x570] sm:$0xff]
  %v3455 = vld [vmem:[%s3 + $0x578] sm:$0xff]
  %v3456 = vld [vmem:[%s3 + $0x580] sm:$0xff]
  %v3457 = vld [vmem:[%s3 + $0x588] sm:$0xff]
  %v3458 = vld [vmem:[%s3 + $0x590] sm:$0xff]
  %v3459 = vld [vmem:[%s3 + $0x598] sm:$0xff]
  %v3460 = vld [vmem:[%s3 + $0x5a0] sm:$0xff]
  %v3461 = vld [vmem:[%s3 + $0x5a8] sm:$0xff]
  %v3462 = vld [vmem:[%s3 + $0x5b0] sm:$0xff]
  %v3463 = vld [vmem:[%s3 + $0x5b8] sm:$0xff]
  %v3464 = vld [vmem:[%s3 + $0x5c0] sm:$0xff]
  %v3465 = vld [vmem:[%s3 + $0x5c8] sm:$0xff]
  %v3466 = vld [vmem:[%s3 + $0x5d0] sm:$0xff]
  %v3467 = vld [vmem:[%s3 + $0x5d8] sm:$0xff]
  %v3468 = vld [vmem:[%s3 + $0x5e0] sm:$0xff]
  %v3469 = vld [vmem:[%s3 + $0x5e8] sm:$0xff]
  %v3470 = vld [vmem:[%s3 + $0x5f0] sm:$0xff]
  %v3471 = vld [vmem:[%s3 + $0x5f8] sm:$0xff]
  %v3472 = vld [vmem:[%s3 + $0x600] sm:$0xff]
  %v3473 = vld [vmem:[%s3 + $0x608] sm:$0xff]
  %v3474 = vld [vmem:[%s3 + $0x610] sm:$0xff]
  %v3475 = vld [vmem:[%s3 + $0x618] sm:$0xff]
  %v3476 = vld [vmem:[%s3 + $0x620] sm:$0xff]
  %v3477 = vld [vmem:[%s3 + $0x628] sm:$0xff]
  %v3478 = vld [vmem:[%s3 + $0x630] sm:$0xff]
  %v3479 = vld [vmem:[%s3 + $0x638] sm:$0xff]
  %v3480 = vld [vmem:[%s3 + $0x640] sm:$0xff]
  %v3481 = vld [vmem:[%s3 + $0x648] sm:$0xff]
  %v3482 = vld [vmem:[%s3 + $0x650] sm:$0xff]
  %v3483 = vld [vmem:[%s3 + $0x658] sm:$0xff]
  %v3484 = vld [vmem:[%s3 + $0x660] sm:$0xff]
  %v3485 = vld [vmem:[%s3 + $0x668] sm:$0xff]
  %v3486 = vld [vmem:[%s3 + $0x670] sm:$0xff]
  %v3487 = vld [vmem:[%s3 + $0x678] sm:$0xff]
  %v3488 = vld [vmem:[%s3 + $0x680] sm:$0xff]
  %v3489 = vld [vmem:[%s3 + $0x688] sm:$0xff]
  %v3490 = vld [vmem:[%s3 + $0x690] sm:$0xff]
  %v3491 = vld [vmem:[%s3 + $0x698] sm:$0xff]
  %v3492 = vld [vmem:[%s3 + $0x6a0] sm:$0xff]
  %v3493 = vld [vmem:[%s3 + $0x6a8] sm:$0xff]
  %v3494 = vld [vmem:[%s3 + $0x6b0] sm:$0xff]
  %v3495 = vld [vmem:[%s3 + $0x6b8] sm:$0xff]
  %v3496 = vld [vmem:[%s3 + $0x6c0] sm:$0xff]
  %v3497 = vld [vmem:[%s3 + $0x6c8] sm:$0xff]
  %v3498 = vld [vmem:[%s3 + $0x6d0] sm:$0xff]
  %v3499 = vld [vmem:[%s3 + $0x6d8] sm:$0xff]
  %v3500 = vld [vmem:[%s3 + $0x6e0] sm:$0xff]
  %v3501 = vld [vmem:[%s3 + $0x6e8] sm:$0xff]
  %v3502 = vld [vmem:[%s3 + $0x6f0] sm:$0xff]
  %v3503 = vld [vmem:[%s3 + $0x6f8] sm:$0xff]
  %v3504 = vld [vmem:[%s3 + $0x700] sm:$0xff]
  %v3505 = vld [vmem:[%s3 + $0x708] sm:$0xff]
  %v3506 = vld [vmem:[%s3 + $0x710] sm:$0xff]
  %v3507 = vld [vmem:[%s3 + $0x718] sm:$0xff]
  %v3508 = vld [vmem:[%s3 + $0x720] sm:$0xff]
  %v3509 = vld [vmem:[%s3 + $0x728] sm:$0xff]
  %v3510 = vld [vmem:[%s3 + $0x730] sm:$0xff]
  %v3511 = vld [vmem:[%s3 + $0x738] sm:$0xff]
  %v3512 = vld [vmem:[%s3 + $0x740] sm:$0xff]
  %v3513 = vld [vmem:[%s3 + $0x748] sm:$0xff]
  %v3514 = vld [vmem:[%s3 + $0x750] sm:$0xff]
  %v3515 = vld [vmem:[%s3 + $0x758] sm:$0xff]
  %v3516 = vld [vmem:[%s3 + $0x760] sm:$0xff]
  %v3517 = vld [vmem:[%s3 + $0x768] sm:$0xff]
  %v3518 = vld [vmem:[%s3 + $0x770] sm:$0xff]
  %v3519 = vld [vmem:[%s3 + $0x778] sm:$0xff]
  %v3520 = vld [vmem:[%s3 + $0x780] sm:$0xff]
  %v3521 = vld [vmem:[%s3 + $0x788] sm:$0xff]
  %v3522 = vld [vmem:[%s3 + $0x790] sm:$0xff]
  %v3523 = vld [vmem:[%s3 + $0x798] sm:$0xff]
  %v3524 = vld [vmem:[%s3 + $0x7a0] sm:$0xff]
  %v3525 = vld [vmem:[%s3 + $0x7a8] sm:$0xff]
  %v3526 = vld [vmem:[%s3 + $0x7b0] sm:$0xff]
  %v3527 = vld [vmem:[%s3 + $0x7b8] sm:$0xff]
  %v3528 = vld [vmem:[%s3 + $0x7c0] sm:$0xff]
  %v3529 = vld [vmem:[%s3 + $0x7c8] sm:$0xff]
  %v3530 = vld [vmem:[%s3 + $0x7d0] sm:$0xff]
  %v3531 = vld [vmem:[%s3 + $0x7d8] sm:$0xff]
  %v3532 = vld [vmem:[%s3 + $0x7e0] sm:$0xff]
  %v3533 = vld [vmem:[%s3 + $0x7e8] sm:$0xff]
  %v3534 = vld [vmem:[%s3 + $0x7f0] sm:$0xff]
  %v3535 = vld [vmem:[%s3 + $0x7f8] sm:$0xff]
  %v3536 = vld [vmem:[%s3 + $0x800] sm:$0xff]
  %v3537 = vld [vmem:[%s3 + $0x808] sm:$0xff]
  %v3538 = vld [vmem:[%s3 + $0x810] sm:$0xff]
  %v3539 = vld [vmem:[%s3 + $0x818] sm:$0xff]
  %v3540 = vld [vmem:[%s3 + $0x820] sm:$0xff]
  %v3541 = vld [vmem:[%s3 + $0x828] sm:$0xff]
  %v3542 = vld [vmem:[%s3 + $0x830] sm:$0xff]
  %v3543 = vld [vmem:[%s3 + $0x838] sm:$0xff]
  %v3544 = vld [vmem:[%s3 + $0x840] sm:$0xff]
  %v3545 = vld [vmem:[%s3 + $0x848] sm:$0xff]
  %v3546 = vld [vmem:[%s3 + $0x850] sm:$0xff]
  %v3547 = vld [vmem:[%s3 + $0x858] sm:$0xff]
  %v3548 = vld [vmem:[%s3 + $0x860] sm:$0xff]
  %v3549 = vld [vmem:[%s3 + $0x868] sm:$0xff]
  %v3550 = vld [vmem:[%s3 + $0x870] sm:$0xff]
  %v3551 = vld [vmem:[%s3 + $0x878] sm:$0xff]
  %v3552 = vld [vmem:[%s3 + $0x880] sm:$0xff]
  %v3553 = vld [vmem:[%s3 + $0x888] sm:$0xff]
  %v3554 = vld [vmem:[%s3 + $0x890] sm:$0xff]
  %v3555 = vld [vmem:[%s3 + $0x898] sm:$0xff]
  %v3556 = vld [vmem:[%s3 + $0x8a0] sm:$0xff]
  %v3557 = vld [vmem:[%s3 + $0x8a8] sm:$0xff]
  %v3558 = vld [vmem:[%s3 + $0x8b0] sm:$0xff]
  %v3559 = vld [vmem:[%s3 + $0x8b8] sm:$0xff]
  %v3560 = vld [vmem:[%s3 + $0x8c0] sm:$0xff]
  %v3561 = vld [vmem:[%s3 + $0x8c8] sm:$0xff]
  %v3562 = vld [vmem:[%s3 + $0x8d0] sm:$0xff]
  %v3563 = vld [vmem:[%s3 + $0x8d8] sm:$0xff]
  %v3564 = vld [vmem:[%s3 + $0x8e0] sm:$0xff]
  %v3565 = vld [vmem:[%s3 + $0x8e8] sm:$0xff]
  %v3566 = vld [vmem:[%s3 + $0x8f0] sm:$0xff]
  %v3567 = vld [vmem:[%s3 + $0x8f8] sm:$0xff]
  %v3568 = vld [vmem:[%s3 + $0x900] sm:$0xff]
  %v3569 = vld [vmem:[%s3 + $0x908] sm:$0xff]
  %v3570 = vld [vmem:[%s3 + $0x910] sm:$0xff]
  %v3571 = vld [vmem:[%s3 + $0x918] sm:$0xff]
  %v3572 = vld [vmem:[%s3 + $0x920] sm:$0xff]
  %v3573 = vld [vmem:[%s3 + $0x928] sm:$0xff]
  %v3574 = vld [vmem:[%s3 + $0x930] sm:$0xff]
  %v3575 = vld [vmem:[%s3 + $0x938] sm:$0xff]
  %v3576 = vld [vmem:[%s3 + $0x940] sm:$0xff]
  %v3577 = vld [vmem:[%s3 + $0x948] sm:$0xff]
  %v3578 = vld [vmem:[%s3 + $0x950] sm:$0xff]
  %v3579 = vld [vmem:[%s3 + $0x958] sm:$0xff]
  %v3580 = vld [vmem:[%s3 + $0x960] sm:$0xff]
  %v3581 = vld [vmem:[%s3 + $0x968] sm:$0xff]
  %v3582 = vld [vmem:[%s3 + $0x970] sm:$0xff]
  %v3583 = vld [vmem:[%s3 + $0x978] sm:$0xff]
  %v3584 = vld [vmem:[%s3 + $0x980] sm:$0xff]
  %v3585 = vld [vmem:[%s3 + $0x988] sm:$0xff]
  %v3586 = vld [vmem:[%s3 + $0x990] sm:$0xff]
  %v3587 = vld [vmem:[%s3 + $0x998] sm:$0xff]
  %v3588 = vld [vmem:[%s3 + $0x9a0] sm:$0xff]
  %v3589 = vld [vmem:[%s3 + $0x9a8] sm:$0xff]
  %v3590 = vld [vmem:[%s3 + $0x9b0] sm:$0xff]
  %v3591 = vld [vmem:[%s3 + $0x9b8] sm:$0xff]
  %v3592 = vld [vmem:[%s3 + $0x9c0] sm:$0xff]
  %v3593 = vld [vmem:[%s3 + $0x9c8] sm:$0xff]
  %v3594 = vld [vmem:[%s3 + $0x9d0] sm:$0xff]
  %v3595 = vld [vmem:[%s3 + $0x9d8] sm:$0xff]
  %v3596 = vld [vmem:[%s3 + $0x9e0] sm:$0xff]
  %v3597 = vld [vmem:[%s3 + $0x9e8] sm:$0xff]
  %v3598 = vld [vmem:[%s3 + $0x9f0] sm:$0xff]
  %v3599 = vld [vmem:[%s3 + $0x9f8] sm:$0xff]
  %v3600 = vld [vmem:[%s3 + $0xa00] sm:$0xff]
  %v3601 = vld [vmem:[%s3 + $0xa08] sm:$0xff]
  %v3602 = vld [vmem:[%s3 + $0xa10] sm:$0xff]
  %v3603 = vld [vmem:[%s3 + $0xa18] sm:$0xff]
  %v3604 = vld [vmem:[%s3 + $0xa20] sm:$0xff]
  %v3605 = vld [vmem:[%s3 + $0xa28] sm:$0xff]
  %v3606 = vld [vmem:[%s3 + $0xa30] sm:$0xff]
  %v3607 = vld [vmem:[%s3 + $0xa38] sm:$0xff]
  %v3608 = vld [vmem:[%s3 + $0xa40] sm:$0xff]
  %v3609 = vld [vmem:[%s3 + $0xa48] sm:$0xff]
  %v3610 = vld [vmem:[%s3 + $0xa50] sm:$0xff]
  %v3611 = vld [vmem:[%s3 + $0xa58] sm:$0xff]
  %v3612 = vld [vmem:[%s3 + $0xa60] sm:$0xff]
  %v3613 = vld [vmem:[%s3 + $0xa68] sm:$0xff]
  %v3614 = vld [vmem:[%s3 + $0xa70] sm:$0xff]
  %v3615 = vld [vmem:[%s3 + $0xa78] sm:$0xff]
  %v3616 = vld [vmem:[%s3 + $0xa80] sm:$0xff]
  %v3617 = vld [vmem:[%s3 + $0xa88] sm:$0xff]
  %v3618 = vld [vmem:[%s3 + $0xa90] sm:$0xff]
  %v3619 = vld [vmem:[%s3 + $0xa98] sm:$0xff]
  %v3620 = vld [vmem:[%s3 + $0xaa0] sm:$0xff]
  %v3621 = vld [vmem:[%s3 + $0xaa8] sm:$0xff]
  %v3622 = vld [vmem:[%s3 + $0xab0] sm:$0xff]
  %v3623 = vld [vmem:[%s3 + $0xab8] sm:$0xff]
  %v3624 = vld [vmem:[%s3 + $0xac0] sm:$0xff]
  %v3625 = vld [vmem:[%s3 + $0xac8] sm:$0xff]
  %v3626 = vld [vmem:[%s3 + $0xad0] sm:$0xff]
  %v3627 = vld [vmem:[%s3 + $0xad8] sm:$0xff]
  %v3628 = vld [vmem:[%s3 + $0xae0] sm:$0xff]
  %v3629 = vld [vmem:[%s3 + $0xae8] sm:$0xff]
  %v3630 = vld [vmem:[%s3 + $0xaf0] sm:$0xff]
  %v3631 = vld [vmem:[%s3 + $0xaf8] sm:$0xff]
  %v3632 = vld [vmem:[%s3 + $0xb00] sm:$0xff]
  %v3633 = vld [vmem:[%s3 + $0xb08] sm:$0xff]
  %v3634 = vld [vmem:[%s3 + $0xb10] sm:$0xff]
  %v3635 = vld [vmem:[%s3 + $0xb18] sm:$0xff]
  %v3636 = vld [vmem:[%s3 + $0xb20] sm:$0xff]
  %v3637 = vld [vmem:[%s3 + $0xb28] sm:$0xff]
  %v3638 = vld [vmem:[%s3 + $0xb30] sm:$0xff]
  %v3639 = vld [vmem:[%s3 + $0xb38] sm:$0xff]
  %v3640 = vld [vmem:[%s3 + $0xb40] sm:$0xff]
  %v3641 = vld [vmem:[%s3 + $0xb48] sm:$0xff]
  %v3642 = vld [vmem:[%s3 + $0xb50] sm:$0xff]
  %v3643 = vld [vmem:[%s3 + $0xb58] sm:$0xff]
  %v3644 = vld [vmem:[%s3 + $0xb60] sm:$0xff]
  %v3645 = vld [vmem:[%s3 + $0xb68] sm:$0xff]
  %v3646 = vld [vmem:[%s3 + $0xb70] sm:$0xff]
  %v3647 = vld [vmem:[%s3 + $0xb78] sm:$0xff]
  %v3648 = vld [vmem:[%s3 + $0xb80] sm:$0xff]
  %v3649 = vld [vmem:[%s3 + $0xb88] sm:$0xff]
  %v3650 = vld [vmem:[%s3 + $0xb90] sm:$0xff]
  %v3651 = vld [vmem:[%s3 + $0xb98] sm:$0xff]
  %v3652 = vld [vmem:[%s3 + $0xba0] sm:$0xff]
  %v3653 = vld [vmem:[%s3 + $0xba8] sm:$0xff]
  %v3654 = vld [vmem:[%s3 + $0xbb0] sm:$0xff]
  %v3655 = vld [vmem:[%s3 + $0xbb8] sm:$0xff]
  %v3656 = vld [vmem:[%s3 + $0xbc0] sm:$0xff]
  %v3657 = vld [vmem:[%s3 + $0xbc8] sm:$0xff]
  %v3658 = vld [vmem:[%s3 + $0xbd0] sm:$0xff]
  %v3659 = vld [vmem:[%s3 + $0xbd8] sm:$0xff]
  %v3660 = vld [vmem:[%s3 + $0xbe0] sm:$0xff]
  %v3661 = vld [vmem:[%s3 + $0xbe8] sm:$0xff]
  %v3662 = vld [vmem:[%s3 + $0xbf0] sm:$0xff]
  %v3663 = vld [vmem:[%s3 + $0xbf8] sm:$0xff]
  %v3664 = vld [vmem:[%s3 + $0xc00] sm:$0xff]
  %v3665 = vld [vmem:[%s3 + $0xc08] sm:$0xff]
  %v3666 = vld [vmem:[%s3 + $0xc10] sm:$0xff]
  %v3667 = vld [vmem:[%s3 + $0xc18] sm:$0xff]
  %v3668 = vld [vmem:[%s3 + $0xc20] sm:$0xff]
  %v3669 = vld [vmem:[%s3 + $0xc28] sm:$0xff]
  %v3670 = vld [vmem:[%s3 + $0xc30] sm:$0xff]
  %v3671 = vld [vmem:[%s3 + $0xc38] sm:$0xff]
  %v3672 = vld [vmem:[%s3 + $0xc40] sm:$0xff]
  %v3673 = vld [vmem:[%s3 + $0xc48] sm:$0xff]
  %v3674 = vld [vmem:[%s3 + $0xc50] sm:$0xff]
  %v3675 = vld [vmem:[%s3 + $0xc58] sm:$0xff]
  %v3676 = vld [vmem:[%s3 + $0xc60] sm:$0xff]
  %v3677 = vld [vmem:[%s3 + $0xc68] sm:$0xff]
  %v3678 = vld [vmem:[%s3 + $0xc70] sm:$0xff]
  %v3679 = vld [vmem:[%s3 + $0xc78] sm:$0xff]
  %v3680 = vld [vmem:[%s3 + $0xc80] sm:$0xff]
  %v3681 = vld [vmem:[%s3 + $0xc88] sm:$0xff]
  %v3682 = vld [vmem:[%s3 + $0xc90] sm:$0xff]
  %v3683 = vld [vmem:[%s3 + $0xc98] sm:$0xff]
  %v3684 = vld [vmem:[%s3 + $0xca0] sm:$0xff]
  %v3685 = vld [vmem:[%s3 + $0xca8] sm:$0xff]
  %v3686 = vld [vmem:[%s3 + $0xcb0] sm:$0xff]
  %v3687 = vld [vmem:[%s3 + $0xcb8] sm:$0xff]
  %v3688 = vld [vmem:[%s3 + $0xcc0] sm:$0xff]
  %v3689 = vld [vmem:[%s3 + $0xcc8] sm:$0xff]
  %v3690 = vld [vmem:[%s3 + $0xcd0] sm:$0xff]
  %v3691 = vld [vmem:[%s3 + $0xcd8] sm:$0xff]
  %v3692 = vld [vmem:[%s3 + $0xce0] sm:$0xff]
  %v3693 = vld [vmem:[%s3 + $0xce8] sm:$0xff]
  %v3694 = vld [vmem:[%s3 + $0xcf0] sm:$0xff]
  %v3695 = vld [vmem:[%s3 + $0xcf8] sm:$0xff]
  %v3696 = vld [vmem:[%s3 + $0xd00] sm:$0xff]
  %v3697 = vld [vmem:[%s3 + $0xd08] sm:$0xff]
  %v3698 = vld [vmem:[%s3 + $0xd10] sm:$0xff]
  %v3699 = vld [vmem:[%s3 + $0xd18] sm:$0xff]
  %v3700 = vld [vmem:[%s3 + $0xd20] sm:$0xff]
  %v3701 = vld [vmem:[%s3 + $0xd28] sm:$0xff]
  %v3702 = vld [vmem:[%s3 + $0xd30] sm:$0xff]
  %v3703 = vld [vmem:[%s3 + $0xd38] sm:$0xff]
  %v3704 = vld [vmem:[%s3 + $0xd40] sm:$0xff]
  %v3705 = vld [vmem:[%s3 + $0xd48] sm:$0xff]
  %v3706 = vld [vmem:[%s3 + $0xd50] sm:$0xff]
  %v3707 = vld [vmem:[%s3 + $0xd58] sm:$0xff]
  %v3708 = vld [vmem:[%s3 + $0xd60] sm:$0xff]
  %v3709 = vld [vmem:[%s3 + $0xd68] sm:$0xff]
  %v3710 = vld [vmem:[%s3 + $0xd70] sm:$0xff]
  %v3711 = vld [vmem:[%s3 + $0xd78] sm:$0xff]
  %v3712 = vld [vmem:[%s3 + $0xd80] sm:$0xff]
  %v3713 = vld [vmem:[%s3 + $0xd88] sm:$0xff]
  %v3714 = vld [vmem:[%s3 + $0xd90] sm:$0xff]
  %v3715 = vld [vmem:[%s3 + $0xd98] sm:$0xff]
  %v3716 = vld [vmem:[%s3 + $0xda0] sm:$0xff]
  %v3717 = vld [vmem:[%s3 + $0xda8] sm:$0xff]
  %v3718 = vld [vmem:[%s3 + $0xdb0] sm:$0xff]
  %v3719 = vld [vmem:[%s3 + $0xdb8] sm:$0xff]
  %v3720 = vld [vmem:[%s3 + $0xdc0] sm:$0xff]
  %v3721 = vld [vmem:[%s3 + $0xdc8] sm:$0xff]
  %v3722 = vld [vmem:[%s3 + $0xdd0] sm:$0xff]
  %v3723 = vld [vmem:[%s3 + $0xdd8] sm:$0xff]
  %v3724 = vld [vmem:[%s3 + $0xde0] sm:$0xff]
  %v3725 = vld [vmem:[%s3 + $0xde8] sm:$0xff]
  %v3726 = vld [vmem:[%s3 + $0xdf0] sm:$0xff]
  %v3727 = vld [vmem:[%s3 + $0xdf8] sm:$0xff]
  %v3728 = vld [vmem:[%s4] sm:$0x1]
  %v3730 = vlaneseq
  %v3731 = vshrl.u32 %v3730, 7
  %v3732 = vsub.s32 0, %v3731
  %v3733 = vrot.slane %v3728, %v3732
  %3735 = vmatprep.subr.mxu0 0.0
  %3736 = vmatpush1.msra.mxu0 %v3280
  %3737 = vmatprep.subr.mxu0 0.0
  %3738 = vmatpush1.msra.mxu0 %v3281
  %3739 = vmatprep.subr.mxu0 0.0
  %3740 = vmatpush1.msra.mxu0 %v3282
  %3741 = vmatprep.subr.mxu0 0.0
  %3742 = vmatpush1.msra.mxu0 %v3283
  %3743 = vmatprep.subr.mxu0 0.0
  %3744 = vmatpush1.msra.mxu0 %v3284
  %3745 = vmatprep.subr.mxu0 0.0
  %3746 = vmatpush1.msra.mxu0 %v3285
  %3747 = vmatprep.subr.mxu0 0.0
  %3748 = vmatpush1.msra.mxu0 %v3286
  %3749 = vmatprep.subr.mxu0 0.0
  %3750 = vmatpush1.msra.mxu0 %v3287
  %3751 = vmatprep.subr.mxu0 0.0
  %3752 = vmatpush1.msra.mxu0 %v3288
  %3753 = vmatprep.subr.mxu0 0.0
  %3754 = vmatpush1.msra.mxu0 %v3289
  %3755 = vmatprep.subr.mxu0 0.0
  %3756 = vmatpush1.msra.mxu0 %v3290
  %3757 = vmatprep.subr.mxu0 0.0
  %3758 = vmatpush1.msra.mxu0 %v3291
  %3759 = vmatprep.subr.mxu0 0.0
  %3760 = vmatpush1.msra.mxu0 %v3292
  %3761 = vmatprep.subr.mxu0 0.0
  %3762 = vmatpush1.msra.mxu0 %v3293
  %3763 = vmatprep.subr.mxu0 0.0
  %3764 = vmatpush1.msra.mxu0 %v3294
  %3765 = vmatprep.subr.mxu0 0.0
  %3766 = vmatpush1.msra.mxu0 %v3295
  %3767 = vmatprep.subr.mxu0 0.0
  %3768 = vmatpush1.msra.mxu0 %v3296
  %3769 = vmatprep.subr.mxu0 0.0
  %3770 = vmatpush1.msra.mxu0 %v3297
  %3771 = vmatprep.subr.mxu0 0.0
  %3772 = vmatpush1.msra.mxu0 %v3298
  %3773 = vmatprep.subr.mxu0 0.0
  %3774 = vmatpush1.msra.mxu0 %v3299
  %3775 = vmatprep.subr.mxu0 0.0
  %3776 = vmatpush1.msra.mxu0 %v3300
  %3777 = vmatprep.subr.mxu0 0.0
  %3778 = vmatpush1.msra.mxu0 %v3301
  %3779 = vmatprep.subr.mxu0 0.0
  %3780 = vmatpush1.msra.mxu0 %v3302
  %3781 = vmatprep.subr.mxu0 0.0
  %3782 = vmatpush1.msra.mxu0 %v3303
  %3783 = vmatprep.subr.mxu0 0.0
  %3784 = vmatpush1.msra.mxu0 %v3304
  %3785 = vmatprep.subr.mxu0 0.0
  %3786 = vmatpush1.msra.mxu0 %v3305
  %3787 = vmatprep.subr.mxu0 0.0
  %3788 = vmatpush1.msra.mxu0 %v3306
  %3789 = vmatprep.subr.mxu0 0.0
  %3790 = vmatpush1.msra.mxu0 %v3307
  %3791 = vmatprep.subr.mxu0 0.0
  %3792 = vmatpush1.msra.mxu0 %v3308
  %3793 = vmatprep.subr.mxu0 0.0
  %3794 = vmatpush1.msra.mxu0 %v3309
  %3795 = vmatprep.subr.mxu0 0.0
  %3796 = vmatpush1.msra.mxu0 %v3310
  %3797 = vmatprep.subr.mxu0 0.0
  %3798 = vmatpush1.msra.mxu0 %v3311
  %3799 = vmatprep.mubr.f32.mxu0 %v3253
  %3800 = vmatmul.mubr.f32.gmra.mrb[0].mxu0 %v3252
  %v3801 = vpop.f32.mrb[0].mxu0
  %v3802 = vadd.f32 %v3733, %v3801
  %v3803 = vpop.f32.mrb[0].mxu0
  %3804 = vdwg.mxu0
  %3805 = vmatprep.subr.mxu0 0.0
  %3806 = vmatpush1.msra.mxu0 %v3312
  %3807 = vmatprep.subr.mxu0 0.0
  %3808 = vmatpush1.msra.mxu0 %v3313
  %3809 = vmatprep.subr.mxu0 0.0
  %3810 = vmatpush1.msra.mxu0 %v3314
  %3811 = vmatprep.subr.mxu0 0.0
  %3812 = vmatpush1.msra.mxu0 %v3315
  %3813 = vmatprep.subr.mxu0 0.0
  %3814 = vmatpush1.msra.mxu0 %v3316
  %3815 = vmatprep.subr.mxu0 0.0
  %3816 = vmatpush1.msra.mxu0 %v3317
  %3817 = vmatprep.subr.mxu0 0.0
  %3818 = vmatpush1.msra.mxu0 %v3318
  %3819 = vmatprep.subr.mxu0 0.0
  %3820 = vmatpush1.msra.mxu0 %v3319
  %3821 = vmatprep.subr.mxu0 0.0
  %3822 = vmatpush1.msra.mxu0 %v3320
  %3823 = vmatprep.subr.mxu0 0.0
  %3824 = vmatpush1.msra.mxu0 %v3321
  %3825 = vmatprep.subr.mxu0 0.0
  %3826 = vmatpush1.msra.mxu0 %v3322
  %3827 = vmatprep.subr.mxu0 0.0
  %3828 = vmatpush1.msra.mxu0 %v3323
  %3829 = vmatprep.subr.mxu0 0.0
  %3830 = vmatpush1.msra.mxu0 %v3324
  %3831 = vmatprep.subr.mxu0 0.0
  %3832 = vmatpush1.msra.mxu0 %v3325
  %3833 = vmatprep.subr.mxu0 0.0
  %3834 = vmatpush1.msra.mxu0 %v3326
  %3835 = vmatprep.subr.mxu0 0.0
  %3836 = vmatpush1.msra.mxu0 %v3327
  %3837 = vmatprep.subr.mxu0 0.0
  %3838 = vmatpush1.msra.mxu0 %v3328
  %3839 = vmatprep.subr.mxu0 0.0
  %3840 = vmatpush1.msra.mxu0 %v3329
  %3841 = vmatprep.subr.mxu0 0.0
  %3842 = vmatpush1.msra.mxu0 %v3330
  %3843 = vmatprep.subr.mxu0 0.0
  %3844 = vmatpush1.msra.mxu0 %v3331
  %3845 = vmatprep.subr.mxu0 0.0
  %3846 = vmatpush1.msra.mxu0 %v3332
  %3847 = vmatprep.subr.mxu0 0.0
  %3848 = vmatpush1.msra.mxu0 %v3333
  %3849 = vmatprep.subr.mxu0 0.0
  %3850 = vmatpush1.msra.mxu0 %v3334
  %3851 = vmatprep.subr.mxu0 0.0
  %3852 = vmatpush1.msra.mxu0 %v3335
  %3853 = vmatprep.subr.mxu0 0.0
  %3854 = vmatpush1.msra.mxu0 %v3336
  %3855 = vmatprep.subr.mxu0 0.0
  %3856 = vmatpush1.msra.mxu0 %v3337
  %3857 = vmatprep.subr.mxu0 0.0
  %3858 = vmatpush1.msra.mxu0 %v3338
  %3859 = vmatprep.subr.mxu0 0.0
  %3860 = vmatpush1.msra.mxu0 %v3339
  %3861 = vmatprep.subr.mxu0 0.0
  %3862 = vmatpush1.msra.mxu0 %v3340
  %3863 = vmatprep.subr.mxu0 0.0
  %3864 = vmatpush1.msra.mxu0 %v3341
  %3865 = vmatprep.subr.mxu0 0.0
  %3866 = vmatpush1.msra.mxu0 %v3342
  %3867 = vmatprep.subr.mxu0 0.0
  %3868 = vmatpush1.msra.mxu0 %v3343
  %3869 = vmatprep.mubr.f32.mxu0 %v3255
  %3870 = vmatmul.mubr.f32.gmra.mrb[0].mxu0 %v3254
  %v3871 = vpop.f32.mrb[0].mxu0
  %v3872 = vadd.f32 %v3802, %v3871
  %v3873 = vpop.f32.mrb[0].mxu0
  %3874 = vdwg.mxu0
  %3875 = vmatprep.subr.mxu0 0.0
  %3876 = vmatpush1.msra.mxu0 %v3344
  %3877 = vmatprep.subr.mxu0 0.0
  %3878 = vmatpush1.msra.mxu0 %v3345
  %3879 = vmatprep.subr.mxu0 0.0
  %3880 = vmatpush1.msra.mxu0 %v3346
  %3881 = vmatprep.subr.mxu0 0.0
  %3882 = vmatpush1.msra.mxu0 %v3347
  %3883 = vmatprep.subr.mxu0 0.0
  %3884 = vmatpush1.msra.mxu0 %v3348
  %3885 = vmatprep.subr.mxu0 0.0
  %3886 = vmatpush1.msra.mxu0 %v3349
  %3887 = vmatprep.subr.mxu0 0.0
  %3888 = vmatpush1.msra.mxu0 %v3350
  %3889 = vmatprep.subr.mxu0 0.0
  %3890 = vmatpush1.msra.mxu0 %v3351
  %3891 = vmatprep.subr.mxu0 0.0
  %3892 = vmatpush1.msra.mxu0 %v3352
  %3893 = vmatprep.subr.mxu0 0.0
  %3894 = vmatpush1.msra.mxu0 %v3353
  %3895 = vmatprep.subr.mxu0 0.0
  %3896 = vmatpush1.msra.mxu0 %v3354
  %3897 = vmatprep.subr.mxu0 0.0
  %3898 = vmatpush1.msra.mxu0 %v3355
  %3899 = vmatprep.subr.mxu0 0.0
  %3900 = vmatpush1.msra.mxu0 %v3356
  %3901 = vmatprep.subr.mxu0 0.0
  %3902 = vmatpush1.msra.mxu0 %v3357
  %3903 = vmatprep.subr.mxu0 0.0
  %3904 = vmatpush1.msra.mxu0 %v3358
  %3905 = vmatprep.subr.mxu0 0.0
  %3906 = vmatpush1.msra.mxu0 %v3359
  %3907 = vmatprep.subr.mxu0 0.0
  %3908 = vmatpush1.msra.mxu0 %v3360
  %3909 = vmatprep.subr.mxu0 0.0
  %3910 = vmatpush1.msra.mxu0 %v3361
  %3911 = vmatprep.subr.mxu0 0.0
  %3912 = vmatpush1.msra.mxu0 %v3362
  %3913 = vmatprep.subr.mxu0 0.0
  %3914 = vmatpush1.msra.mxu0 %v3363
  %3915 = vmatprep.subr.mxu0 0.0
  %3916 = vmatpush1.msra.mxu0 %v3364
  %3917 = vmatprep.subr.mxu0 0.0
  %3918 = vmatpush1.msra.mxu0 %v3365
  %3919 = vmatprep.subr.mxu0 0.0
  %3920 = vmatpush1.msra.mxu0 %v3366
  %3921 = vmatprep.subr.mxu0 0.0
  %3922 = vmatpush1.msra.mxu0 %v3367
  %3923 = vmatprep.subr.mxu0 0.0
  %3924 = vmatpush1.msra.mxu0 %v3368
  %3925 = vmatprep.subr.mxu0 0.0
  %3926 = vmatpush1.msra.mxu0 %v3369
  %3927 = vmatprep.subr.mxu0 0.0
  %3928 = vmatpush1.msra.mxu0 %v3370
  %3929 = vmatprep.subr.mxu0 0.0
  %3930 = vmatpush1.msra.mxu0 %v3371
  %3931 = vmatprep.subr.mxu0 0.0
  %3932 = vmatpush1.msra.mxu0 %v3372
  %3933 = vmatprep.subr.mxu0 0.0
  %3934 = vmatpush1.msra.mxu0 %v3373
  %3935 = vmatprep.subr.mxu0 0.0
  %3936 = vmatpush1.msra.mxu0 %v3374
  %3937 = vmatprep.subr.mxu0 0.0
  %3938 = vmatpush1.msra.mxu0 %v3375
  %3939 = vmatprep.mubr.f32.mxu0 %v3257
  %3940 = vmatmul.mubr.f32.gmra.mrb[0].mxu0 %v3256
  %v3941 = vpop.f32.mrb[0].mxu0
  %v3942 = vadd.f32 %v3872, %v3941
  %v3943 = vpop.f32.mrb[0].mxu0
  %3944 = vdwg.mxu0
  %3945 = vmatprep.subr.mxu0 0.0
  %3946 = vmatpush1.msra.mxu0 %v3376
  %3947 = vmatprep.subr.mxu0 0.0
  %3948 = vmatpush1.msra.mxu0 %v3377
  %3949 = vmatprep.subr.mxu0 0.0
  %3950 = vmatpush1.msra.mxu0 %v3378
  %3951 = vmatprep.subr.mxu0 0.0
  %3952 = vmatpush1.msra.mxu0 %v3379
  %3953 = vmatprep.subr.mxu0 0.0
  %3954 = vmatpush1.msra.mxu0 %v3380
  %3955 = vmatprep.subr.mxu0 0.0
  %3956 = vmatpush1.msra.mxu0 %v3381
  %3957 = vmatprep.subr.mxu0 0.0
  %3958 = vmatpush1.msra.mxu0 %v3382
  %3959 = vmatprep.subr.mxu0 0.0
  %3960 = vmatpush1.msra.mxu0 %v3383
  %3961 = vmatprep.subr.mxu0 0.0
  %3962 = vmatpush1.msra.mxu0 %v3384
  %3963 = vmatprep.subr.mxu0 0.0
  %3964 = vmatpush1.msra.mxu0 %v3385
  %3965 = vmatprep.subr.mxu0 0.0
  %3966 = vmatpush1.msra.mxu0 %v3386
  %3967 = vmatprep.subr.mxu0 0.0
  %3968 = vmatpush1.msra.mxu0 %v3387
  %3969 = vmatprep.subr.mxu0 0.0
  %3970 = vmatpush1.msra.mxu0 %v3388
  %3971 = vmatprep.subr.mxu0 0.0
  %3972 = vmatpush1.msra.mxu0 %v3389
  %3973 = vmatprep.subr.mxu0 0.0
  %3974 = vmatpush1.msra.mxu0 %v3390
  %3975 = vmatprep.subr.mxu0 0.0
  %3976 = vmatpush1.msra.mxu0 %v3391
  %3977 = vmatprep.subr.mxu0 0.0
  %3978 = vmatpush1.msra.mxu0 %v3392
  %3979 = vmatprep.subr.mxu0 0.0
  %3980 = vmatpush1.msra.mxu0 %v3393
  %3981 = vmatprep.subr.mxu0 0.0
  %3982 = vmatpush1.msra.mxu0 %v3394
  %3983 = vmatprep.subr.mxu0 0.0
  %3984 = vmatpush1.msra.mxu0 %v3395
  %3985 = vmatprep.subr.mxu0 0.0
  %3986 = vmatpush1.msra.mxu0 %v3396
  %3987 = vmatprep.subr.mxu0 0.0
  %3988 = vmatpush1.msra.mxu0 %v3397
  %3989 = vmatprep.subr.mxu0 0.0
  %3990 = vmatpush1.msra.mxu0 %v3398
  %3991 = vmatprep.subr.mxu0 0.0
  %3992 = vmatpush1.msra.mxu0 %v3399
  %3993 = vmatprep.subr.mxu0 0.0
  %3994 = vmatpush1.msra.mxu0 %v3400
  %3995 = vmatprep.subr.mxu0 0.0
  %3996 = vmatpush1.msra.mxu0 %v3401
  %3997 = vmatprep.subr.mxu0 0.0
  %3998 = vmatpush1.msra.mxu0 %v3402
  %3999 = vmatprep.subr.mxu0 0.0
  %4000 = vmatpush1.msra.mxu0 %v3403
  %4001 = vmatprep.subr.mxu0 0.0
  %4002 = vmatpush1.msra.mxu0 %v3404
  %4003 = vmatprep.subr.mxu0 0.0
  %4004 = vmatpush1.msra.mxu0 %v3405
  %4005 = vmatprep.subr.mxu0 0.0
  %4006 = vmatpush1.msra.mxu0 %v3406
  %4007 = vmatprep.subr.mxu0 0.0
  %4008 = vmatpush1.msra.mxu0 %v3407
  %4009 = vmatprep.mubr.f32.mxu0 %v3259
  %4010 = vmatmul.mubr.f32.gmra.mrb[0].mxu0 %v3258
  %v4011 = vpop.f32.mrb[0].mxu0
  %v4012 = vadd.f32 %v3942, %v4011
  %v4013 = vpop.f32.mrb[0].mxu0
  %4014 = vdwg.mxu0
  %4015 = vmatprep.subr.mxu0 0.0
  %4016 = vmatpush1.msra.mxu0 %v3408
  %4017 = vmatprep.subr.mxu0 0.0
  %4018 = vmatpush1.msra.mxu0 %v3409
  %4019 = vmatprep.subr.mxu0 0.0
  %4020 = vmatpush1.msra.mxu0 %v3410
  %4021 = vmatprep.subr.mxu0 0.0
  %4022 = vmatpush1.msra.mxu0 %v3411
  %4023 = vmatprep.subr.mxu0 0.0
  %4024 = vmatpush1.msra.mxu0 %v3412
  %4025 = vmatprep.subr.mxu0 0.0
  %4026 = vmatpush1.msra.mxu0 %v3413
  %4027 = vmatprep.subr.mxu0 0.0
  %4028 = vmatpush1.msra.mxu0 %v3414
  %4029 = vmatprep.subr.mxu0 0.0
  %4030 = vmatpush1.msra.mxu0 %v3415
  %4031 = vmatprep.subr.mxu0 0.0
  %4032 = vmatpush1.msra.mxu0 %v3416
  %4033 = vmatprep.subr.mxu0 0.0
  %4034 = vmatpush1.msra.mxu0 %v3417
  %4035 = vmatprep.subr.mxu0 0.0
  %4036 = vmatpush1.msra.mxu0 %v3418
  %4037 = vmatprep.subr.mxu0 0.0
  %4038 = vmatpush1.msra.mxu0 %v3419
  %4039 = vmatprep.subr.mxu0 0.0
  %4040 = vmatpush1.msra.mxu0 %v3420
  %4041 = vmatprep.subr.mxu0 0.0
  %4042 = vmatpush1.msra.mxu0 %v3421
  %4043 = vmatprep.subr.mxu0 0.0
  %4044 = vmatpush1.msra.mxu0 %v3422
  %4045 = vmatprep.subr.mxu0 0.0
  %4046 = vmatpush1.msra.mxu0 %v3423
  %4047 = vmatprep.subr.mxu0 0.0
  %4048 = vmatpush1.msra.mxu0 %v3424
  %4049 = vmatprep.subr.mxu0 0.0
  %4050 = vmatpush1.msra.mxu0 %v3425
  %4051 = vmatprep.subr.mxu0 0.0
  %4052 = vmatpush1.msra.mxu0 %v3426
  %4053 = vmatprep.subr.mxu0 0.0
  %4054 = vmatpush1.msra.mxu0 %v3427
  %4055 = vmatprep.subr.mxu0 0.0
  %4056 = vmatpush1.msra.mxu0 %v3428
  %4057 = vmatprep.subr.mxu0 0.0
  %4058 = vmatpush1.msra.mxu0 %v3429
  %4059 = vmatprep.subr.mxu0 0.0
  %4060 = vmatpush1.msra.mxu0 %v3430
  %4061 = vmatprep.subr.mxu0 0.0
  %4062 = vmatpush1.msra.mxu0 %v3431
  %4063 = vmatprep.subr.mxu0 0.0
  %4064 = vmatpush1.msra.mxu0 %v3432
  %4065 = vmatprep.subr.mxu0 0.0
  %4066 = vmatpush1.msra.mxu0 %v3433
  %4067 = vmatprep.subr.mxu0 0.0
  %4068 = vmatpush1.msra.mxu0 %v3434
  %4069 = vmatprep.subr.mxu0 0.0
  %4070 = vmatpush1.msra.mxu0 %v3435
  %4071 = vmatprep.subr.mxu0 0.0
  %4072 = vmatpush1.msra.mxu0 %v3436
  %4073 = vmatprep.subr.mxu0 0.0
  %4074 = vmatpush1.msra.mxu0 %v3437
  %4075 = vmatprep.subr.mxu0 0.0
  %4076 = vmatpush1.msra.mxu0 %v3438
  %4077 = vmatprep.subr.mxu0 0.0
  %4078 = vmatpush1.msra.mxu0 %v3439
  %4079 = vmatprep.mubr.f32.mxu0 %v3261
  %4080 = vmatmul.mubr.f32.gmra.mrb[0].mxu0 %v3260
  %v4081 = vpop.f32.mrb[0].mxu0
  %v4082 = vadd.f32 %v4012, %v4081
  %v4083 = vpop.f32.mrb[0].mxu0
  %4084 = vdwg.mxu0
  %4085 = vmatprep.subr.mxu0 0.0
  %4086 = vmatpush1.msra.mxu0 %v3440
  %4087 = vmatprep.subr.mxu0 0.0
  %4088 = vmatpush1.msra.mxu0 %v3441
  %4089 = vmatprep.subr.mxu0 0.0
  %4090 = vmatpush1.msra.mxu0 %v3442
  %4091 = vmatprep.subr.mxu0 0.0
  %4092 = vmatpush1.msra.mxu0 %v3443
  %4093 = vmatprep.subr.mxu0 0.0
  %4094 = vmatpush1.msra.mxu0 %v3444
  %4095 = vmatprep.subr.mxu0 0.0
  %4096 = vmatpush1.msra.mxu0 %v3445
  %4097 = vmatprep.subr.mxu0 0.0
  %4098 = vmatpush1.msra.mxu0 %v3446
  %4099 = vmatprep.subr.mxu0 0.0
  %4100 = vmatpush1.msra.mxu0 %v3447
  %4101 = vmatprep.subr.mxu0 0.0
  %4102 = vmatpush1.msra.mxu0 %v3448
  %4103 = vmatprep.subr.mxu0 0.0
  %4104 = vmatpush1.msra.mxu0 %v3449
  %4105 = vmatprep.subr.mxu0 0.0
  %4106 = vmatpush1.msra.mxu0 %v3450
  %4107 = vmatprep.subr.mxu0 0.0
  %4108 = vmatpush1.msra.mxu0 %v3451
  %4109 = vmatprep.subr.mxu0 0.0
  %4110 = vmatpush1.msra.mxu0 %v3452
  %4111 = vmatprep.subr.mxu0 0.0
  %4112 = vmatpush1.msra.mxu0 %v3453
  %4113 = vmatprep.subr.mxu0 0.0
  %4114 = vmatpush1.msra.mxu0 %v3454
  %4115 = vmatprep.subr.mxu0 0.0
  %4116 = vmatpush1.msra.mxu0 %v3455
  %4117 = vmatprep.subr.mxu0 0.0
  %4118 = vmatpush1.msra.mxu0 %v3456
  %4119 = vmatprep.subr.mxu0 0.0
  %4120 = vmatpush1.msra.mxu0 %v3457
  %4121 = vmatprep.subr.mxu0 0.0
  %4122 = vmatpush1.msra.mxu0 %v3458
  %4123 = vmatprep.subr.mxu0 0.0
  %4124 = vmatpush1.msra.mxu0 %v3459
  %4125 = vmatprep.subr.mxu0 0.0
  %4126 = vmatpush1.msra.mxu0 %v3460
  %4127 = vmatprep.subr.mxu0 0.0
  %4128 = vmatpush1.msra.mxu0 %v3461
  %4129 = vmatprep.subr.mxu0 0.0
  %4130 = vmatpush1.msra.mxu0 %v3462
  %4131 = vmatprep.subr.mxu0 0.0
  %4132 = vmatpush1.msra.mxu0 %v3463
  %4133 = vmatprep.subr.mxu0 0.0
  %4134 = vmatpush1.msra.mxu0 %v3464
  %4135 = vmatprep.subr.mxu0 0.0
  %4136 = vmatpush1.msra.mxu0 %v3465
  %4137 = vmatprep.subr.mxu0 0.0
  %4138 = vmatpush1.msra.mxu0 %v3466
  %4139 = vmatprep.subr.mxu0 0.0
  %4140 = vmatpush1.msra.mxu0 %v3467
  %4141 = vmatprep.subr.mxu0 0.0
  %4142 = vmatpush1.msra.mxu0 %v3468
  %4143 = vmatprep.subr.mxu0 0.0
  %4144 = vmatpush1.msra.mxu0 %v3469
  %4145 = vmatprep.subr.mxu0 0.0
  %4146 = vmatpush1.msra.mxu0 %v3470
  %4147 = vmatprep.subr.mxu0 0.0
  %4148 = vmatpush1.msra.mxu0 %v3471
  %4149 = vmatprep.mubr.f32.mxu0 %v3263
  %4150 = vmatmul.mubr.f32.gmra.mrb[0].mxu0 %v3262
  %v4151 = vpop.f32.mrb[0].mxu0
  %v4152 = vadd.f32 %v4082, %v4151
  %v4153 = vpop.f32.mrb[0].mxu0
  %4154 = vdwg.mxu0
  %4155 = vmatprep.subr.mxu0 0.0
  %4156 = vmatpush1.msra.mxu0 %v3472
  %4157 = vmatprep.subr.mxu0 0.0
  %4158 = vmatpush1.msra.mxu0 %v3473
  %4159 = vmatprep.subr.mxu0 0.0
  %4160 = vmatpush1.msra.mxu0 %v3474
  %4161 = vmatprep.subr.mxu0 0.0
  %4162 = vmatpush1.msra.mxu0 %v3475
  %4163 = vmatprep.subr.mxu0 0.0
  %4164 = vmatpush1.msra.mxu0 %v3476
  %4165 = vmatprep.subr.mxu0 0.0
  %4166 = vmatpush1.msra.mxu0 %v3477
  %4167 = vmatprep.subr.mxu0 0.0
  %4168 = vmatpush1.msra.mxu0 %v3478
  %4169 = vmatprep.subr.mxu0 0.0
  %4170 = vmatpush1.msra.mxu0 %v3479
  %4171 = vmatprep.subr.mxu0 0.0
  %4172 = vmatpush1.msra.mxu0 %v3480
  %4173 = vmatprep.subr.mxu0 0.0
  %4174 = vmatpush1.msra.mxu0 %v3481
  %4175 = vmatprep.subr.mxu0 0.0
  %4176 = vmatpush1.msra.mxu0 %v3482
  %4177 = vmatprep.subr.mxu0 0.0
  %4178 = vmatpush1.msra.mxu0 %v3483
  %4179 = vmatprep.subr.mxu0 0.0
  %4180 = vmatpush1.msra.mxu0 %v3484
  %4181 = vmatprep.subr.mxu0 0.0
  %4182 = vmatpush1.msra.mxu0 %v3485
  %4183 = vmatprep.subr.mxu0 0.0
  %4184 = vmatpush1.msra.mxu0 %v3486
  %4185 = vmatprep.subr.mxu0 0.0
  %4186 = vmatpush1.msra.mxu0 %v3487
  %4187 = vmatprep.subr.mxu0 0.0
  %4188 = vmatpush1.msra.mxu0 %v3488
  %4189 = vmatprep.subr.mxu0 0.0
  %4190 = vmatpush1.msra.mxu0 %v3489
  %4191 = vmatprep.subr.mxu0 0.0
  %4192 = vmatpush1.msra.mxu0 %v3490
  %4193 = vmatprep.subr.mxu0 0.0
  %4194 = vmatpush1.msra.mxu0 %v3491
  %4195 = vmatprep.subr.mxu0 0.0
  %4196 = vmatpush1.msra.mxu0 %v3492
  %4197 = vmatprep.subr.mxu0 0.0
  %4198 = vmatpush1.msra.mxu0 %v3493
  %4199 = vmatprep.subr.mxu0 0.0
  %4200 = vmatpush1.msra.mxu0 %v3494
  %4201 = vmatprep.subr.mxu0 0.0
  %4202 = vmatpush1.msra.mxu0 %v3495
  %4203 = vmatprep.subr.mxu0 0.0
  %4204 = vmatpush1.msra.mxu0 %v3496
  %4205 = vmatprep.subr.mxu0 0.0
  %4206 = vmatpush1.msra.mxu0 %v3497
  %4207 = vmatprep.subr.mxu0 0.0
  %4208 = vmatpush1.msra.mxu0 %v3498
  %4209 = vmatprep.subr.mxu0 0.0
  %4210 = vmatpush1.msra.mxu0 %v3499
  %4211 = vmatprep.subr.mxu0 0.0
  %4212 = vmatpush1.msra.mxu0 %v3500
  %4213 = vmatprep.subr.mxu0 0.0
  %4214 = vmatpush1.msra.mxu0 %v3501
  %4215 = vmatprep.subr.mxu0 0.0
  %4216 = vmatpush1.msra.mxu0 %v3502
  %4217 = vmatprep.subr.mxu0 0.0
  %4218 = vmatpush1.msra.mxu0 %v3503
  %4219 = vmatprep.mubr.f32.mxu0 %v3265
  %4220 = vmatmul.mubr.f32.gmra.mrb[0].mxu0 %v3264
  %v4221 = vpop.f32.mrb[0].mxu0
  %v4222 = vadd.f32 %v4152, %v4221
  %v4223 = vpop.f32.mrb[0].mxu0
  %4224 = vdwg.mxu0
  %4225 = vmatprep.subr.mxu0 0.0
  %4226 = vmatpush1.msra.mxu0 %v3504
  %4227 = vmatprep.subr.mxu0 0.0
  %4228 = vmatpush1.msra.mxu0 %v3505
  %4229 = vmatprep.subr.mxu0 0.0
  %4230 = vmatpush1.msra.mxu0 %v3506
  %4231 = vmatprep.subr.mxu0 0.0
  %4232 = vmatpush1.msra.mxu0 %v3507
  %4233 = vmatprep.subr.mxu0 0.0
  %4234 = vmatpush1.msra.mxu0 %v3508
  %4235 = vmatprep.subr.mxu0 0.0
  %4236 = vmatpush1.msra.mxu0 %v3509
  %4237 = vmatprep.subr.mxu0 0.0
  %4238 = vmatpush1.msra.mxu0 %v3510
  %4239 = vmatprep.subr.mxu0 0.0
  %4240 = vmatpush1.msra.mxu0 %v3511
  %4241 = vmatprep.subr.mxu0 0.0
  %4242 = vmatpush1.msra.mxu0 %v3512
  %4243 = vmatprep.subr.mxu0 0.0
  %4244 = vmatpush1.msra.mxu0 %v3513
  %4245 = vmatprep.subr.mxu0 0.0
  %4246 = vmatpush1.msra.mxu0 %v3514
  %4247 = vmatprep.subr.mxu0 0.0
  %4248 = vmatpush1.msra.mxu0 %v3515
  %4249 = vmatprep.subr.mxu0 0.0
  %4250 = vmatpush1.msra.mxu0 %v3516
  %4251 = vmatprep.subr.mxu0 0.0
  %4252 = vmatpush1.msra.mxu0 %v3517
  %4253 = vmatprep.subr.mxu0 0.0
  %4254 = vmatpush1.msra.mxu0 %v3518
  %4255 = vmatprep.subr.mxu0 0.0
  %4256 = vmatpush1.msra.mxu0 %v3519
  %4257 = vmatprep.subr.mxu0 0.0
  %4258 = vmatpush1.msra.mxu0 %v3520
  %4259 = vmatprep.subr.mxu0 0.0
  %4260 = vmatpush1.msra.mxu0 %v3521
  %4261 = vmatprep.subr.mxu0 0.0
  %4262 = vmatpush1.msra.mxu0 %v3522
  %4263 = vmatprep.subr.mxu0 0.0
  %4264 = vmatpush1.msra.mxu0 %v3523
  %4265 = vmatprep.subr.mxu0 0.0
  %4266 = vmatpush1.msra.mxu0 %v3524
  %4267 = vmatprep.subr.mxu0 0.0
  %4268 = vmatpush1.msra.mxu0 %v3525
  %4269 = vmatprep.subr.mxu0 0.0
  %4270 = vmatpush1.msra.mxu0 %v3526
  %4271 = vmatprep.subr.mxu0 0.0
  %4272 = vmatpush1.msra.mxu0 %v3527
  %4273 = vmatprep.subr.mxu0 0.0
  %4274 = vmatpush1.msra.mxu0 %v3528
  %4275 = vmatprep.subr.mxu0 0.0
  %4276 = vmatpush1.msra.mxu0 %v3529
  %4277 = vmatprep.subr.mxu0 0.0
  %4278 = vmatpush1.msra.mxu0 %v3530
  %4279 = vmatprep.subr.mxu0 0.0
  %4280 = vmatpush1.msra.mxu0 %v3531
  %4281 = vmatprep.subr.mxu0 0.0
  %4282 = vmatpush1.msra.mxu0 %v3532
  %4283 = vmatprep.subr.mxu0 0.0
  %4284 = vmatpush1.msra.mxu0 %v3533
  %4285 = vmatprep.subr.mxu0 0.0
  %4286 = vmatpush1.msra.mxu0 %v3534
  %4287 = vmatprep.subr.mxu0 0.0
  %4288 = vmatpush1.msra.mxu0 %v3535
  %4289 = vmatprep.mubr.f32.mxu0 %v3267
  %4290 = vmatmul.mubr.f32.gmra.mrb[0].mxu0 %v3266
  %v4291 = vpop.f32.mrb[0].mxu0
  %v4292 = vadd.f32 %v4222, %v4291
  %v4293 = vpop.f32.mrb[0].mxu0
  %4294 = vdwg.mxu0
  %4295 = vmatprep.subr.mxu0 0.0
  %4296 = vmatpush1.msra.mxu0 %v3536
  %4297 = vmatprep.subr.mxu0 0.0
  %4298 = vmatpush1.msra.mxu0 %v3537
  %4299 = vmatprep.subr.mxu0 0.0
  %4300 = vmatpush1.msra.mxu0 %v3538
  %4301 = vmatprep.subr.mxu0 0.0
  %4302 = vmatpush1.msra.mxu0 %v3539
  %4303 = vmatprep.subr.mxu0 0.0
  %4304 = vmatpush1.msra.mxu0 %v3540
  %4305 = vmatprep.subr.mxu0 0.0
  %4306 = vmatpush1.msra.mxu0 %v3541
  %4307 = vmatprep.subr.mxu0 0.0
  %4308 = vmatpush1.msra.mxu0 %v3542
  %4309 = vmatprep.subr.mxu0 0.0
  %4310 = vmatpush1.msra.mxu0 %v3543
  %4311 = vmatprep.subr.mxu0 0.0
  %4312 = vmatpush1.msra.mxu0 %v3544
  %4313 = vmatprep.subr.mxu0 0.0
  %4314 = vmatpush1.msra.mxu0 %v3545
  %4315 = vmatprep.subr.mxu0 0.0
  %4316 = vmatpush1.msra.mxu0 %v3546
  %4317 = vmatprep.subr.mxu0 0.0
  %4318 = vmatpush1.msra.mxu0 %v3547
  %4319 = vmatprep.subr.mxu0 0.0
  %4320 = vmatpush1.msra.mxu0 %v3548
  %4321 = vmatprep.subr.mxu0 0.0
  %4322 = vmatpush1.msra.mxu0 %v3549
  %4323 = vmatprep.subr.mxu0 0.0
  %4324 = vmatpush1.msra.mxu0 %v3550
  %4325 = vmatprep.subr.mxu0 0.0
  %4326 = vmatpush1.msra.mxu0 %v3551
  %4327 = vmatprep.subr.mxu0 0.0
  %4328 = vmatpush1.msra.mxu0 %v3552
  %4329 = vmatprep.subr.mxu0 0.0
  %4330 = vmatpush1.msra.mxu0 %v3553
  %4331 = vmatprep.subr.mxu0 0.0
  %4332 = vmatpush1.msra.mxu0 %v3554
  %4333 = vmatprep.subr.mxu0 0.0
  %4334 = vmatpush1.msra.mxu0 %v3555
  %4335 = vmatprep.subr.mxu0 0.0
  %4336 = vmatpush1.msra.mxu0 %v3556
  %4337 = vmatprep.subr.mxu0 0.0
  %4338 = vmatpush1.msra.mxu0 %v3557
  %4339 = vmatprep.subr.mxu0 0.0
  %4340 = vmatpush1.msra.mxu0 %v3558
  %4341 = vmatprep.subr.mxu0 0.0
  %4342 = vmatpush1.msra.mxu0 %v3559
  %4343 = vmatprep.subr.mxu0 0.0
  %4344 = vmatpush1.msra.mxu0 %v3560
  %4345 = vmatprep.subr.mxu0 0.0
  %4346 = vmatpush1.msra.mxu0 %v3561
  %4347 = vmatprep.subr.mxu0 0.0
  %4348 = vmatpush1.msra.mxu0 %v3562
  %4349 = vmatprep.subr.mxu0 0.0
  %4350 = vmatpush1.msra.mxu0 %v3563
  %4351 = vmatprep.subr.mxu0 0.0
  %4352 = vmatpush1.msra.mxu0 %v3564
  %4353 = vmatprep.subr.mxu0 0.0
  %4354 = vmatpush1.msra.mxu0 %v3565
  %4355 = vmatprep.subr.mxu0 0.0
  %4356 = vmatpush1.msra.mxu0 %v3566
  %4357 = vmatprep.subr.mxu0 0.0
  %4358 = vmatpush1.msra.mxu0 %v3567
  %4359 = vmatprep.mubr.f32.mxu0 %v3269
  %4360 = vmatmul.mubr.f32.gmra.mrb[0].mxu0 %v3268
  %v4361 = vpop.f32.mrb[0].mxu0
  %v4362 = vadd.f32 %v4292, %v4361
  %v4363 = vpop.f32.mrb[0].mxu0
  %4364 = vdwg.mxu0
  %4365 = vmatprep.subr.mxu0 0.0
  %4366 = vmatpush1.msra.mxu0 %v3568
  %4367 = vmatprep.subr.mxu0 0.0
  %4368 = vmatpush1.msra.mxu0 %v3569
  %4369 = vmatprep.subr.mxu0 0.0
  %4370 = vmatpush1.msra.mxu0 %v3570
  %4371 = vmatprep.subr.mxu0 0.0
  %4372 = vmatpush1.msra.mxu0 %v3571
  %4373 = vmatprep.subr.mxu0 0.0
  %4374 = vmatpush1.msra.mxu0 %v3572
  %4375 = vmatprep.subr.mxu0 0.0
  %4376 = vmatpush1.msra.mxu0 %v3573
  %4377 = vmatprep.subr.mxu0 0.0
  %4378 = vmatpush1.msra.mxu0 %v3574
  %4379 = vmatprep.subr.mxu0 0.0
  %4380 = vmatpush1.msra.mxu0 %v3575
  %4381 = vmatprep.subr.mxu0 0.0
  %4382 = vmatpush1.msra.mxu0 %v3576
  %4383 = vmatprep.subr.mxu0 0.0
  %4384 = vmatpush1.msra.mxu0 %v3577
  %4385 = vmatprep.subr.mxu0 0.0
  %4386 = vmatpush1.msra.mxu0 %v3578
  %4387 = vmatprep.subr.mxu0 0.0
  %4388 = vmatpush1.msra.mxu0 %v3579
  %4389 = vmatprep.subr.mxu0 0.0
  %4390 = vmatpush1.msra.mxu0 %v3580
  %4391 = vmatprep.subr.mxu0 0.0
  %4392 = vmatpush1.msra.mxu0 %v3581
  %4393 = vmatprep.subr.mxu0 0.0
  %4394 = vmatpush1.msra.mxu0 %v3582
  %4395 = vmatprep.subr.mxu0 0.0
  %4396 = vmatpush1.msra.mxu0 %v3583
  %4397 = vmatprep.subr.mxu0 0.0
  %4398 = vmatpush1.msra.mxu0 %v3584
  %4399 = vmatprep.subr.mxu0 0.0
  %4400 = vmatpush1.msra.mxu0 %v3585
  %4401 = vmatprep.subr.mxu0 0.0
  %4402 = vmatpush1.msra.mxu0 %v3586
  %4403 = vmatprep.subr.mxu0 0.0
  %4404 = vmatpush1.msra.mxu0 %v3587
  %4405 = vmatprep.subr.mxu0 0.0
  %4406 = vmatpush1.msra.mxu0 %v3588
  %4407 = vmatprep.subr.mxu0 0.0
  %4408 = vmatpush1.msra.mxu0 %v3589
  %4409 = vmatprep.subr.mxu0 0.0
  %4410 = vmatpush1.msra.mxu0 %v3590
  %4411 = vmatprep.subr.mxu0 0.0
  %4412 = vmatpush1.msra.mxu0 %v3591
  %4413 = vmatprep.subr.mxu0 0.0
  %4414 = vmatpush1.msra.mxu0 %v3592
  %4415 = vmatprep.subr.mxu0 0.0
  %4416 = vmatpush1.msra.mxu0 %v3593
  %4417 = vmatprep.subr.mxu0 0.0
  %4418 = vmatpush1.msra.mxu0 %v3594
  %4419 = vmatprep.subr.mxu0 0.0
  %4420 = vmatpush1.msra.mxu0 %v3595
  %4421 = vmatprep.subr.mxu0 0.0
  %4422 = vmatpush1.msra.mxu0 %v3596
  %4423 = vmatprep.subr.mxu0 0.0
  %4424 = vmatpush1.msra.mxu0 %v3597
  %4425 = vmatprep.subr.mxu0 0.0
  %4426 = vmatpush1.msra.mxu0 %v3598
  %4427 = vmatprep.subr.mxu0 0.0
  %4428 = vmatpush1.msra.mxu0 %v3599
  %4429 = vmatprep.mubr.f32.mxu0 %v3271
  %4430 = vmatmul.mubr.f32.gmra.mrb[0].mxu0 %v3270
  %v4431 = vpop.f32.mrb[0].mxu0
  %v4432 = vadd.f32 %v4362, %v4431
  %v4433 = vpop.f32.mrb[0].mxu0
  %4434 = vdwg.mxu0
  %4435 = vmatprep.subr.mxu0 0.0
  %4436 = vmatpush1.msra.mxu0 %v3600
  %4437 = vmatprep.subr.mxu0 0.0
  %4438 = vmatpush1.msra.mxu0 %v3601
  %4439 = vmatprep.subr.mxu0 0.0
  %4440 = vmatpush1.msra.mxu0 %v3602
  %4441 = vmatprep.subr.mxu0 0.0
  %4442 = vmatpush1.msra.mxu0 %v3603
  %4443 = vmatprep.subr.mxu0 0.0
  %4444 = vmatpush1.msra.mxu0 %v3604
  %4445 = vmatprep.subr.mxu0 0.0
  %4446 = vmatpush1.msra.mxu0 %v3605
  %4447 = vmatprep.subr.mxu0 0.0
  %4448 = vmatpush1.msra.mxu0 %v3606
  %4449 = vmatprep.subr.mxu0 0.0
  %4450 = vmatpush1.msra.mxu0 %v3607
  %4451 = vmatprep.subr.mxu0 0.0
  %4452 = vmatpush1.msra.mxu0 %v3608
  %4453 = vmatprep.subr.mxu0 0.0
  %4454 = vmatpush1.msra.mxu0 %v3609
  %4455 = vmatprep.subr.mxu0 0.0
  %4456 = vmatpush1.msra.mxu0 %v3610
  %4457 = vmatprep.subr.mxu0 0.0
  %4458 = vmatpush1.msra.mxu0 %v3611
  %4459 = vmatprep.subr.mxu0 0.0
  %4460 = vmatpush1.msra.mxu0 %v3612
  %4461 = vmatprep.subr.mxu0 0.0
  %4462 = vmatpush1.msra.mxu0 %v3613
  %4463 = vmatprep.subr.mxu0 0.0
  %4464 = vmatpush1.msra.mxu0 %v3614
  %4465 = vmatprep.subr.mxu0 0.0
  %4466 = vmatpush1.msra.mxu0 %v3615
  %4467 = vmatprep.subr.mxu0 0.0
  %4468 = vmatpush1.msra.mxu0 %v3616
  %4469 = vmatprep.subr.mxu0 0.0
  %4470 = vmatpush1.msra.mxu0 %v3617
  %4471 = vmatprep.subr.mxu0 0.0
  %4472 = vmatpush1.msra.mxu0 %v3618
  %4473 = vmatprep.subr.mxu0 0.0
  %4474 = vmatpush1.msra.mxu0 %v3619
  %4475 = vmatprep.subr.mxu0 0.0
  %4476 = vmatpush1.msra.mxu0 %v3620
  %4477 = vmatprep.subr.mxu0 0.0
  %4478 = vmatpush1.msra.mxu0 %v3621
  %4479 = vmatprep.subr.mxu0 0.0
  %4480 = vmatpush1.msra.mxu0 %v3622
  %4481 = vmatprep.subr.mxu0 0.0
  %4482 = vmatpush1.msra.mxu0 %v3623
  %4483 = vmatprep.subr.mxu0 0.0
  %4484 = vmatpush1.msra.mxu0 %v3624
  %4485 = vmatprep.subr.mxu0 0.0
  %4486 = vmatpush1.msra.mxu0 %v3625
  %4487 = vmatprep.subr.mxu0 0.0
  %4488 = vmatpush1.msra.mxu0 %v3626
  %4489 = vmatprep.subr.mxu0 0.0
  %4490 = vmatpush1.msra.mxu0 %v3627
  %4491 = vmatprep.subr.mxu0 0.0
  %4492 = vmatpush1.msra.mxu0 %v3628
  %4493 = vmatprep.subr.mxu0 0.0
  %4494 = vmatpush1.msra.mxu0 %v3629
  %4495 = vmatprep.subr.mxu0 0.0
  %4496 = vmatpush1.msra.mxu0 %v3630
  %4497 = vmatprep.subr.mxu0 0.0
  %4498 = vmatpush1.msra.mxu0 %v3631
  %4499 = vmatprep.mubr.f32.mxu0 %v3273
  %4500 = vmatmul.mubr.f32.gmra.mrb[0].mxu0 %v3272
  %v4501 = vpop.f32.mrb[0].mxu0
  %v4502 = vadd.f32 %v4432, %v4501
  %v4503 = vpop.f32.mrb[0].mxu0
  %4504 = vdwg.mxu0
  %4505 = vmatprep.subr.mxu0 0.0
  %4506 = vmatpush1.msra.mxu0 %v3632
  %4507 = vmatprep.subr.mxu0 0.0
  %4508 = vmatpush1.msra.mxu0 %v3633
  %4509 = vmatprep.subr.mxu0 0.0
  %4510 = vmatpush1.msra.mxu0 %v3634
  %4511 = vmatprep.subr.mxu0 0.0
  %4512 = vmatpush1.msra.mxu0 %v3635
  %4513 = vmatprep.subr.mxu0 0.0
  %4514 = vmatpush1.msra.mxu0 %v3636
  %4515 = vmatprep.subr.mxu0 0.0
  %4516 = vmatpush1.msra.mxu0 %v3637
  %4517 = vmatprep.subr.mxu0 0.0
  %4518 = vmatpush1.msra.mxu0 %v3638
  %4519 = vmatprep.subr.mxu0 0.0
  %4520 = vmatpush1.msra.mxu0 %v3639
  %4521 = vmatprep.subr.mxu0 0.0
  %4522 = vmatpush1.msra.mxu0 %v3640
  %4523 = vmatprep.subr.mxu0 0.0
  %4524 = vmatpush1.msra.mxu0 %v3641
  %4525 = vmatprep.subr.mxu0 0.0
  %4526 = vmatpush1.msra.mxu0 %v3642
  %4527 = vmatprep.subr.mxu0 0.0
  %4528 = vmatpush1.msra.mxu0 %v3643
  %4529 = vmatprep.subr.mxu0 0.0
  %4530 = vmatpush1.msra.mxu0 %v3644
  %4531 = vmatprep.subr.mxu0 0.0
  %4532 = vmatpush1.msra.mxu0 %v3645
  %4533 = vmatprep.subr.mxu0 0.0
  %4534 = vmatpush1.msra.mxu0 %v3646
  %4535 = vmatprep.subr.mxu0 0.0
  %4536 = vmatpush1.msra.mxu0 %v3647
  %4537 = vmatprep.subr.mxu0 0.0
  %4538 = vmatpush1.msra.mxu0 %v3648
  %4539 = vmatprep.subr.mxu0 0.0
  %4540 = vmatpush1.msra.mxu0 %v3649
  %4541 = vmatprep.subr.mxu0 0.0
  %4542 = vmatpush1.msra.mxu0 %v3650
  %4543 = vmatprep.subr.mxu0 0.0
  %4544 = vmatpush1.msra.mxu0 %v3651
  %4545 = vmatprep.subr.mxu0 0.0
  %4546 = vmatpush1.msra.mxu0 %v3652
  %4547 = vmatprep.subr.mxu0 0.0
  %4548 = vmatpush1.msra.mxu0 %v3653
  %4549 = vmatprep.subr.mxu0 0.0
  %4550 = vmatpush1.msra.mxu0 %v3654
  %4551 = vmatprep.subr.mxu0 0.0
  %4552 = vmatpush1.msra.mxu0 %v3655
  %4553 = vmatprep.subr.mxu0 0.0
  %4554 = vmatpush1.msra.mxu0 %v3656
  %4555 = vmatprep.subr.mxu0 0.0
  %4556 = vmatpush1.msra.mxu0 %v3657
  %4557 = vmatprep.subr.mxu0 0.0
  %4558 = vmatpush1.msra.mxu0 %v3658
  %4559 = vmatprep.subr.mxu0 0.0
  %4560 = vmatpush1.msra.mxu0 %v3659
  %4561 = vmatprep.subr.mxu0 0.0
  %4562 = vmatpush1.msra.mxu0 %v3660
  %4563 = vmatprep.subr.mxu0 0.0
  %4564 = vmatpush1.msra.mxu0 %v3661
  %4565 = vmatprep.subr.mxu0 0.0
  %4566 = vmatpush1.msra.mxu0 %v3662
  %4567 = vmatprep.subr.mxu0 0.0
  %4568 = vmatpush1.msra.mxu0 %v3663
  %4569 = vmatprep.mubr.f32.mxu0 %v3275
  %4570 = vmatmul.mubr.f32.gmra.mrb[0].mxu0 %v3274
  %v4571 = vpop.f32.mrb[0].mxu0
  %v4572 = vadd.f32 %v4502, %v4571
  %v4573 = vpop.f32.mrb[0].mxu0
  %4574 = vdwg.mxu0
  %4575 = vmatprep.subr.mxu0 0.0
  %4576 = vmatpush1.msra.mxu0 %v3664
  %4577 = vmatprep.subr.mxu0 0.0
  %4578 = vmatpush1.msra.mxu0 %v3665
  %4579 = vmatprep.subr.mxu0 0.0
  %4580 = vmatpush1.msra.mxu0 %v3666
  %4581 = vmatprep.subr.mxu0 0.0
  %4582 = vmatpush1.msra.mxu0 %v3667
  %4583 = vmatprep.subr.mxu0 0.0
  %4584 = vmatpush1.msra.mxu0 %v3668
  %4585 = vmatprep.subr.mxu0 0.0
  %4586 = vmatpush1.msra.mxu0 %v3669
  %4587 = vmatprep.subr.mxu0 0.0
  %4588 = vmatpush1.msra.mxu0 %v3670
  %4589 = vmatprep.subr.mxu0 0.0
  %4590 = vmatpush1.msra.mxu0 %v3671
  %4591 = vmatprep.subr.mxu0 0.0
  %4592 = vmatpush1.msra.mxu0 %v3672
  %4593 = vmatprep.subr.mxu0 0.0
  %4594 = vmatpush1.msra.mxu0 %v3673
  %4595 = vmatprep.subr.mxu0 0.0
  %4596 = vmatpush1.msra.mxu0 %v3674
  %4597 = vmatprep.subr.mxu0 0.0
  %4598 = vmatpush1.msra.mxu0 %v3675
  %4599 = vmatprep.subr.mxu0 0.0
  %4600 = vmatpush1.msra.mxu0 %v3676
  %4601 = vmatprep.subr.mxu0 0.0
  %4602 = vmatpush1.msra.mxu0 %v3677
  %4603 = vmatprep.subr.mxu0 0.0
  %4604 = vmatpush1.msra.mxu0 %v3678
  %4605 = vmatprep.subr.mxu0 0.0
  %4606 = vmatpush1.msra.mxu0 %v3679
  %4607 = vmatprep.subr.mxu0 0.0
  %4608 = vmatpush1.msra.mxu0 %v3680
  %4609 = vmatprep.subr.mxu0 0.0
  %4610 = vmatpush1.msra.mxu0 %v3681
  %4611 = vmatprep.subr.mxu0 0.0
  %4612 = vmatpush1.msra.mxu0 %v3682
  %4613 = vmatprep.subr.mxu0 0.0
  %4614 = vmatpush1.msra.mxu0 %v3683
  %4615 = vmatprep.subr.mxu0 0.0
  %4616 = vmatpush1.msra.mxu0 %v3684
  %4617 = vmatprep.subr.mxu0 0.0
  %4618 = vmatpush1.msra.mxu0 %v3685
  %4619 = vmatprep.subr.mxu0 0.0
  %4620 = vmatpush1.msra.mxu0 %v3686
  %4621 = vmatprep.subr.mxu0 0.0
  %4622 = vmatpush1.msra.mxu0 %v3687
  %4623 = vmatprep.subr.mxu0 0.0
  %4624 = vmatpush1.msra.mxu0 %v3688
  %4625 = vmatprep.subr.mxu0 0.0
  %4626 = vmatpush1.msra.mxu0 %v3689
  %4627 = vmatprep.subr.mxu0 0.0
  %4628 = vmatpush1.msra.mxu0 %v3690
  %4629 = vmatprep.subr.mxu0 0.0
  %4630 = vmatpush1.msra.mxu0 %v3691
  %4631 = vmatprep.subr.mxu0 0.0
  %4632 = vmatpush1.msra.mxu0 %v3692
  %4633 = vmatprep.subr.mxu0 0.0
  %4634 = vmatpush1.msra.mxu0 %v3693
  %4635 = vmatprep.subr.mxu0 0.0
  %4636 = vmatpush1.msra.mxu0 %v3694
  %4637 = vmatprep.subr.mxu0 0.0
  %4638 = vmatpush1.msra.mxu0 %v3695
  %4639 = vmatprep.mubr.f32.mxu0 %v3277
  %4640 = vmatmul.mubr.f32.gmra.mrb[0].mxu0 %v3276
  %v4641 = vpop.f32.mrb[0].mxu0
  %v4642 = vadd.f32 %v4572, %v4641
  %v4643 = vpop.f32.mrb[0].mxu0
  %4644 = vdwg.mxu0
  %4645 = vmatprep.subr.mxu0 0.0
  %4646 = vmatpush1.msra.mxu0 %v3696
  %4647 = vmatprep.subr.mxu0 0.0
  %4648 = vmatpush1.msra.mxu0 %v3697
  %4649 = vmatprep.subr.mxu0 0.0
  %4650 = vmatpush1.msra.mxu0 %v3698
  %4651 = vmatprep.subr.mxu0 0.0
  %4652 = vmatpush1.msra.mxu0 %v3699
  %4653 = vmatprep.subr.mxu0 0.0
  %4654 = vmatpush1.msra.mxu0 %v3700
  %4655 = vmatprep.subr.mxu0 0.0
  %4656 = vmatpush1.msra.mxu0 %v3701
  %4657 = vmatprep.subr.mxu0 0.0
  %4658 = vmatpush1.msra.mxu0 %v3702
  %4659 = vmatprep.subr.mxu0 0.0
  %4660 = vmatpush1.msra.mxu0 %v3703
  %4661 = vmatprep.subr.mxu0 0.0
  %4662 = vmatpush1.msra.mxu0 %v3704
  %4663 = vmatprep.subr.mxu0 0.0
  %4664 = vmatpush1.msra.mxu0 %v3705
  %4665 = vmatprep.subr.mxu0 0.0
  %4666 = vmatpush1.msra.mxu0 %v3706
  %4667 = vmatprep.subr.mxu0 0.0
  %4668 = vmatpush1.msra.mxu0 %v3707
  %4669 = vmatprep.subr.mxu0 0.0
  %4670 = vmatpush1.msra.mxu0 %v3708
  %4671 = vmatprep.subr.mxu0 0.0
  %4672 = vmatpush1.msra.mxu0 %v3709
  %4673 = vmatprep.subr.mxu0 0.0
  %4674 = vmatpush1.msra.mxu0 %v3710
  %4675 = vmatprep.subr.mxu0 0.0
  %4676 = vmatpush1.msra.mxu0 %v3711
  %4677 = vmatprep.subr.mxu0 0.0
  %4678 = vmatpush1.msra.mxu0 %v3712
  %4679 = vmatprep.subr.mxu0 0.0
  %4680 = vmatpush1.msra.mxu0 %v3713
  %4681 = vmatprep.subr.mxu0 0.0
  %4682 = vmatpush1.msra.mxu0 %v3714
  %4683 = vmatprep.subr.mxu0 0.0
  %4684 = vmatpush1.msra.mxu0 %v3715
  %4685 = vmatprep.subr.mxu0 0.0
  %4686 = vmatpush1.msra.mxu0 %v3716
  %4687 = vmatprep.subr.mxu0 0.0
  %4688 = vmatpush1.msra.mxu0 %v3717
  %4689 = vmatprep.subr.mxu0 0.0
  %4690 = vmatpush1.msra.mxu0 %v3718
  %4691 = vmatprep.subr.mxu0 0.0
  %4692 = vmatpush1.msra.mxu0 %v3719
  %4693 = vmatprep.subr.mxu0 0.0
  %4694 = vmatpush1.msra.mxu0 %v3720
  %4695 = vmatprep.subr.mxu0 0.0
  %4696 = vmatpush1.msra.mxu0 %v3721
  %4697 = vmatprep.subr.mxu0 0.0
  %4698 = vmatpush1.msra.mxu0 %v3722
  %4699 = vmatprep.subr.mxu0 0.0
  %4700 = vmatpush1.msra.mxu0 %v3723
  %4701 = vmatprep.subr.mxu0 0.0
  %4702 = vmatpush1.msra.mxu0 %v3724
  %4703 = vmatprep.subr.mxu0 0.0
  %4704 = vmatpush1.msra.mxu0 %v3725
  %4705 = vmatprep.subr.mxu0 0.0
  %4706 = vmatpush1.msra.mxu0 %v3726
  %4707 = vmatprep.subr.mxu0 0.0
  %4708 = vmatpush1.msra.mxu0 %v3727
  %4709 = vmatprep.mubr.f32.mxu0 %v3279
  %4710 = vmatmul.mubr.f32.gmra.mrb[0].mxu0 %v3278
  %v4711 = vpop.f32.mrb[0].mxu0
  %v4712 = vadd.f32 %v4642, %v4711
  %v4713 = vpop.f32.mrb[0].mxu0
  %4714 = vdwg.mxu0
  %v4715 = vmax.f32 %v4712, 0.0
  %v4716 = vld [vmem:[%s5] sm:$0xff]
  %v4717 = vld [vmem:[%s5 + $0x8] sm:$0xff]
  %v4718 = vld [vmem:[%s5 + $0x10] sm:$0xff]
  %v4719 = vld [vmem:[%s5 + $0x18] sm:$0xff]
  %v4720 = vld [vmem:[%s5 + $0x20] sm:$0xff]
  %v4721 = vld [vmem:[%s5 + $0x28] sm:$0xff]
  %v4722 = vld [vmem:[%s5 + $0x30] sm:$0xff]
  %v4723 = vld [vmem:[%s5 + $0x38] sm:$0xff]
  %v4724 = vld [vmem:[%s5 + $0x40] sm:$0xff]
  %v4725 = vld [vmem:[%s5 + $0x48] sm:$0xff]
  %v4726 = vld [vmem:[%s5 + $0x50] sm:$0xff]
  %v4727 = vld [vmem:[%s5 + $0x58] sm:$0xff]
  %v4728 = vld [vmem:[%s5 + $0x60] sm:$0xff]
  %v4729 = vld [vmem:[%s5 + $0x68] sm:$0xff]
  %v4730 = vld [vmem:[%s5 + $0x70] sm:$0xff]
  %v4731 = vld [vmem:[%s5 + $0x78] sm:$0xff]
  %v4732 = vld [vmem:[%s6] sm:$0x1]
  %v4734 = vlaneseq
  %v4735 = vshrl.u32 %v4734, 7
  %v4736 = vsub.s32 0, %v4735
  %v4737 = vrot.slane %v4732, %v4736
  %4739 = vmatprep.subr.mxu0 0.0
  %4740 = vmatpush1.msra.mxu0 %v4716
  %4741 = vmatprep.subr.mxu0 0.0
  %4742 = vmatpush1.msra.mxu0 %v4717
  %4743 = vmatprep.subr.mxu0 0.0
  %4744 = vmatpush1.msra.mxu0 %v4718
  %4745 = vmatprep.subr.mxu0 0.0
  %4746 = vmatpush1.msra.mxu0 %v4719
  %4747 = vmatprep.subr.mxu0 0.0
  %4748 = vmatpush1.msra.mxu0 %v4720
  %4749 = vmatprep.subr.mxu0 0.0
  %4750 = vmatpush1.msra.mxu0 %v4721
  %4751 = vmatprep.subr.mxu0 0.0
  %4752 = vmatpush1.msra.mxu0 %v4722
  %4753 = vmatprep.subr.mxu0 0.0
  %4754 = vmatpush1.msra.mxu0 %v4723
  %4755 = vmatprep.subr.mxu0 0.0
  %4756 = vmatpush1.msra.mxu0 %v4724
  %4757 = vmatprep.subr.mxu0 0.0
  %4758 = vmatpush1.msra.mxu0 %v4725
  %4759 = vmatprep.subr.mxu0 0.0
  %4760 = vmatpush1.msra.mxu0 %v4726
  %4761 = vmatprep.subr.mxu0 0.0
  %4762 = vmatpush1.msra.mxu0 %v4727
  %4763 = vmatprep.subr.mxu0 0.0
  %4764 = vmatpush1.msra.mxu0 %v4728
  %4765 = vmatprep.subr.mxu0 0.0
  %4766 = vmatpush1.msra.mxu0 %v4729
  %4767 = vmatprep.subr.mxu0 0.0
  %4768 = vmatpush1.msra.mxu0 %v4730
  %4769 = vmatprep.subr.mxu0 0.0
  %4770 = vmatpush1.msra.mxu0 %v4731
  %4771 = vmatprep.subr.mxu0 0.0
  %4772 = vmatpush1.msra.mxu0 0.0
  %4773 = vmatprep.subr.mxu0 0.0
  %4774 = vmatpush1.msra.mxu0 0.0
  %4775 = vmatprep.subr.mxu0 0.0
  %4776 = vmatpush1.msra.mxu0 0.0
  %4777 = vmatprep.subr.mxu0 0.0
  %4778 = vmatpush1.msra.mxu0 0.0
  %4779 = vmatprep.subr.mxu0 0.0
  %4780 = vmatpush1.msra.mxu0 0.0
  %4781 = vmatprep.subr.mxu0 0.0
  %4782 = vmatpush1.msra.mxu0 0.0
  %4783 = vmatprep.subr.mxu0 0.0
  %4784 = vmatpush1.msra.mxu0 0.0
  %4785 = vmatprep.subr.mxu0 0.0
  %4786 = vmatpush1.msra.mxu0 0.0
  %4787 = vmatprep.subr.mxu0 0.0
  %4788 = vmatpush1.msra.mxu0 0.0
  %4789 = vmatprep.subr.mxu0 0.0
  %4790 = vmatpush1.msra.mxu0 0.0
  %4791 = vmatprep.subr.mxu0 0.0
  %4792 = vmatpush1.msra.mxu0 0.0
  %4793 = vmatprep.subr.mxu0 0.0
  %4794 = vmatpush1.msra.mxu0 0.0
  %4795 = vmatprep.subr.mxu0 0.0
  %4796 = vmatpush1.msra.mxu0 0.0
  %4797 = vmatprep.subr.mxu0 0.0
  %4798 = vmatpush1.msra.mxu0 0.0
  %4799 = vmatprep.subr.mxu0 0.0
  %4800 = vmatpush1.msra.mxu0 0.0
  %4801 = vmatprep.subr.mxu0 0.0
  %4802 = vmatpush1.msra.mxu0 0.0
  %4803 = vmatprep.mubr.f32.mxu0 0.0
  %4804 = vmatmul.mubr.f32.gmra.mrb[0].mxu0 %v4715
  %v4805 = vpop.f32.mrb[0].mxu0
  %v4806 = vadd.f32 %v4737, %v4805
  %v4807 = vpop.f32.mrb[0].mxu0
  %4808 = vdwg.mxu0
  %4809 = vst [vmem:[%s7] sm:$0xff] %v4806
  // Predicated region
  $region30: #{cnn1d_forward.1} parent=0 // pred_check
    _
  $region31: #{cnn1d_forward.1} parent=0 // pred_check_branch
    %4811 = sbr.rel (0) target = $region33
  $region32: #{cnn1d_forward.1} parent=0 // pred_region
    _
  $region33: #{cnn1d_forward.1} parent=0 // pred_fallthru
    _
  // Predicated region
  $region34: #{cnn1d_forward.1} parent=0 // pred_check
    _
  $region35: #{cnn1d_forward.1} parent=0 // pred_check_branch
    %4813 = sbr.rel (0) target = $region37
  $region36: #{cnn1d_forward.1} parent=0 // pred_region
    _
  $region37: #{cnn1d_forward.1} parent=0 // pred_fallthru
    _

</llo_original>
